<compile_context>
chip_gen: v6e
topology: v6e:2x2x1
jax: 0.10.0
libtpu: 0.0.40
codegen_flags: <defaults>
</compile_context>

<pallas_src>
import functools
import math

import jax
import jax.numpy as jnp
from jax.experimental import pallas as pl
from jax.experimental.pallas import tpu as pltpu


def _layernorm(x, gamma, beta, eps=1e-5):
    mu = jnp.mean(x, axis=-1, keepdims=True)
    var = jnp.mean((x - mu) ** 2, axis=-1, keepdims=True)
    return (x - mu) * jax.lax.rsqrt(var + eps) * gamma + beta


def _gelu(x):
    # TODO(synk): PyTorch nn.GELU() default is exact erf GELU; tanh approximation
    # is used because erf lowering support in Mosaic varies by version.
    return 0.5 * x * (1.0 + jnp.tanh(0.7978845608028654 * (x + 0.044715 * x * x * x)))


def gpt_block_kernel(x_ref,
                     ln1_g, ln1_b,
                     w_q, b_q, w_k, b_k, w_v, b_v, w_o, b_o,
                     ln2_g, ln2_b, w1_t, b1, w2_t, b2,
                     o_ref,
                     k_scratch, v_scratch,
                     *, num_heads, q_tile):
    qi = pl.program_id(1)
    E = x_ref.shape[2]

    # ---- Build bf16 K/V cache for the full sequence (once per batch element) ----
    @pl.when(qi == 0)
    def _():
        xf = x_ref[0].astype(jnp.float32)                              # (S, E)
        xn = _layernorm(xf, ln1_g[...], ln1_b[...]).astype(jnp.bfloat16)
        for h in range(num_heads):
            k_scratch[h] = (jnp.dot(xn, w_k[h], preferred_element_type=jnp.float32)
                            + b_k[h]).astype(jnp.bfloat16)             # (S, D)
            v_scratch[h] = (jnp.dot(xn, w_v[h], preferred_element_type=jnp.float32)
                            + b_v[h]).astype(jnp.bfloat16)             # (S, D)

    # ---- Query tile ----
    row0 = pl.multiple_of(qi * q_tile, q_tile)
    x_t = x_ref[0, pl.ds(row0, q_tile), :].astype(jnp.float32)         # (tq, E)
    xn_t = _layernorm(x_t, ln1_g[...], ln1_b[...]).astype(jnp.bfloat16)

    # ---- Multi-head self-attention (dropout = identity in eval mode) ----
    # TODO(synk): attn_mask (e.g. causal) not implemented; forward() default is None.
    attn = jnp.zeros((q_tile, E), jnp.float32)
    for h in range(num_heads):
        # 1/sqrt(head_dim) is folded into w_q / b_q on the host.
        qh = (jnp.dot(xn_t, w_q[h], preferred_element_type=jnp.float32)
              + b_q[h]).astype(jnp.bfloat16)                           # (tq, D)
        kh = k_scratch[h]                                              # (S, D) bf16
        vh = v_scratch[h]                                              # (S, D) bf16
        s = jax.lax.dot_general(qh, kh, (((1,), (1,)), ((), ())),
                                preferred_element_type=jnp.float32)    # (tq, S)
        s = s - jnp.max(s, axis=-1, keepdims=True)
        p = jnp.exp(s)
        p = p * pl.reciprocal(jnp.sum(p, axis=-1, keepdims=True), approx=True)
        oh = jnp.dot(p.astype(jnp.bfloat16), vh,
                     preferred_element_type=jnp.float32)               # (tq, D)
        # Accumulate this head's contribution to the output projection directly
        # (w_o[h] are the rows of W_o^T belonging to head h) -> no concatenate.
        attn = attn + jnp.dot(oh.astype(jnp.bfloat16), w_o[h],
                              preferred_element_type=jnp.float32)      # (tq, E)
    attn = attn + b_o[...]

    x_t = x_t + attn                                                   # residual 1

    # ---- LayerNorm 2 + MLP ----
    xn2 = _layernorm(x_t, ln2_g[...], ln2_b[...]).astype(jnp.bfloat16)
    h1 = jnp.dot(xn2, w1_t[...], preferred_element_type=jnp.float32) + b1[...]
    h1 = _gelu(h1).astype(jnp.bfloat16)                                # (tq, 4E)
    h2 = jnp.dot(h1, w2_t[...], preferred_element_type=jnp.float32) + b2[...]

    o_ref[0] = (x_t + h2).astype(o_ref.dtype)                          # residual 2


def prepare_params(params, num_heads):
    """One-time host-side weight prep: transpose, split per head, fold the
    attention scale into the q projection, cast matmul weights to bf16."""
    E = params["w_o"].shape[0]
    D = E // num_heads
    scale = 1.0 / math.sqrt(D)

    w_in_t = params["w_in"].T                       # (E, 3E), PyTorch Linear is y = x @ W^T + b
    b_in = params["b_in"].reshape(-1)               # (3E,)

    def per_head(w_cols, b_cols):                   # (E, E), (E,) -> (H, E, D), (H, 1, D)
        w = w_cols.reshape(E, num_heads, D).transpose(1, 0, 2)
        b = b_cols.reshape(num_heads, 1, D)
        return w.astype(jnp.bfloat16), b.astype(jnp.float32)

    w_q, b_q = per_head(w_in_t[:, 0:E] * scale, b_in[0:E] * scale)
    w_k, b_k = per_head(w_in_t[:, E:2 * E], b_in[E:2 * E])
    w_v, b_v = per_head(w_in_t[:, 2 * E:3 * E], b_in[2 * E:3 * E])

    # Rows h*D:(h+1)*D of W_o^T act on head h's output -> stack as (H, D, E).
    w_o = params["w_o"].T.reshape(num_heads, D, E).astype(jnp.bfloat16)

    return {
        "ln1_g": params["ln1_g"], "ln1_b": params["ln1_b"],
        "w_q": w_q, "b_q": b_q, "w_k": w_k, "b_k": b_k, "w_v": w_v, "b_v": b_v,
        "w_o": w_o, "b_o": params["b_o"],
        "ln2_g": params["ln2_g"], "ln2_b": params["ln2_b"],
        "w1_t": params["w1"].T.astype(jnp.bfloat16), "b1": params["b1"],
        "w2_t": params["w2"].T.astype(jnp.bfloat16), "b2": params["b2"],
    }


def gpt_block(x, prepared, num_heads, q_tile=None):
    B, S, E = x.shape
    D = E // num_heads
    if q_tile is None:
        q_tile = 256 if S % 256 == 0 else S
    assert S % q_tile == 0, "sequence length must be divisible by q_tile"
    n_qt = S // q_tile

    p = prepared
    args = (p["ln1_g"], p["ln1_b"],
            p["w_q"], p["b_q"], p["w_k"], p["b_k"], p["w_v"], p["b_v"],
            p["w_o"], p["b_o"],
            p["ln2_g"], p["ln2_b"], p["w1_t"], p["b1"], p["w2_t"], p["b2"])

    def const_spec(a):
        nd = a.ndim
        return pl.BlockSpec(a.shape, lambda b, q: (0,) * nd)

    kernel = functools.partial(gpt_block_kernel,
                               num_heads=num_heads, q_tile=q_tile)

    # Advisory cost hint for XLA scheduling around the custom call.
    flops = B * (24 * S * E * E + 4 * S * S * E)
    transcendentals = B * (num_heads * S * S + 4 * S * E)
    bytes_accessed = 2 * B * S * E * 4 + 12 * E * E * 2   # x/out f32 + bf16 weights

    return pl.pallas_call(
        kernel,
        out_shape=jax.ShapeDtypeStruct((B, S, E), x.dtype),
        grid_spec=pltpu.PrefetchScalarGridSpec(
            num_scalar_prefetch=0,
            grid=(B, n_qt),
            in_specs=[pl.BlockSpec((1, S, E), lambda b, q: (b, 0, 0))]
                     + [const_spec(a) for a in args],
            out_specs=pl.BlockSpec((1, q_tile, E), lambda b, q: (b, q, 0)),
            scratch_shapes=[pltpu.VMEM((num_heads, S, D), jnp.bfloat16),   # K cache
                            pltpu.VMEM((num_heads, S, D), jnp.bfloat16)],  # V cache
        ),
        compiler_params=pltpu.CompilerParams(
            dimension_semantics=("parallel", "arbitrary"),
            vmem_limit_bytes=64 * 1024 * 1024),
        cost_estimate=pl.CostEstimate(flops=flops,
                                      transcendentals=transcendentals,
                                      bytes_accessed=bytes_accessed),
    )(x, *args)


def make_params(key, embed_dim):
    E = embed_dim
    ks = jax.random.split(key, 4)
    std = 0.02
    return {
        "ln1_g": jnp.ones((1, E), jnp.float32),
        "ln1_b": jnp.zeros((1, E), jnp.float32),
        "w_in": jax.random.normal(ks[0], (3 * E, E), jnp.float32) * std,
        "b_in": jnp.zeros((1, 3 * E), jnp.float32),
        "w_o": jax.random.normal(ks[1], (E, E), jnp.float32) * std,
        "b_o": jnp.zeros((1, E), jnp.float32),
        "ln2_g": jnp.ones((1, E), jnp.float32),
        "ln2_b": jnp.zeros((1, E), jnp.float32),
        "w1": jax.random.normal(ks[2], (4 * E, E), jnp.float32) * std,
        "b1": jnp.zeros((1, 4 * E), jnp.float32),
        "w2": jax.random.normal(ks[3], (E, 4 * E), jnp.float32) * std,
        "b2": jnp.zeros((1, E), jnp.float32),
    }


def gpt_block_ref(x, params, num_heads):
    """Pure-JAX f32 reference with the PyTorch-layout params (sanity check)."""
    B, S, E = x.shape
    D = E // num_heads

    def ln(v, g, b):
        mu = jnp.mean(v, -1, keepdims=True)
        var = jnp.mean((v - mu) ** 2, -1, keepdims=True)
        return (v - mu) * jax.lax.rsqrt(var + 1e-5) * g + b

    xn = ln(x, params["ln1_g"], params["ln1_b"])
    qkv = xn @ params["w_in"].T + params["b_in"]
    q, k, v = jnp.split(qkv, 3, axis=-1)
    q = q.reshape(B, S, num_heads, D).transpose(0, 2, 1, 3) / math.sqrt(D)
    k = k.reshape(B, S, num_heads, D).transpose(0, 2, 1, 3)
    v = v.reshape(B, S, num_heads, D).transpose(0, 2, 1, 3)
    s = jnp.einsum("bhqd,bhkd->bhqk", q, k)
    p = jax.nn.softmax(s, axis=-1)
    a = jnp.einsum("bhqk,bhkd->bhqd", p, v).transpose(0, 2, 1, 3).reshape(B, S, E)
    a = a @ params["w_o"].T + params["b_o"]
    x = x + a
    xn2 = ln(x, params["ln2_g"], params["ln2_b"])
    h = xn2 @ params["w1"].T + params["b1"]
    h = 0.5 * h * (1.0 + jnp.tanh(0.7978845608028654 * (h + 0.044715 * h ** 3)))
    h = h @ params["w2"].T + params["b2"]
    return x + h


if __name__ == "__main__":
    B, S, E, H = 2, 8, 32, 4
    key = jax.random.PRNGKey(0)
    kx, kp = jax.random.split(key)
    x = jax.random.normal(kx, (B, S, E), jnp.float32)
    params = make_params(kp, E)
    prepared = prepare_params(params, H)     # one-time host-side weight prep

    out = gpt_block(x, prepared, H)
    out = jax.block_until_ready(out)

    ref = gpt_block_ref(x, params, H)
    assert out.shape == (B, S, E)
    err = float(jnp.max(jnp.abs(out - ref)))
    # Tolerance accounts for bf16 MXU operands (f32 accumulation) vs the f32 reference.
    assert jnp.allclose(out, ref, rtol=1e-2, atol=1e-2), f"mismatch vs reference (max|diff|={err})"
    print("KERNEL_OK")
</pallas_src>

<mosaic_0001>
module attributes {stable_mosaic.version = 11 : i64} {
  func.func @gpt_block_kernel(%arg0: i32, %arg1: i32, %arg2: memref<1x8x32xf32, #tpu.memory_space<vmem>>, %arg3: memref<1x32xf32, #tpu.memory_space<vmem>>, %arg4: memref<1x32xf32, #tpu.memory_space<vmem>>, %arg5: memref<4x32x8xbf16, #tpu.memory_space<vmem>>, %arg6: memref<4x1x8xf32, #tpu.memory_space<vmem>>, %arg7: memref<4x32x8xbf16, #tpu.memory_space<vmem>>, %arg8: memref<4x1x8xf32, #tpu.memory_space<vmem>>, %arg9: memref<4x32x8xbf16, #tpu.memory_space<vmem>>, %arg10: memref<4x1x8xf32, #tpu.memory_space<vmem>>, %arg11: memref<4x8x32xbf16, #tpu.memory_space<vmem>>, %arg12: memref<1x32xf32, #tpu.memory_space<vmem>>, %arg13: memref<1x32xf32, #tpu.memory_space<vmem>>, %arg14: memref<1x32xf32, #tpu.memory_space<vmem>>, %arg15: memref<32x128xbf16, #tpu.memory_space<vmem>>, %arg16: memref<1x128xf32, #tpu.memory_space<vmem>>, %arg17: memref<128x32xbf16, #tpu.memory_space<vmem>>, %arg18: memref<1x32xf32, #tpu.memory_space<vmem>>, %arg19: memref<1x8x32xf32, #tpu.memory_space<vmem>>, %arg20: memref<4x8x8xbf16, #tpu.memory_space<vmem>>, %arg21: memref<4x8x8xbf16, #tpu.memory_space<vmem>>) attributes {dimension_semantics = [#tpu.dimension_semantics<parallel>, #tpu.dimension_semantics<arbitrary>], iteration_bounds = array<i64: 2, 1>, scalar_prefetch = 0 : i64, scratch_operands = 2 : i64, tpu.core_type = #tpu.core_type<tc>, window_params = [{transform_indices = @transform_0, window_bounds = array<i64: 1, 8, 32>}, {pipeline_mode = #tpu.pipeline_mode<synchronous>, transform_indices = @transform_1, window_bounds = array<i64: 1, 32>}, {pipeline_mode = #tpu.pipeline_mode<synchronous>, transform_indices = @transform_2, window_bounds = array<i64: 1, 32>}, {pipeline_mode = #tpu.pipeline_mode<synchronous>, transform_indices = @transform_3, window_bounds = array<i64: 4, 32, 8>}, {pipeline_mode = #tpu.pipeline_mode<synchronous>, transform_indices = @transform_4, window_bounds = array<i64: 4, 1, 8>}, {pipeline_mode = #tpu.pipeline_mode<synchronous>, transform_indices = @transform_5, window_bounds = array<i64: 4, 32, 8>}, {pipeline_mode = #tpu.pipeline_mode<synchronous>, transform_indices = @transform_6, window_bounds = array<i64: 4, 1, 8>}, {pipeline_mode = #tpu.pipeline_mode<synchronous>, transform_indices = @transform_7, window_bounds = array<i64: 4, 32, 8>}, {pipeline_mode = #tpu.pipeline_mode<synchronous>, transform_indices = @transform_8, window_bounds = array<i64: 4, 1, 8>}, {pipeline_mode = #tpu.pipeline_mode<synchronous>, transform_indices = @transform_9, window_bounds = array<i64: 4, 8, 32>}, {pipeline_mode = #tpu.pipeline_mode<synchronous>, transform_indices = @transform_10, window_bounds = array<i64: 1, 32>}, {pipeline_mode = #tpu.pipeline_mode<synchronous>, transform_indices = @transform_11, window_bounds = array<i64: 1, 32>}, {pipeline_mode = #tpu.pipeline_mode<synchronous>, transform_indices = @transform_12, window_bounds = array<i64: 1, 32>}, {pipeline_mode = #tpu.pipeline_mode<synchronous>, transform_indices = @transform_13, window_bounds = array<i64: 32, 128>}, {pipeline_mode = #tpu.pipeline_mode<synchronous>, transform_indices = @transform_14, window_bounds = array<i64: 1, 128>}, {pipeline_mode = #tpu.pipeline_mode<synchronous>, transform_indices = @transform_15, window_bounds = array<i64: 128, 32>}, {pipeline_mode = #tpu.pipeline_mode<synchronous>, transform_indices = @transform_16, window_bounds = array<i64: 1, 32>}, {transform_indices = @transform_17, window_bounds = array<i64: 1, 8, 32>}]} {
    %c0_i32 = arith.constant 0 : i32
    %0 = arith.cmpi eq, %arg1, %c0_i32 : i32
    %1 = arith.extui %0 : i1 to i32
    %c0_i32_0 = arith.constant 0 : i32
    %2 = arith.cmpi ne, %1, %c0_i32_0 : i32
    scf.if %2 {
      %c0_120 = arith.constant 0 : index
      %c0_121 = arith.constant 0 : index
      %c0_122 = arith.constant 0 : index
      %211 = vector.load %arg2[%c0_120, %c0_121, %c0_122] : memref<1x8x32xf32, #tpu.memory_space<vmem>>, vector<1x8x32xf32>
      %212 = vector.shape_cast %211 : vector<1x8x32xf32> to vector<8x32xf32>
      %c0_123 = arith.constant 0 : index
      %c0_124 = arith.constant 0 : index
      %213 = vector.load %arg3[%c0_123, %c0_124] : memref<1x32xf32, #tpu.memory_space<vmem>>, vector<1x32xf32>
      %c0_125 = arith.constant 0 : index
      %c0_126 = arith.constant 0 : index
      %214 = vector.load %arg4[%c0_125, %c0_126] : memref<1x32xf32, #tpu.memory_space<vmem>>, vector<1x32xf32>
      %cst_127 = arith.constant dense<0.000000e+00> : vector<8xf32>
      %215 = vector.multi_reduction <add>, %212, %cst_127 [1] : vector<8x32xf32> to vector<8xf32>
      %216 = vector.shape_cast %215 : vector<8xf32> to vector<8x1xf32>
      %cst_128 = arith.constant 3.200000e+01 : f32
      %217 = vector.broadcast %cst_128 : f32 to vector<8x1xf32>
      %218 = arith.divf %216, %217 : vector<8x1xf32>
      %219 = vector.broadcast %218 : vector<8x1xf32> to vector<8x32xf32>
      %220 = arith.subf %212, %219 : vector<8x32xf32>
      %221 = arith.mulf %220, %220 : vector<8x32xf32>
      %cst_129 = arith.constant dense<0.000000e+00> : vector<8xf32>
      %222 = vector.multi_reduction <add>, %221, %cst_129 [1] : vector<8x32xf32> to vector<8xf32>
      %223 = vector.shape_cast %222 : vector<8xf32> to vector<8x1xf32>
      %cst_130 = arith.constant 3.200000e+01 : f32
      %224 = vector.broadcast %cst_130 : f32 to vector<8x1xf32>
      %225 = arith.divf %223, %224 : vector<8x1xf32>
      %226 = vector.broadcast %218 : vector<8x1xf32> to vector<8x32xf32>
      %227 = arith.subf %212, %226 : vector<8x32xf32>
      %cst_131 = arith.constant 9.99999974E-6 : f32
      %228 = vector.broadcast %cst_131 : f32 to vector<8x1xf32>
      %229 = arith.addf %225, %228 : vector<8x1xf32>
      %230 = math.rsqrt %229 : vector<8x1xf32>
      %231 = vector.broadcast %230 : vector<8x1xf32> to vector<8x32xf32>
      %232 = arith.mulf %227, %231 : vector<8x32xf32>
      %233 = vector.broadcast %213 : vector<1x32xf32> to vector<8x32xf32>
      %234 = arith.mulf %232, %233 : vector<8x32xf32>
      %235 = vector.broadcast %214 : vector<1x32xf32> to vector<8x32xf32>
      %236 = arith.addf %234, %235 : vector<8x32xf32>
      %237 = arith.truncf %236 : vector<8x32xf32> to vector<8x32xbf16>
      %c0_132 = arith.constant 0 : index
      %c0_133 = arith.constant 0 : index
      %c0_134 = arith.constant 0 : index
      %238 = vector.load %arg7[%c0_132, %c0_133, %c0_134] : memref<4x32x8xbf16, #tpu.memory_space<vmem>>, vector<1x32x8xbf16>
      %239 = vector.shape_cast %238 : vector<1x32x8xbf16> to vector<32x8xbf16>
      %cst_135 = arith.constant dense<0.000000e+00> : vector<8x8xf32>
      %240 = tpu.matmul %237, %239, %cst_135 {dimension_numbers = #tpu.dot_dimension_numbers<[1], [0], [0], [1], [0, 0, 1, 1], [], []>} : vector<8x32xbf16>, vector<32x8xbf16>, vector<8x8xf32> -> vector<8x8xf32>
      %c0_136 = arith.constant 0 : index
      %c0_137 = arith.constant 0 : index
      %c0_138 = arith.constant 0 : index
      %241 = vector.load %arg8[%c0_136, %c0_137, %c0_138] : memref<4x1x8xf32, #tpu.memory_space<vmem>>, vector<1x1x8xf32>
      %242 = vector.shape_cast %241 : vector<1x1x8xf32> to vector<1x8xf32>
      %243 = vector.broadcast %242 : vector<1x8xf32> to vector<8x8xf32>
      %244 = arith.addf %240, %243 : vector<8x8xf32>
      %245 = arith.truncf %244 : vector<8x8xf32> to vector<8x8xbf16>
      %c0_139 = arith.constant 0 : index
      %c0_140 = arith.constant 0 : index
      %c0_141 = arith.constant 0 : index
      %246 = vector.load %arg20[%c0_139, %c0_140, %c0_141] : memref<4x8x8xbf16, #tpu.memory_space<vmem>>, vector<1x8x8xbf16>
      %247 = vector.shape_cast %246 : vector<1x8x8xbf16> to vector<8x8xbf16>
      %248 = vector.shape_cast %245 : vector<8x8xbf16> to vector<1x8x8xbf16>
      tpu.vector_store %arg20[%c0_139, %c0_140, %c0_141], %248 {strides = array<i32>} : memref<4x8x8xbf16, #tpu.memory_space<vmem>>, vector<1x8x8xbf16>,
      %c0_142 = arith.constant 0 : index
      %c0_143 = arith.constant 0 : index
      %c0_144 = arith.constant 0 : index
      %249 = vector.load %arg9[%c0_142, %c0_143, %c0_144] : memref<4x32x8xbf16, #tpu.memory_space<vmem>>, vector<1x32x8xbf16>
      %250 = vector.shape_cast %249 : vector<1x32x8xbf16> to vector<32x8xbf16>
      %cst_145 = arith.constant dense<0.000000e+00> : vector<8x8xf32>
      %251 = tpu.matmul %237, %250, %cst_145 {dimension_numbers = #tpu.dot_dimension_numbers<[1], [0], [0], [1], [0, 0, 1, 1], [], []>} : vector<8x32xbf16>, vector<32x8xbf16>, vector<8x8xf32> -> vector<8x8xf32>
      %c0_146 = arith.constant 0 : index
      %c0_147 = arith.constant 0 : index
      %c0_148 = arith.constant 0 : index
      %252 = vector.load %arg10[%c0_146, %c0_147, %c0_148] : memref<4x1x8xf32, #tpu.memory_space<vmem>>, vector<1x1x8xf32>
      %253 = vector.shape_cast %252 : vector<1x1x8xf32> to vector<1x8xf32>
      %254 = vector.broadcast %253 : vector<1x8xf32> to vector<8x8xf32>
      %255 = arith.addf %251, %254 : vector<8x8xf32>
      %256 = arith.truncf %255 : vector<8x8xf32> to vector<8x8xbf16>
      %c0_149 = arith.constant 0 : index
      %c0_150 = arith.constant 0 : index
      %c0_151 = arith.constant 0 : index
      %257 = vector.load %arg21[%c0_149, %c0_150, %c0_151] : memref<4x8x8xbf16, #tpu.memory_space<vmem>>, vector<1x8x8xbf16>
      %258 = vector.shape_cast %257 : vector<1x8x8xbf16> to vector<8x8xbf16>
      %259 = vector.shape_cast %256 : vector<8x8xbf16> to vector<1x8x8xbf16>
      tpu.vector_store %arg21[%c0_149, %c0_150, %c0_151], %259 {strides = array<i32>} : memref<4x8x8xbf16, #tpu.memory_space<vmem>>, vector<1x8x8xbf16>,
      %c1_152 = arith.constant 1 : index
      %c0_153 = arith.constant 0 : index
      %c0_154 = arith.constant 0 : index
      %260 = vector.load %arg7[%c1_152, %c0_153, %c0_154] : memref<4x32x8xbf16, #tpu.memory_space<vmem>>, vector<1x32x8xbf16>
      %261 = vector.shape_cast %260 : vector<1x32x8xbf16> to vector<32x8xbf16>
      %cst_155 = arith.constant dense<0.000000e+00> : vector<8x8xf32>
      %262 = tpu.matmul %237, %261, %cst_155 {dimension_numbers = #tpu.dot_dimension_numbers<[1], [0], [0], [1], [0, 0, 1, 1], [], []>} : vector<8x32xbf16>, vector<32x8xbf16>, vector<8x8xf32> -> vector<8x8xf32>
      %c1_156 = arith.constant 1 : index
      %c0_157 = arith.constant 0 : index
      %c0_158 = arith.constant 0 : index
      %263 = vector.load %arg8[%c1_156, %c0_157, %c0_158] : memref<4x1x8xf32, #tpu.memory_space<vmem>>, vector<1x1x8xf32>
      %264 = vector.shape_cast %263 : vector<1x1x8xf32> to vector<1x8xf32>
      %265 = vector.broadcast %264 : vector<1x8xf32> to vector<8x8xf32>
      %266 = arith.addf %262, %265 : vector<8x8xf32>
      %267 = arith.truncf %266 : vector<8x8xf32> to vector<8x8xbf16>
      %c1_159 = arith.constant 1 : index
      %c0_160 = arith.constant 0 : index
      %c0_161 = arith.constant 0 : index
      %268 = vector.load %arg20[%c1_159, %c0_160, %c0_161] : memref<4x8x8xbf16, #tpu.memory_space<vmem>>, vector<1x8x8xbf16>
      %269 = vector.shape_cast %268 : vector<1x8x8xbf16> to vector<8x8xbf16>
      %270 = vector.shape_cast %267 : vector<8x8xbf16> to vector<1x8x8xbf16>
      tpu.vector_store %arg20[%c1_159, %c0_160, %c0_161], %270 {strides = array<i32>} : memref<4x8x8xbf16, #tpu.memory_space<vmem>>, vector<1x8x8xbf16>,
      %c1_162 = arith.constant 1 : index
      %c0_163 = arith.constant 0 : index
      %c0_164 = arith.constant 0 : index
      %271 = vector.load %arg9[%c1_162, %c0_163, %c0_164] : memref<4x32x8xbf16, #tpu.memory_space<vmem>>, vector<1x32x8xbf16>
      %272 = vector.shape_cast %271 : vector<1x32x8xbf16> to vector<32x8xbf16>
      %cst_165 = arith.constant dense<0.000000e+00> : vector<8x8xf32>
      %273 = tpu.matmul %237, %272, %cst_165 {dimension_numbers = #tpu.dot_dimension_numbers<[1], [0], [0], [1], [0, 0, 1, 1], [], []>} : vector<8x32xbf16>, vector<32x8xbf16>, vector<8x8xf32> -> vector<8x8xf32>
      %c1_166 = arith.constant 1 : index
      %c0_167 = arith.constant 0 : index
      %c0_168 = arith.constant 0 : index
      %274 = vector.load %arg10[%c1_166, %c0_167, %c0_168] : memref<4x1x8xf32, #tpu.memory_space<vmem>>, vector<1x1x8xf32>
      %275 = vector.shape_cast %274 : vector<1x1x8xf32> to vector<1x8xf32>
      %276 = vector.broadcast %275 : vector<1x8xf32> to vector<8x8xf32>
      %277 = arith.addf %273, %276 : vector<8x8xf32>
      %278 = arith.truncf %277 : vector<8x8xf32> to vector<8x8xbf16>
      %c1_169 = arith.constant 1 : index
      %c0_170 = arith.constant 0 : index
      %c0_171 = arith.constant 0 : index
      %279 = vector.load %arg21[%c1_169, %c0_170, %c0_171] : memref<4x8x8xbf16, #tpu.memory_space<vmem>>, vector<1x8x8xbf16>
      %280 = vector.shape_cast %279 : vector<1x8x8xbf16> to vector<8x8xbf16>
      %281 = vector.shape_cast %278 : vector<8x8xbf16> to vector<1x8x8xbf16>
      tpu.vector_store %arg21[%c1_169, %c0_170, %c0_171], %281 {strides = array<i32>} : memref<4x8x8xbf16, #tpu.memory_space<vmem>>, vector<1x8x8xbf16>,
      %c2_172 = arith.constant 2 : index
      %c0_173 = arith.constant 0 : index
      %c0_174 = arith.constant 0 : index
      %282 = vector.load %arg7[%c2_172, %c0_173, %c0_174] : memref<4x32x8xbf16, #tpu.memory_space<vmem>>, vector<1x32x8xbf16>
      %283 = vector.shape_cast %282 : vector<1x32x8xbf16> to vector<32x8xbf16>
      %cst_175 = arith.constant dense<0.000000e+00> : vector<8x8xf32>
      %284 = tpu.matmul %237, %283, %cst_175 {dimension_numbers = #tpu.dot_dimension_numbers<[1], [0], [0], [1], [0, 0, 1, 1], [], []>} : vector<8x32xbf16>, vector<32x8xbf16>, vector<8x8xf32> -> vector<8x8xf32>
      %c2_176 = arith.constant 2 : index
      %c0_177 = arith.constant 0 : index
      %c0_178 = arith.constant 0 : index
      %285 = vector.load %arg8[%c2_176, %c0_177, %c0_178] : memref<4x1x8xf32, #tpu.memory_space<vmem>>, vector<1x1x8xf32>
      %286 = vector.shape_cast %285 : vector<1x1x8xf32> to vector<1x8xf32>
      %287 = vector.broadcast %286 : vector<1x8xf32> to vector<8x8xf32>
      %288 = arith.addf %284, %287 : vector<8x8xf32>
      %289 = arith.truncf %288 : vector<8x8xf32> to vector<8x8xbf16>
      %c2_179 = arith.constant 2 : index
      %c0_180 = arith.constant 0 : index
      %c0_181 = arith.constant 0 : index
      %290 = vector.load %arg20[%c2_179, %c0_180, %c0_181] : memref<4x8x8xbf16, #tpu.memory_space<vmem>>, vector<1x8x8xbf16>
      %291 = vector.shape_cast %290 : vector<1x8x8xbf16> to vector<8x8xbf16>
      %292 = vector.shape_cast %289 : vector<8x8xbf16> to vector<1x8x8xbf16>
      tpu.vector_store %arg20[%c2_179, %c0_180, %c0_181], %292 {strides = array<i32>} : memref<4x8x8xbf16, #tpu.memory_space<vmem>>, vector<1x8x8xbf16>,
      %c2_182 = arith.constant 2 : index
      %c0_183 = arith.constant 0 : index
      %c0_184 = arith.constant 0 : index
      %293 = vector.load %arg9[%c2_182, %c0_183, %c0_184] : memref<4x32x8xbf16, #tpu.memory_space<vmem>>, vector<1x32x8xbf16>
      %294 = vector.shape_cast %293 : vector<1x32x8xbf16> to vector<32x8xbf16>
      %cst_185 = arith.constant dense<0.000000e+00> : vector<8x8xf32>
      %295 = tpu.matmul %237, %294, %cst_185 {dimension_numbers = #tpu.dot_dimension_numbers<[1], [0], [0], [1], [0, 0, 1, 1], [], []>} : vector<8x32xbf16>, vector<32x8xbf16>, vector<8x8xf32> -> vector<8x8xf32>
      %c2_186 = arith.constant 2 : index
      %c0_187 = arith.constant 0 : index
      %c0_188 = arith.constant 0 : index
      %296 = vector.load %arg10[%c2_186, %c0_187, %c0_188] : memref<4x1x8xf32, #tpu.memory_space<vmem>>, vector<1x1x8xf32>
      %297 = vector.shape_cast %296 : vector<1x1x8xf32> to vector<1x8xf32>
      %298 = vector.broadcast %297 : vector<1x8xf32> to vector<8x8xf32>
      %299 = arith.addf %295, %298 : vector<8x8xf32>
      %300 = arith.truncf %299 : vector<8x8xf32> to vector<8x8xbf16>
      %c2_189 = arith.constant 2 : index
      %c0_190 = arith.constant 0 : index
      %c0_191 = arith.constant 0 : index
      %301 = vector.load %arg21[%c2_189, %c0_190, %c0_191] : memref<4x8x8xbf16, #tpu.memory_space<vmem>>, vector<1x8x8xbf16>
      %302 = vector.shape_cast %301 : vector<1x8x8xbf16> to vector<8x8xbf16>
      %303 = vector.shape_cast %300 : vector<8x8xbf16> to vector<1x8x8xbf16>
      tpu.vector_store %arg21[%c2_189, %c0_190, %c0_191], %303 {strides = array<i32>} : memref<4x8x8xbf16, #tpu.memory_space<vmem>>, vector<1x8x8xbf16>,
      %c3_192 = arith.constant 3 : index
      %c0_193 = arith.constant 0 : index
      %c0_194 = arith.constant 0 : index
      %304 = vector.load %arg7[%c3_192, %c0_193, %c0_194] : memref<4x32x8xbf16, #tpu.memory_space<vmem>>, vector<1x32x8xbf16>
      %305 = vector.shape_cast %304 : vector<1x32x8xbf16> to vector<32x8xbf16>
      %cst_195 = arith.constant dense<0.000000e+00> : vector<8x8xf32>
      %306 = tpu.matmul %237, %305, %cst_195 {dimension_numbers = #tpu.dot_dimension_numbers<[1], [0], [0], [1], [0, 0, 1, 1], [], []>} : vector<8x32xbf16>, vector<32x8xbf16>, vector<8x8xf32> -> vector<8x8xf32>
      %c3_196 = arith.constant 3 : index
      %c0_197 = arith.constant 0 : index
      %c0_198 = arith.constant 0 : index
      %307 = vector.load %arg8[%c3_196, %c0_197, %c0_198] : memref<4x1x8xf32, #tpu.memory_space<vmem>>, vector<1x1x8xf32>
      %308 = vector.shape_cast %307 : vector<1x1x8xf32> to vector<1x8xf32>
      %309 = vector.broadcast %308 : vector<1x8xf32> to vector<8x8xf32>
      %310 = arith.addf %306, %309 : vector<8x8xf32>
      %311 = arith.truncf %310 : vector<8x8xf32> to vector<8x8xbf16>
      %c3_199 = arith.constant 3 : index
      %c0_200 = arith.constant 0 : index
      %c0_201 = arith.constant 0 : index
      %312 = vector.load %arg20[%c3_199, %c0_200, %c0_201] : memref<4x8x8xbf16, #tpu.memory_space<vmem>>, vector<1x8x8xbf16>
      %313 = vector.shape_cast %312 : vector<1x8x8xbf16> to vector<8x8xbf16>
      %314 = vector.shape_cast %311 : vector<8x8xbf16> to vector<1x8x8xbf16>
      tpu.vector_store %arg20[%c3_199, %c0_200, %c0_201], %314 {strides = array<i32>} : memref<4x8x8xbf16, #tpu.memory_space<vmem>>, vector<1x8x8xbf16>,
      %c3_202 = arith.constant 3 : index
      %c0_203 = arith.constant 0 : index
      %c0_204 = arith.constant 0 : index
      %315 = vector.load %arg9[%c3_202, %c0_203, %c0_204] : memref<4x32x8xbf16, #tpu.memory_space<vmem>>, vector<1x32x8xbf16>
      %316 = vector.shape_cast %315 : vector<1x32x8xbf16> to vector<32x8xbf16>
      %cst_205 = arith.constant dense<0.000000e+00> : vector<8x8xf32>
      %317 = tpu.matmul %237, %316, %cst_205 {dimension_numbers = #tpu.dot_dimension_numbers<[1], [0], [0], [1], [0, 0, 1, 1], [], []>} : vector<8x32xbf16>, vector<32x8xbf16>, vector<8x8xf32> -> vector<8x8xf32>
      %c3_206 = arith.constant 3 : index
      %c0_207 = arith.constant 0 : index
      %c0_208 = arith.constant 0 : index
      %318 = vector.load %arg10[%c3_206, %c0_207, %c0_208] : memref<4x1x8xf32, #tpu.memory_space<vmem>>, vector<1x1x8xf32>
      %319 = vector.shape_cast %318 : vector<1x1x8xf32> to vector<1x8xf32>
      %320 = vector.broadcast %319 : vector<1x8xf32> to vector<8x8xf32>
      %321 = arith.addf %317, %320 : vector<8x8xf32>
      %322 = arith.truncf %321 : vector<8x8xf32> to vector<8x8xbf16>
      %c3_209 = arith.constant 3 : index
      %c0_210 = arith.constant 0 : index
      %c0_211 = arith.constant 0 : index
      %323 = vector.load %arg21[%c3_209, %c0_210, %c0_211] : memref<4x8x8xbf16, #tpu.memory_space<vmem>>, vector<1x8x8xbf16>
      %324 = vector.shape_cast %323 : vector<1x8x8xbf16> to vector<8x8xbf16>
      %325 = vector.shape_cast %322 : vector<8x8xbf16> to vector<1x8x8xbf16>
      tpu.vector_store %arg21[%c3_209, %c0_210, %c0_211], %325 {strides = array<i32>} : memref<4x8x8xbf16, #tpu.memory_space<vmem>>, vector<1x8x8xbf16>,
    } else {
    }
    %c8_i32 = arith.constant 8 : i32
    %3 = arith.muli %arg1, %c8_i32 : i32
    %4 = tpu.assume_multiple %3, 8 : i32
    %c0 = arith.constant 0 : index
    %5 = arith.index_cast %4 : i32 to index
    %c0_1 = arith.constant 0 : index
    %6 = vector.load %arg2[%c0, %5, %c0_1] : memref<1x8x32xf32, #tpu.memory_space<vmem>>, vector<1x8x32xf32>
    %7 = vector.shape_cast %6 : vector<1x8x32xf32> to vector<8x32xf32>
    %c0_2 = arith.constant 0 : index
    %c0_3 = arith.constant 0 : index
    %8 = vector.load %arg3[%c0_2, %c0_3] : memref<1x32xf32, #tpu.memory_space<vmem>>, vector<1x32xf32>
    %c0_4 = arith.constant 0 : index
    %c0_5 = arith.constant 0 : index
    %9 = vector.load %arg4[%c0_4, %c0_5] : memref<1x32xf32, #tpu.memory_space<vmem>>, vector<1x32xf32>
    %cst = arith.constant dense<0.000000e+00> : vector<8xf32>
    %10 = vector.multi_reduction <add>, %7, %cst [1] : vector<8x32xf32> to vector<8xf32>
    %11 = vector.shape_cast %10 : vector<8xf32> to vector<8x1xf32>
    %cst_6 = arith.constant 3.200000e+01 : f32
    %12 = vector.broadcast %cst_6 : f32 to vector<8x1xf32>
    %13 = arith.divf %11, %12 : vector<8x1xf32>
    %14 = vector.broadcast %13 : vector<8x1xf32> to vector<8x32xf32>
    %15 = arith.subf %7, %14 : vector<8x32xf32>
    %16 = arith.mulf %15, %15 : vector<8x32xf32>
    %cst_7 = arith.constant dense<0.000000e+00> : vector<8xf32>
    %17 = vector.multi_reduction <add>, %16, %cst_7 [1] : vector<8x32xf32> to vector<8xf32>
    %18 = vector.shape_cast %17 : vector<8xf32> to vector<8x1xf32>
    %cst_8 = arith.constant 3.200000e+01 : f32
    %19 = vector.broadcast %cst_8 : f32 to vector<8x1xf32>
    %20 = arith.divf %18, %19 : vector<8x1xf32>
    %21 = vector.broadcast %13 : vector<8x1xf32> to vector<8x32xf32>
    %22 = arith.subf %7, %21 : vector<8x32xf32>
    %cst_9 = arith.constant 9.99999974E-6 : f32
    %23 = vector.broadcast %cst_9 : f32 to vector<8x1xf32>
    %24 = arith.addf %20, %23 : vector<8x1xf32>
    %25 = math.rsqrt %24 : vector<8x1xf32>
    %26 = vector.broadcast %25 : vector<8x1xf32> to vector<8x32xf32>
    %27 = arith.mulf %22, %26 : vector<8x32xf32>
    %28 = vector.broadcast %8 : vector<1x32xf32> to vector<8x32xf32>
    %29 = arith.mulf %27, %28 : vector<8x32xf32>
    %30 = vector.broadcast %9 : vector<1x32xf32> to vector<8x32xf32>
    %31 = arith.addf %29, %30 : vector<8x32xf32>
    %32 = arith.truncf %31 : vector<8x32xf32> to vector<8x32xbf16>
    %cst_10 = arith.constant 0.000000e+00 : f32
    %33 = vector.broadcast %cst_10 : f32 to vector<8x32xf32>
    %c0_11 = arith.constant 0 : index
    %c0_12 = arith.constant 0 : index
    %c0_13 = arith.constant 0 : index
    %34 = vector.load %arg5[%c0_11, %c0_12, %c0_13] : memref<4x32x8xbf16, #tpu.memory_space<vmem>>, vector<1x32x8xbf16>
    %35 = vector.shape_cast %34 : vector<1x32x8xbf16> to vector<32x8xbf16>
    %cst_14 = arith.constant dense<0.000000e+00> : vector<8x8xf32>
    %36 = tpu.matmul %32, %35, %cst_14 {dimension_numbers = #tpu.dot_dimension_numbers<[1], [0], [0], [1], [0, 0, 1, 1], [], []>} : vector<8x32xbf16>, vector<32x8xbf16>, vector<8x8xf32> -> vector<8x8xf32>
    %c0_15 = arith.constant 0 : index
    %c0_16 = arith.constant 0 : index
    %c0_17 = arith.constant 0 : index
    %37 = vector.load %arg6[%c0_15, %c0_16, %c0_17] : memref<4x1x8xf32, #tpu.memory_space<vmem>>, vector<1x1x8xf32>
    %38 = vector.shape_cast %37 : vector<1x1x8xf32> to vector<1x8xf32>
    %39 = vector.broadcast %38 : vector<1x8xf32> to vector<8x8xf32>
    %40 = arith.addf %36, %39 : vector<8x8xf32>
    %41 = arith.truncf %40 : vector<8x8xf32> to vector<8x8xbf16>
    %c0_18 = arith.constant 0 : index
    %c0_19 = arith.constant 0 : index
    %c0_20 = arith.constant 0 : index
    %42 = vector.load %arg20[%c0_18, %c0_19, %c0_20] : memref<4x8x8xbf16, #tpu.memory_space<vmem>>, vector<1x8x8xbf16>
    %43 = vector.shape_cast %42 : vector<1x8x8xbf16> to vector<8x8xbf16>
    %c0_21 = arith.constant 0 : index
    %c0_22 = arith.constant 0 : index
    %c0_23 = arith.constant 0 : index
    %44 = vector.load %arg21[%c0_21, %c0_22, %c0_23] : memref<4x8x8xbf16, #tpu.memory_space<vmem>>, vector<1x8x8xbf16>
    %45 = vector.shape_cast %44 : vector<1x8x8xbf16> to vector<8x8xbf16>
    %cst_24 = arith.constant dense<0.000000e+00> : vector<8x8xf32>
    %46 = tpu.matmul %41, %43, %cst_24 {dimension_numbers = #tpu.dot_dimension_numbers<[1], [1], [0], [0], [0, 0, 1, 0], [], []>} : vector<8x8xbf16>, vector<8x8xbf16>, vector<8x8xf32> -> vector<8x8xf32>
    %cst_25 = arith.constant dense<0xFF800000> : vector<8xf32>
    %47 = vector.multi_reduction <maximumf>, %46, %cst_25 [1] : vector<8x8xf32> to vector<8xf32>
    %48 = vector.shape_cast %47 : vector<8xf32> to vector<8x1xf32>
    %49 = vector.broadcast %48 : vector<8x1xf32> to vector<8x8xf32>
    %50 = arith.subf %46, %49 : vector<8x8xf32>
    %51 = math.exp %50 : vector<8x8xf32>
    %cst_26 = arith.constant dense<0.000000e+00> : vector<8xf32>
    %52 = vector.multi_reduction <add>, %51, %cst_26 [1] : vector<8x8xf32> to vector<8xf32>
    %53 = vector.shape_cast %52 : vector<8xf32> to vector<8x1xf32>
    %54 = tpu.reciprocal %53 {approx = true} : vector<8x1xf32> -> vector<8x1xf32>
    %55 = vector.broadcast %54 : vector<8x1xf32> to vector<8x8xf32>
    %56 = arith.mulf %51, %55 : vector<8x8xf32>
    %57 = arith.truncf %56 : vector<8x8xf32> to vector<8x8xbf16>
    %cst_27 = arith.constant dense<0.000000e+00> : vector<8x8xf32>
    %58 = tpu.matmul %57, %45, %cst_27 {dimension_numbers = #tpu.dot_dimension_numbers<[1], [0], [0], [1], [0, 0, 1, 1], [], []>} : vector<8x8xbf16>, vector<8x8xbf16>, vector<8x8xf32> -> vector<8x8xf32>
    %59 = arith.truncf %58 : vector<8x8xf32> to vector<8x8xbf16>
    %c0_28 = arith.constant 0 : index
    %c0_29 = arith.constant 0 : index
    %c0_30 = arith.constant 0 : index
    %60 = vector.load %arg11[%c0_28, %c0_29, %c0_30] : memref<4x8x32xbf16, #tpu.memory_space<vmem>>, vector<1x8x32xbf16>
    %61 = vector.shape_cast %60 : vector<1x8x32xbf16> to vector<8x32xbf16>
    %cst_31 = arith.constant dense<0.000000e+00> : vector<8x32xf32>
    %62 = tpu.matmul %59, %61, %cst_31 {dimension_numbers = #tpu.dot_dimension_numbers<[1], [0], [0], [1], [0, 0, 1, 1], [], []>} : vector<8x8xbf16>, vector<8x32xbf16>, vector<8x32xf32> -> vector<8x32xf32>
    %63 = arith.addf %33, %62 : vector<8x32xf32>
    %c1 = arith.constant 1 : index
    %c0_32 = arith.constant 0 : index
    %c0_33 = arith.constant 0 : index
    %64 = vector.load %arg5[%c1, %c0_32, %c0_33] : memref<4x32x8xbf16, #tpu.memory_space<vmem>>, vector<1x32x8xbf16>
    %65 = vector.shape_cast %64 : vector<1x32x8xbf16> to vector<32x8xbf16>
    %cst_34 = arith.constant dense<0.000000e+00> : vector<8x8xf32>
    %66 = tpu.matmul %32, %65, %cst_34 {dimension_numbers = #tpu.dot_dimension_numbers<[1], [0], [0], [1], [0, 0, 1, 1], [], []>} : vector<8x32xbf16>, vector<32x8xbf16>, vector<8x8xf32> -> vector<8x8xf32>
    %c1_35 = arith.constant 1 : index
    %c0_36 = arith.constant 0 : index
    %c0_37 = arith.constant 0 : index
    %67 = vector.load %arg6[%c1_35, %c0_36, %c0_37] : memref<4x1x8xf32, #tpu.memory_space<vmem>>, vector<1x1x8xf32>
    %68 = vector.shape_cast %67 : vector<1x1x8xf32> to vector<1x8xf32>
    %69 = vector.broadcast %68 : vector<1x8xf32> to vector<8x8xf32>
    %70 = arith.addf %66, %69 : vector<8x8xf32>
    %71 = arith.truncf %70 : vector<8x8xf32> to vector<8x8xbf16>
    %c1_38 = arith.constant 1 : index
    %c0_39 = arith.constant 0 : index
    %c0_40 = arith.constant 0 : index
    %72 = vector.load %arg20[%c1_38, %c0_39, %c0_40] : memref<4x8x8xbf16, #tpu.memory_space<vmem>>, vector<1x8x8xbf16>
    %73 = vector.shape_cast %72 : vector<1x8x8xbf16> to vector<8x8xbf16>
    %c1_41 = arith.constant 1 : index
    %c0_42 = arith.constant 0 : index
    %c0_43 = arith.constant 0 : index
    %74 = vector.load %arg21[%c1_41, %c0_42, %c0_43] : memref<4x8x8xbf16, #tpu.memory_space<vmem>>, vector<1x8x8xbf16>
    %75 = vector.shape_cast %74 : vector<1x8x8xbf16> to vector<8x8xbf16>
    %cst_44 = arith.constant dense<0.000000e+00> : vector<8x8xf32>
    %76 = tpu.matmul %71, %73, %cst_44 {dimension_numbers = #tpu.dot_dimension_numbers<[1], [1], [0], [0], [0, 0, 1, 0], [], []>} : vector<8x8xbf16>, vector<8x8xbf16>, vector<8x8xf32> -> vector<8x8xf32>
    %cst_45 = arith.constant dense<0xFF800000> : vector<8xf32>
    %77 = vector.multi_reduction <maximumf>, %76, %cst_45 [1] : vector<8x8xf32> to vector<8xf32>
    %78 = vector.shape_cast %77 : vector<8xf32> to vector<8x1xf32>
    %79 = vector.broadcast %78 : vector<8x1xf32> to vector<8x8xf32>
    %80 = arith.subf %76, %79 : vector<8x8xf32>
    %81 = math.exp %80 : vector<8x8xf32>
    %cst_46 = arith.constant dense<0.000000e+00> : vector<8xf32>
    %82 = vector.multi_reduction <add>, %81, %cst_46 [1] : vector<8x8xf32> to vector<8xf32>
    %83 = vector.shape_cast %82 : vector<8xf32> to vector<8x1xf32>
    %84 = tpu.reciprocal %83 {approx = true} : vector<8x1xf32> -> vector<8x1xf32>
    %85 = vector.broadcast %84 : vector<8x1xf32> to vector<8x8xf32>
    %86 = arith.mulf %81, %85 : vector<8x8xf32>
    %87 = arith.truncf %86 : vector<8x8xf32> to vector<8x8xbf16>
    %cst_47 = arith.constant dense<0.000000e+00> : vector<8x8xf32>
    %88 = tpu.matmul %87, %75, %cst_47 {dimension_numbers = #tpu.dot_dimension_numbers<[1], [0], [0], [1], [0, 0, 1, 1], [], []>} : vector<8x8xbf16>, vector<8x8xbf16>, vector<8x8xf32> -> vector<8x8xf32>
    %89 = arith.truncf %88 : vector<8x8xf32> to vector<8x8xbf16>
    %c1_48 = arith.constant 1 : index
    %c0_49 = arith.constant 0 : index
    %c0_50 = arith.constant 0 : index
    %90 = vector.load %arg11[%c1_48, %c0_49, %c0_50] : memref<4x8x32xbf16, #tpu.memory_space<vmem>>, vector<1x8x32xbf16>
    %91 = vector.shape_cast %90 : vector<1x8x32xbf16> to vector<8x32xbf16>
    %cst_51 = arith.constant dense<0.000000e+00> : vector<8x32xf32>
    %92 = tpu.matmul %89, %91, %cst_51 {dimension_numbers = #tpu.dot_dimension_numbers<[1], [0], [0], [1], [0, 0, 1, 1], [], []>} : vector<8x8xbf16>, vector<8x32xbf16>, vector<8x32xf32> -> vector<8x32xf32>
    %93 = arith.addf %63, %92 : vector<8x32xf32>
    %c2 = arith.constant 2 : index
    %c0_52 = arith.constant 0 : index
    %c0_53 = arith.constant 0 : index
    %94 = vector.load %arg5[%c2, %c0_52, %c0_53] : memref<4x32x8xbf16, #tpu.memory_space<vmem>>, vector<1x32x8xbf16>
    %95 = vector.shape_cast %94 : vector<1x32x8xbf16> to vector<32x8xbf16>
    %cst_54 = arith.constant dense<0.000000e+00> : vector<8x8xf32>
    %96 = tpu.matmul %32, %95, %cst_54 {dimension_numbers = #tpu.dot_dimension_numbers<[1], [0], [0], [1], [0, 0, 1, 1], [], []>} : vector<8x32xbf16>, vector<32x8xbf16>, vector<8x8xf32> -> vector<8x8xf32>
    %c2_55 = arith.constant 2 : index
    %c0_56 = arith.constant 0 : index
    %c0_57 = arith.constant 0 : index
    %97 = vector.load %arg6[%c2_55, %c0_56, %c0_57] : memref<4x1x8xf32, #tpu.memory_space<vmem>>, vector<1x1x8xf32>
    %98 = vector.shape_cast %97 : vector<1x1x8xf32> to vector<1x8xf32>
    %99 = vector.broadcast %98 : vector<1x8xf32> to vector<8x8xf32>
    %100 = arith.addf %96, %99 : vector<8x8xf32>
    %101 = arith.truncf %100 : vector<8x8xf32> to vector<8x8xbf16>
    %c2_58 = arith.constant 2 : index
    %c0_59 = arith.constant 0 : index
    %c0_60 = arith.constant 0 : index
    %102 = vector.load %arg20[%c2_58, %c0_59, %c0_60] : memref<4x8x8xbf16, #tpu.memory_space<vmem>>, vector<1x8x8xbf16>
    %103 = vector.shape_cast %102 : vector<1x8x8xbf16> to vector<8x8xbf16>
    %c2_61 = arith.constant 2 : index
    %c0_62 = arith.constant 0 : index
    %c0_63 = arith.constant 0 : index
    %104 = vector.load %arg21[%c2_61, %c0_62, %c0_63] : memref<4x8x8xbf16, #tpu.memory_space<vmem>>, vector<1x8x8xbf16>
    %105 = vector.shape_cast %104 : vector<1x8x8xbf16> to vector<8x8xbf16>
    %cst_64 = arith.constant dense<0.000000e+00> : vector<8x8xf32>
    %106 = tpu.matmul %101, %103, %cst_64 {dimension_numbers = #tpu.dot_dimension_numbers<[1], [1], [0], [0], [0, 0, 1, 0], [], []>} : vector<8x8xbf16>, vector<8x8xbf16>, vector<8x8xf32> -> vector<8x8xf32>
    %cst_65 = arith.constant dense<0xFF800000> : vector<8xf32>
    %107 = vector.multi_reduction <maximumf>, %106, %cst_65 [1] : vector<8x8xf32> to vector<8xf32>
    %108 = vector.shape_cast %107 : vector<8xf32> to vector<8x1xf32>
    %109 = vector.broadcast %108 : vector<8x1xf32> to vector<8x8xf32>
    %110 = arith.subf %106, %109 : vector<8x8xf32>
    %111 = math.exp %110 : vector<8x8xf32>
    %cst_66 = arith.constant dense<0.000000e+00> : vector<8xf32>
    %112 = vector.multi_reduction <add>, %111, %cst_66 [1] : vector<8x8xf32> to vector<8xf32>
    %113 = vector.shape_cast %112 : vector<8xf32> to vector<8x1xf32>
    %114 = tpu.reciprocal %113 {approx = true} : vector<8x1xf32> -> vector<8x1xf32>
    %115 = vector.broadcast %114 : vector<8x1xf32> to vector<8x8xf32>
    %116 = arith.mulf %111, %115 : vector<8x8xf32>
    %117 = arith.truncf %116 : vector<8x8xf32> to vector<8x8xbf16>
    %cst_67 = arith.constant dense<0.000000e+00> : vector<8x8xf32>
    %118 = tpu.matmul %117, %105, %cst_67 {dimension_numbers = #tpu.dot_dimension_numbers<[1], [0], [0], [1], [0, 0, 1, 1], [], []>} : vector<8x8xbf16>, vector<8x8xbf16>, vector<8x8xf32> -> vector<8x8xf32>
    %119 = arith.truncf %118 : vector<8x8xf32> to vector<8x8xbf16>
    %c2_68 = arith.constant 2 : index
    %c0_69 = arith.constant 0 : index
    %c0_70 = arith.constant 0 : index
    %120 = vector.load %arg11[%c2_68, %c0_69, %c0_70] : memref<4x8x32xbf16, #tpu.memory_space<vmem>>, vector<1x8x32xbf16>
    %121 = vector.shape_cast %120 : vector<1x8x32xbf16> to vector<8x32xbf16>
    %cst_71 = arith.constant dense<0.000000e+00> : vector<8x32xf32>
    %122 = tpu.matmul %119, %121, %cst_71 {dimension_numbers = #tpu.dot_dimension_numbers<[1], [0], [0], [1], [0, 0, 1, 1], [], []>} : vector<8x8xbf16>, vector<8x32xbf16>, vector<8x32xf32> -> vector<8x32xf32>
    %123 = arith.addf %93, %122 : vector<8x32xf32>
    %c3 = arith.constant 3 : index
    %c0_72 = arith.constant 0 : index
    %c0_73 = arith.constant 0 : index
    %124 = vector.load %arg5[%c3, %c0_72, %c0_73] : memref<4x32x8xbf16, #tpu.memory_space<vmem>>, vector<1x32x8xbf16>
    %125 = vector.shape_cast %124 : vector<1x32x8xbf16> to vector<32x8xbf16>
    %cst_74 = arith.constant dense<0.000000e+00> : vector<8x8xf32>
    %126 = tpu.matmul %32, %125, %cst_74 {dimension_numbers = #tpu.dot_dimension_numbers<[1], [0], [0], [1], [0, 0, 1, 1], [], []>} : vector<8x32xbf16>, vector<32x8xbf16>, vector<8x8xf32> -> vector<8x8xf32>
    %c3_75 = arith.constant 3 : index
    %c0_76 = arith.constant 0 : index
    %c0_77 = arith.constant 0 : index
    %127 = vector.load %arg6[%c3_75, %c0_76, %c0_77] : memref<4x1x8xf32, #tpu.memory_space<vmem>>, vector<1x1x8xf32>
    %128 = vector.shape_cast %127 : vector<1x1x8xf32> to vector<1x8xf32>
    %129 = vector.broadcast %128 : vector<1x8xf32> to vector<8x8xf32>
    %130 = arith.addf %126, %129 : vector<8x8xf32>
    %131 = arith.truncf %130 : vector<8x8xf32> to vector<8x8xbf16>
    %c3_78 = arith.constant 3 : index
    %c0_79 = arith.constant 0 : index
    %c0_80 = arith.constant 0 : index
    %132 = vector.load %arg20[%c3_78, %c0_79, %c0_80] : memref<4x8x8xbf16, #tpu.memory_space<vmem>>, vector<1x8x8xbf16>
    %133 = vector.shape_cast %132 : vector<1x8x8xbf16> to vector<8x8xbf16>
    %c3_81 = arith.constant 3 : index
    %c0_82 = arith.constant 0 : index
    %c0_83 = arith.constant 0 : index
    %134 = vector.load %arg21[%c3_81, %c0_82, %c0_83] : memref<4x8x8xbf16, #tpu.memory_space<vmem>>, vector<1x8x8xbf16>
    %135 = vector.shape_cast %134 : vector<1x8x8xbf16> to vector<8x8xbf16>
    %cst_84 = arith.constant dense<0.000000e+00> : vector<8x8xf32>
    %136 = tpu.matmul %131, %133, %cst_84 {dimension_numbers = #tpu.dot_dimension_numbers<[1], [1], [0], [0], [0, 0, 1, 0], [], []>} : vector<8x8xbf16>, vector<8x8xbf16>, vector<8x8xf32> -> vector<8x8xf32>
    %cst_85 = arith.constant dense<0xFF800000> : vector<8xf32>
    %137 = vector.multi_reduction <maximumf>, %136, %cst_85 [1] : vector<8x8xf32> to vector<8xf32>
    %138 = vector.shape_cast %137 : vector<8xf32> to vector<8x1xf32>
    %139 = vector.broadcast %138 : vector<8x1xf32> to vector<8x8xf32>
    %140 = arith.subf %136, %139 : vector<8x8xf32>
    %141 = math.exp %140 : vector<8x8xf32>
    %cst_86 = arith.constant dense<0.000000e+00> : vector<8xf32>
    %142 = vector.multi_reduction <add>, %141, %cst_86 [1] : vector<8x8xf32> to vector<8xf32>
    %143 = vector.shape_cast %142 : vector<8xf32> to vector<8x1xf32>
    %144 = tpu.reciprocal %143 {approx = true} : vector<8x1xf32> -> vector<8x1xf32>
    %145 = vector.broadcast %144 : vector<8x1xf32> to vector<8x8xf32>
    %146 = arith.mulf %141, %145 : vector<8x8xf32>
    %147 = arith.truncf %146 : vector<8x8xf32> to vector<8x8xbf16>
    %cst_87 = arith.constant dense<0.000000e+00> : vector<8x8xf32>
    %148 = tpu.matmul %147, %135, %cst_87 {dimension_numbers = #tpu.dot_dimension_numbers<[1], [0], [0], [1], [0, 0, 1, 1], [], []>} : vector<8x8xbf16>, vector<8x8xbf16>, vector<8x8xf32> -> vector<8x8xf32>
    %149 = arith.truncf %148 : vector<8x8xf32> to vector<8x8xbf16>
    %c3_88 = arith.constant 3 : index
    %c0_89 = arith.constant 0 : index
    %c0_90 = arith.constant 0 : index
    %150 = vector.load %arg11[%c3_88, %c0_89, %c0_90] : memref<4x8x32xbf16, #tpu.memory_space<vmem>>, vector<1x8x32xbf16>
    %151 = vector.shape_cast %150 : vector<1x8x32xbf16> to vector<8x32xbf16>
    %cst_91 = arith.constant dense<0.000000e+00> : vector<8x32xf32>
    %152 = tpu.matmul %149, %151, %cst_91 {dimension_numbers = #tpu.dot_dimension_numbers<[1], [0], [0], [1], [0, 0, 1, 1], [], []>} : vector<8x8xbf16>, vector<8x32xbf16>, vector<8x32xf32> -> vector<8x32xf32>
    %153 = arith.addf %123, %152 : vector<8x32xf32>
    %c0_92 = arith.constant 0 : index
    %c0_93 = arith.constant 0 : index
    %154 = vector.load %arg12[%c0_92, %c0_93] : memref<1x32xf32, #tpu.memory_space<vmem>>, vector<1x32xf32>
    %155 = vector.broadcast %154 : vector<1x32xf32> to vector<8x32xf32>
    %156 = arith.addf %153, %155 : vector<8x32xf32>
    %157 = arith.addf %7, %156 : vector<8x32xf32>
    %c0_94 = arith.constant 0 : index
    %c0_95 = arith.constant 0 : index
    %158 = vector.load %arg13[%c0_94, %c0_95] : memref<1x32xf32, #tpu.memory_space<vmem>>, vector<1x32xf32>
    %c0_96 = arith.constant 0 : index
    %c0_97 = arith.constant 0 : index
    %159 = vector.load %arg14[%c0_96, %c0_97] : memref<1x32xf32, #tpu.memory_space<vmem>>, vector<1x32xf32>
    %cst_98 = arith.constant dense<0.000000e+00> : vector<8xf32>
    %160 = vector.multi_reduction <add>, %157, %cst_98 [1] : vector<8x32xf32> to vector<8xf32>
    %161 = vector.shape_cast %160 : vector<8xf32> to vector<8x1xf32>
    %cst_99 = arith.constant 3.200000e+01 : f32
    %162 = vector.broadcast %cst_99 : f32 to vector<8x1xf32>
    %163 = arith.divf %161, %162 : vector<8x1xf32>
    %164 = vector.broadcast %163 : vector<8x1xf32> to vector<8x32xf32>
    %165 = arith.subf %157, %164 : vector<8x32xf32>
    %166 = arith.mulf %165, %165 : vector<8x32xf32>
    %cst_100 = arith.constant dense<0.000000e+00> : vector<8xf32>
    %167 = vector.multi_reduction <add>, %166, %cst_100 [1] : vector<8x32xf32> to vector<8xf32>
    %168 = vector.shape_cast %167 : vector<8xf32> to vector<8x1xf32>
    %cst_101 = arith.constant 3.200000e+01 : f32
    %169 = vector.broadcast %cst_101 : f32 to vector<8x1xf32>
    %170 = arith.divf %168, %169 : vector<8x1xf32>
    %171 = vector.broadcast %163 : vector<8x1xf32> to vector<8x32xf32>
    %172 = arith.subf %157, %171 : vector<8x32xf32>
    %cst_102 = arith.constant 9.99999974E-6 : f32
    %173 = vector.broadcast %cst_102 : f32 to vector<8x1xf32>
    %174 = arith.addf %170, %173 : vector<8x1xf32>
    %175 = math.rsqrt %174 : vector<8x1xf32>
    %176 = vector.broadcast %175 : vector<8x1xf32> to vector<8x32xf32>
    %177 = arith.mulf %172, %176 : vector<8x32xf32>
    %178 = vector.broadcast %158 : vector<1x32xf32> to vector<8x32xf32>
    %179 = arith.mulf %177, %178 : vector<8x32xf32>
    %180 = vector.broadcast %159 : vector<1x32xf32> to vector<8x32xf32>
    %181 = arith.addf %179, %180 : vector<8x32xf32>
    %182 = arith.truncf %181 : vector<8x32xf32> to vector<8x32xbf16>
    %c0_103 = arith.constant 0 : index
    %c0_104 = arith.constant 0 : index
    %183 = vector.load %arg15[%c0_103, %c0_104] : memref<32x128xbf16, #tpu.memory_space<vmem>>, vector<32x128xbf16>
    %cst_105 = arith.constant dense<0.000000e+00> : vector<8x128xf32>
    %184 = tpu.matmul %182, %183, %cst_105 {dimension_numbers = #tpu.dot_dimension_numbers<[1], [0], [0], [1], [0, 0, 1, 1], [], []>} : vector<8x32xbf16>, vector<32x128xbf16>, vector<8x128xf32> -> vector<8x128xf32>
    %c0_106 = arith.constant 0 : index
    %c0_107 = arith.constant 0 : index
    %185 = vector.load %arg16[%c0_106, %c0_107] : memref<1x128xf32, #tpu.memory_space<vmem>>, vector<1x128xf32>
    %186 = vector.broadcast %185 : vector<1x128xf32> to vector<8x128xf32>
    %187 = arith.addf %184, %186 : vector<8x128xf32>
    %cst_108 = arith.constant 5.000000e-01 : f32
    %188 = vector.broadcast %cst_108 : f32 to vector<8x128xf32>
    %189 = arith.mulf %188, %187 : vector<8x128xf32>
    %cst_109 = arith.constant 4.471500e-02 : f32
    %190 = vector.broadcast %cst_109 : f32 to vector<8x128xf32>
    %191 = arith.mulf %190, %187 : vector<8x128xf32>
    %192 = arith.mulf %191, %187 : vector<8x128xf32>
    %193 = arith.mulf %192, %187 : vector<8x128xf32>
    %194 = arith.addf %187, %193 : vector<8x128xf32>
    %cst_110 = arith.constant 0.797884583 : f32
    %195 = vector.broadcast %cst_110 : f32 to vector<8x128xf32>
    %196 = arith.mulf %195, %194 : vector<8x128xf32>
    %197 = math.tanh %196 : vector<8x128xf32>
    %cst_111 = arith.constant 1.000000e+00 : f32
    %198 = vector.broadcast %cst_111 : f32 to vector<8x128xf32>
    %199 = arith.addf %198, %197 : vector<8x128xf32>
    %200 = arith.mulf %189, %199 : vector<8x128xf32>
    %201 = arith.truncf %200 : vector<8x128xf32> to vector<8x128xbf16>
    %c0_112 = arith.constant 0 : index
    %c0_113 = arith.constant 0 : index
    %202 = vector.load %arg17[%c0_112, %c0_113] : memref<128x32xbf16, #tpu.memory_space<vmem>>, vector<128x32xbf16>
    %cst_114 = arith.constant dense<0.000000e+00> : vector<8x32xf32>
    %203 = tpu.matmul %201, %202, %cst_114 {dimension_numbers = #tpu.dot_dimension_numbers<[1], [0], [0], [1], [0, 0, 1, 1], [], []>} : vector<8x128xbf16>, vector<128x32xbf16>, vector<8x32xf32> -> vector<8x32xf32>
    %c0_115 = arith.constant 0 : index
    %c0_116 = arith.constant 0 : index
    %204 = vector.load %arg18[%c0_115, %c0_116] : memref<1x32xf32, #tpu.memory_space<vmem>>, vector<1x32xf32>
    %205 = vector.broadcast %204 : vector<1x32xf32> to vector<8x32xf32>
    %206 = arith.addf %203, %205 : vector<8x32xf32>
    %207 = arith.addf %157, %206 : vector<8x32xf32>
    %c0_117 = arith.constant 0 : index
    %c0_118 = arith.constant 0 : index
    %c0_119 = arith.constant 0 : index
    %208 = vector.load %arg19[%c0_117, %c0_118, %c0_119] : memref<1x8x32xf32, #tpu.memory_space<vmem>>, vector<1x8x32xf32>
    %209 = vector.shape_cast %208 : vector<1x8x32xf32> to vector<8x32xf32>
    %210 = vector.shape_cast %207 : vector<8x32xf32> to vector<1x8x32xf32>
    tpu.vector_store %arg19[%c0_117, %c0_118, %c0_119], %210 {strides = array<i32>} : memref<1x8x32xf32, #tpu.memory_space<vmem>>, vector<1x8x32xf32>,
    return
  }
  func.func @transform_0(%arg0: i32, %arg1: i32) -> (i32, i32, i32) {
    %c0_i32 = arith.constant 0 : i32
    %c0_i32_0 = arith.constant 0 : i32
    %c0_i32_1 = arith.constant 0 : i32
    return %arg0, %c0_i32, %c0_i32_0 : i32, i32, i32
  }
  func.func @transform_1(%arg0: i32, %arg1: i32) -> (i32, i32) {
    %c0_i32 = arith.constant 0 : i32
    %c0_i32_0 = arith.constant 0 : i32
    %c0_i32_1 = arith.constant 0 : i32
    return %c0_i32, %c0_i32_0 : i32, i32
  }
  func.func @transform_2(%arg0: i32, %arg1: i32) -> (i32, i32) {
    %c0_i32 = arith.constant 0 : i32
    %c0_i32_0 = arith.constant 0 : i32
    %c0_i32_1 = arith.constant 0 : i32
    return %c0_i32, %c0_i32_0 : i32, i32
  }
  func.func @transform_3(%arg0: i32, %arg1: i32) -> (i32, i32, i32) {
    %c0_i32 = arith.constant 0 : i32
    %c0_i32_0 = arith.constant 0 : i32
    %c0_i32_1 = arith.constant 0 : i32
    %c0_i32_2 = arith.constant 0 : i32
    return %c0_i32, %c0_i32_0, %c0_i32_1 : i32, i32, i32
  }
  func.func @transform_4(%arg0: i32, %arg1: i32) -> (i32, i32, i32) {
    %c0_i32 = arith.constant 0 : i32
    %c0_i32_0 = arith.constant 0 : i32
    %c0_i32_1 = arith.constant 0 : i32
    %c0_i32_2 = arith.constant 0 : i32
    return %c0_i32, %c0_i32_0, %c0_i32_1 : i32, i32, i32
  }
  func.func @transform_5(%arg0: i32, %arg1: i32) -> (i32, i32, i32) {
    %c0_i32 = arith.constant 0 : i32
    %c0_i32_0 = arith.constant 0 : i32
    %c0_i32_1 = arith.constant 0 : i32
    %c0_i32_2 = arith.constant 0 : i32
    return %c0_i32, %c0_i32_0, %c0_i32_1 : i32, i32, i32
  }
  func.func @transform_6(%arg0: i32, %arg1: i32) -> (i32, i32, i32) {
    %c0_i32 = arith.constant 0 : i32
    %c0_i32_0 = arith.constant 0 : i32
    %c0_i32_1 = arith.constant 0 : i32
    %c0_i32_2 = arith.constant 0 : i32
    return %c0_i32, %c0_i32_0, %c0_i32_1 : i32, i32, i32
  }
  func.func @transform_7(%arg0: i32, %arg1: i32) -> (i32, i32, i32) {
    %c0_i32 = arith.constant 0 : i32
    %c0_i32_0 = arith.constant 0 : i32
    %c0_i32_1 = arith.constant 0 : i32
    %c0_i32_2 = arith.constant 0 : i32
    return %c0_i32, %c0_i32_0, %c0_i32_1 : i32, i32, i32
  }
  func.func @transform_8(%arg0: i32, %arg1: i32) -> (i32, i32, i32) {
    %c0_i32 = arith.constant 0 : i32
    %c0_i32_0 = arith.constant 0 : i32
    %c0_i32_1 = arith.constant 0 : i32
    %c0_i32_2 = arith.constant 0 : i32
    return %c0_i32, %c0_i32_0, %c0_i32_1 : i32, i32, i32
  }
  func.func @transform_9(%arg0: i32, %arg1: i32) -> (i32, i32, i32) {
    %c0_i32 = arith.constant 0 : i32
    %c0_i32_0 = arith.constant 0 : i32
    %c0_i32_1 = arith.constant 0 : i32
    %c0_i32_2 = arith.constant 0 : i32
    return %c0_i32, %c0_i32_0, %c0_i32_1 : i32, i32, i32
  }
  func.func @transform_10(%arg0: i32, %arg1: i32) -> (i32, i32) {
    %c0_i32 = arith.constant 0 : i32
    %c0_i32_0 = arith.constant 0 : i32
    %c0_i32_1 = arith.constant 0 : i32
    return %c0_i32, %c0_i32_0 : i32, i32
  }
  func.func @transform_11(%arg0: i32, %arg1: i32) -> (i32, i32) {
    %c0_i32 = arith.constant 0 : i32
    %c0_i32_0 = arith.constant 0 : i32
    %c0_i32_1 = arith.constant 0 : i32
    return %c0_i32, %c0_i32_0 : i32, i32
  }
  func.func @transform_12(%arg0: i32, %arg1: i32) -> (i32, i32) {
    %c0_i32 = arith.constant 0 : i32
    %c0_i32_0 = arith.constant 0 : i32
    %c0_i32_1 = arith.constant 0 : i32
    return %c0_i32, %c0_i32_0 : i32, i32
  }
  func.func @transform_13(%arg0: i32, %arg1: i32) -> (i32, i32) {
    %c0_i32 = arith.constant 0 : i32
    %c0_i32_0 = arith.constant 0 : i32
    %c0_i32_1 = arith.constant 0 : i32
    return %c0_i32, %c0_i32_0 : i32, i32
  }
  func.func @transform_14(%arg0: i32, %arg1: i32) -> (i32, i32) {
    %c0_i32 = arith.constant 0 : i32
    %c0_i32_0 = arith.constant 0 : i32
    %c0_i32_1 = arith.constant 0 : i32
    return %c0_i32, %c0_i32_0 : i32, i32
  }
  func.func @transform_15(%arg0: i32, %arg1: i32) -> (i32, i32) {
    %c0_i32 = arith.constant 0 : i32
    %c0_i32_0 = arith.constant 0 : i32
    %c0_i32_1 = arith.constant 0 : i32
    return %c0_i32, %c0_i32_0 : i32, i32
  }
  func.func @transform_16(%arg0: i32, %arg1: i32) -> (i32, i32) {
    %c0_i32 = arith.constant 0 : i32
    %c0_i32_0 = arith.constant 0 : i32
    %c0_i32_1 = arith.constant 0 : i32
    return %c0_i32, %c0_i32_0 : i32, i32
  }
  func.func @transform_17(%arg0: i32, %arg1: i32) -> (i32, i32, i32) {
    %c0_i32 = arith.constant 0 : i32
    %c0_i32_0 = arith.constant 0 : i32
    return %arg0, %arg1, %c0_i32 : i32, i32, i32
  }
}

</mosaic_0001>

<llo_original>
// kernel: tpu_custom_call.1
$region0: #{tpu_custom_call.1}
  #allocation0 [shape = 'u32[]', space=smem, size = 0x4, offset = 0x4, fixed_abs, tag = 'smem constant byte address 0x4 - core index']
  #allocation1 [shape = 'u32[144,128]{1,0:T(1,128)}', space=vmem, size = 0x12000, scoped, tag = 'internal scratch']
  #allocation2 [shape = 'bf16[4,8,8]{2,1,0:T(8,128)(2,1)}', space=vmem, size = 0x2000, scoped, tag = 'scratch operand']
  #allocation3 [shape = 'bf16[4,8,8]{2,1,0:T(8,128)(2,1)}', space=vmem, size = 0x2000, scoped, tag = 'scratch operand']
  %s0 = inlined_call_operand.vmem [shape: f32[2,8,32], index: 0, kind: input, shape index: {}]
  %s1 = inlined_call_operand.vmem [shape: f32[1,32], index: 1, kind: input, shape index: {}]
  %s2 = inlined_call_operand.vmem [shape: f32[1,32], index: 2, kind: input, shape index: {}]
  %s3 = inlined_call_operand.vmem [shape: bf16[4,32,8], index: 3, kind: input, shape index: {}]
  %s4 = inlined_call_operand.vmem [shape: f32[4,1,8], index: 4, kind: input, shape index: {}]
  %s5 = inlined_call_operand.vmem [shape: bf16[4,32,8], index: 5, kind: input, shape index: {}]
  %s6 = inlined_call_operand.vmem [shape: f32[4,1,8], index: 6, kind: input, shape index: {}]
  %s7 = inlined_call_operand.vmem [shape: bf16[4,32,8], index: 7, kind: input, shape index: {}]
  %s8 = inlined_call_operand.vmem [shape: f32[4,1,8], index: 8, kind: input, shape index: {}]
  %s9 = inlined_call_operand.vmem [shape: bf16[4,8,32], index: 9, kind: input, shape index: {}]
  %s10 = inlined_call_operand.vmem [shape: f32[1,32], index: 10, kind: input, shape index: {}]
  %s11 = inlined_call_operand.vmem [shape: f32[1,32], index: 11, kind: input, shape index: {}]
  %s12 = inlined_call_operand.vmem [shape: f32[1,32], index: 12, kind: input, shape index: {}]
  %s13 = inlined_call_operand.vmem [shape: bf16[32,128], index: 13, kind: input, shape index: {}]
  %s14 = inlined_call_operand.vmem [shape: f32[1,128], index: 14, kind: input, shape index: {}]
  %s15 = inlined_call_operand.vmem [shape: bf16[128,32], index: 15, kind: input, shape index: {}]
  %s16 = inlined_call_operand.vmem [shape: f32[1,32], index: 16, kind: input, shape index: {}]
  %s17 = inlined_call_operand.hbm [shape: f32[2,8,32], index: 17, kind: output, shape index: {}]
  %s18 = sld [smem:[#allocation0]]
  $region105: #{tpu_custom_call.1} parent=0
    _
  %s20 = ssub.s32 1, %s18
  %s21 = scalar_select 0, %s20, %s18
  $region1: #{tpu_custom_call.1} parent=0
    #allocation4 [shape = 'u8[8192]{0}', space=vmem, size = 0x2000, scoped, tag = 'output window, operand 0']
    #allocation5 [shape = 's32[2]{0}', space=sflag, size = 0x8, scoped, tag = 'scoped memory for tpu_custom_call.1']
    %22 = vsyncpa [#allocation5], 0
    %s23 = scalar_lea.sflag [#allocation5], 1
    %24 = vsyncpa %s23, 0
    loop: start=0, step=1, limit=4
    $region2: #{tpu_custom_call.1} parent=1 // loop_pre_header
      _
    $region3: #{tpu_custom_call.1} parent=1 // loop_header
      %s26 = sphi 0, %s30
      %p27 = scmp.ge.s32.totalorder %s26, 4
      %s33 = sphi 0, %s45
      %s34 = sphi 0, %s41
      %s35 = sphi 0, %s33
      %s36 = sphi 0, %s34
      %s37 = sphi 0, %s35
      %s38 = sphi 0, %s36
      %s48 = sphi 0, %s50
      %s51 = sphi 0, %s48
      %s52 = sphi 0, %s51
      %s68 = sphi 0, %s52
      %s72 = sphi 0, %s72
      %s74 = sphi 0, %s72
      %s75 = sphi 0, %s74
      %s89 = sphi 0, %s75
      %s93 = sphi 0, %s93
      %s95 = sphi 0, %s93
      %s96 = sphi 0, %s95
      %s110 = sphi 0, %s96
      %s114 = sphi 0, %s114
      %s116 = sphi 0, %s114
      %s117 = sphi 0, %s116
      %s131 = sphi 0, %s117
      %s135 = sphi 0, %s135
      %s137 = sphi 0, %s135
      %s138 = sphi 0, %s137
      %s152 = sphi 0, %s138
      %s156 = sphi 0, %s156
      %s158 = sphi 0, %s156
      %s159 = sphi 0, %s158
      %s173 = sphi 0, %s159
      %s177 = sphi 0, %s177
      %s179 = sphi 0, %s177
      %s180 = sphi 0, %s179
      %s194 = sphi 0, %s180
      %s198 = sphi 0, %s198
      %s200 = sphi 0, %s198
      %s201 = sphi 0, %s200
      %s215 = sphi 0, %s201
      %s219 = sphi 0, %s219
      %s221 = sphi 0, %s219
      %s222 = sphi 0, %s221
      %s236 = sphi 0, %s222
      %s240 = sphi 0, %s240
      %s242 = sphi 0, %s240
      %s243 = sphi 0, %s242
      %s257 = sphi 0, %s243
      %s261 = sphi 0, %s261
      %s263 = sphi 0, %s261
      %s264 = sphi 0, %s263
      %s278 = sphi 0, %s264
      %s282 = sphi 0, %s282
      %s284 = sphi 0, %s282
      %s285 = sphi 0, %s284
      %s299 = sphi 0, %s285
      %s303 = sphi 0, %s303
      %s305 = sphi 0, %s303
      %s306 = sphi 0, %s305
      %s320 = sphi 0, %s306
      %s324 = sphi 0, %s324
      %s326 = sphi 0, %s324
      %s327 = sphi 0, %s326
      %s341 = sphi 0, %s327
      %s345 = sphi 0, %s345
      %s347 = sphi 0, %s345
      %s348 = sphi 0, %s347
      %s362 = sphi 0, %s348
      %s366 = sphi 0, %s366
      %s368 = sphi 0, %s366
      %s369 = sphi 0, %s368
      %s383 = sphi 0, %s369
      %s387 = sphi 0, %s387
      %s389 = sphi 0, %s387
      %s390 = sphi 0, %s389
      %s404 = sphi 0, %s390
      %s412 = sphi 0, %s414
      %s415 = sphi 0, %s412
      %s416 = sphi 0, %s415
      %s432 = sphi 0, %s416
    $region4: #{tpu_custom_call.1} parent=1 // loop_header_branch
      %29 = sbr.rel (%p27) target = $region8
    $region5: #{tpu_custom_call.1} parent=1 // loop_body
      %s31 = ssub.s32 %s26, 1
      %s32 = ssub.s32 %s26, 2
      %s39 = sadd.s32 1, %s34
      %p40 = scmp.ge.s32.totalorder %s39, 1
      %s41 = scalar_select %p40, 0, %s39
      %s42 = sadd.s32 1, %s33
      %s43 = scalar_select %p40, %s42, %s33
      %p44 = scmp.ge.s32.totalorder %s43, 2
      %s45 = scalar_select %p44, 0, %s43
      %s46 = ssub.s32 %s33, %s45
      %p47 = scmp.eq.s32.totalorder %s46, 0
      %s49 = sadd.s32 %s48, 1
      %s50 = scalar_select %p47, %s48, %s49
      %p53 = pneg %p47
      %p54 = scmp.eq.s32.totalorder %s26, 1
      %p55 = por %p53, %p54
      %p56 = scmp.ne.s32.totalorder %s48, %s51
      %p57 = scmp.eq.s32.totalorder %s26, 0
      %p58 = por %p56, %p57
      %p59 = scmp.ne.s32.totalorder %s48, %s51
      %p60 = scmp.eq.s32.totalorder %s31, 1
      %p61 = por %p59, %p60
      %p62 = scmp.ne.s32.totalorder %s51, %s52
      %p63 = scmp.eq.s32.totalorder %s31, 0
      %p64 = por %p62, %p63
      %p65 = scmp.ne.s32.totalorder %s51, %s52
      %p66 = scmp.eq.s32.totalorder %s32, 1
      %p67 = por %p65, %p66
      %p69 = scmp.ne.s32.totalorder %s52, %s68
      %p70 = scmp.eq.s32.totalorder %s32, 0
      %p71 = por %p69, %p70
      %s73 = sadd.s32 %s72, 1
      %p76 = scmp.eq.s32.totalorder %s26, 1
      %p77 = scmp.ne.s32.totalorder %s72, %s74
      %p78 = scmp.eq.s32.totalorder %s26, 0
      %p79 = por %p77, %p78
      %p80 = scmp.ne.s32.totalorder %s72, %s74
      %p81 = scmp.eq.s32.totalorder %s31, 1
      %p82 = por %p80, %p81
      %p83 = scmp.ne.s32.totalorder %s74, %s75
      %p84 = scmp.eq.s32.totalorder %s31, 0
      %p85 = por %p83, %p84
      %p86 = scmp.ne.s32.totalorder %s74, %s75
      %p87 = scmp.eq.s32.totalorder %s32, 1
      %p88 = por %p86, %p87
      %p90 = scmp.ne.s32.totalorder %s75, %s89
      %p91 = scmp.eq.s32.totalorder %s32, 0
      %p92 = por %p90, %p91
      %s94 = sadd.s32 %s93, 1
      %p97 = scmp.eq.s32.totalorder %s26, 1
      %p98 = scmp.ne.s32.totalorder %s93, %s95
      %p99 = scmp.eq.s32.totalorder %s26, 0
      %p100 = por %p98, %p99
      %p101 = scmp.ne.s32.totalorder %s93, %s95
      %p102 = scmp.eq.s32.totalorder %s31, 1
      %p103 = por %p101, %p102
      %p104 = scmp.ne.s32.totalorder %s95, %s96
      %p105 = scmp.eq.s32.totalorder %s31, 0
      %p106 = por %p104, %p105
      %p107 = scmp.ne.s32.totalorder %s95, %s96
      %p108 = scmp.eq.s32.totalorder %s32, 1
      %p109 = por %p107, %p108
      %p111 = scmp.ne.s32.totalorder %s96, %s110
      %p112 = scmp.eq.s32.totalorder %s32, 0
      %p113 = por %p111, %p112
      %s115 = sadd.s32 %s114, 1
      %p118 = scmp.eq.s32.totalorder %s26, 1
      %p119 = scmp.ne.s32.totalorder %s114, %s116
      %p120 = scmp.eq.s32.totalorder %s26, 0
      %p121 = por %p119, %p120
      %p122 = scmp.ne.s32.totalorder %s114, %s116
      %p123 = scmp.eq.s32.totalorder %s31, 1
      %p124 = por %p122, %p123
      %p125 = scmp.ne.s32.totalorder %s116, %s117
      %p126 = scmp.eq.s32.totalorder %s31, 0
      %p127 = por %p125, %p126
      %p128 = scmp.ne.s32.totalorder %s116, %s117
      %p129 = scmp.eq.s32.totalorder %s32, 1
      %p130 = por %p128, %p129
      %p132 = scmp.ne.s32.totalorder %s117, %s131
      %p133 = scmp.eq.s32.totalorder %s32, 0
      %p134 = por %p132, %p133
      %s136 = sadd.s32 %s135, 1
      %p139 = scmp.eq.s32.totalorder %s26, 1
      %p140 = scmp.ne.s32.totalorder %s135, %s137
      %p141 = scmp.eq.s32.totalorder %s26, 0
      %p142 = por %p140, %p141
      %p143 = scmp.ne.s32.totalorder %s135, %s137
      %p144 = scmp.eq.s32.totalorder %s31, 1
      %p145 = por %p143, %p144
      %p146 = scmp.ne.s32.totalorder %s137, %s138
      %p147 = scmp.eq.s32.totalorder %s31, 0
      %p148 = por %p146, %p147
      %p149 = scmp.ne.s32.totalorder %s137, %s138
      %p150 = scmp.eq.s32.totalorder %s32, 1
      %p151 = por %p149, %p150
      %p153 = scmp.ne.s32.totalorder %s138, %s152
      %p154 = scmp.eq.s32.totalorder %s32, 0
      %p155 = por %p153, %p154
      %s157 = sadd.s32 %s156, 1
      %p160 = scmp.eq.s32.totalorder %s26, 1
      %p161 = scmp.ne.s32.totalorder %s156, %s158
      %p162 = scmp.eq.s32.totalorder %s26, 0
      %p163 = por %p161, %p162
      %p164 = scmp.ne.s32.totalorder %s156, %s158
      %p165 = scmp.eq.s32.totalorder %s31, 1
      %p166 = por %p164, %p165
      %p167 = scmp.ne.s32.totalorder %s158, %s159
      %p168 = scmp.eq.s32.totalorder %s31, 0
      %p169 = por %p167, %p168
      %p170 = scmp.ne.s32.totalorder %s158, %s159
      %p171 = scmp.eq.s32.totalorder %s32, 1
      %p172 = por %p170, %p171
      %p174 = scmp.ne.s32.totalorder %s159, %s173
      %p175 = scmp.eq.s32.totalorder %s32, 0
      %p176 = por %p174, %p175
      %s178 = sadd.s32 %s177, 1
      %p181 = scmp.eq.s32.totalorder %s26, 1
      %p182 = scmp.ne.s32.totalorder %s177, %s179
      %p183 = scmp.eq.s32.totalorder %s26, 0
      %p184 = por %p182, %p183
      %p185 = scmp.ne.s32.totalorder %s177, %s179
      %p186 = scmp.eq.s32.totalorder %s31, 1
      %p187 = por %p185, %p186
      %p188 = scmp.ne.s32.totalorder %s179, %s180
      %p189 = scmp.eq.s32.totalorder %s31, 0
      %p190 = por %p188, %p189
      %p191 = scmp.ne.s32.totalorder %s179, %s180
      %p192 = scmp.eq.s32.totalorder %s32, 1
      %p193 = por %p191, %p192
      %p195 = scmp.ne.s32.totalorder %s180, %s194
      %p196 = scmp.eq.s32.totalorder %s32, 0
      %p197 = por %p195, %p196
      %s199 = sadd.s32 %s198, 1
      %p202 = scmp.eq.s32.totalorder %s26, 1
      %p203 = scmp.ne.s32.totalorder %s198, %s200
      %p204 = scmp.eq.s32.totalorder %s26, 0
      %p205 = por %p203, %p204
      %p206 = scmp.ne.s32.totalorder %s198, %s200
      %p207 = scmp.eq.s32.totalorder %s31, 1
      %p208 = por %p206, %p207
      %p209 = scmp.ne.s32.totalorder %s200, %s201
      %p210 = scmp.eq.s32.totalorder %s31, 0
      %p211 = por %p209, %p210
      %p212 = scmp.ne.s32.totalorder %s200, %s201
      %p213 = scmp.eq.s32.totalorder %s32, 1
      %p214 = por %p212, %p213
      %p216 = scmp.ne.s32.totalorder %s201, %s215
      %p217 = scmp.eq.s32.totalorder %s32, 0
      %p218 = por %p216, %p217
      %s220 = sadd.s32 %s219, 1
      %p223 = scmp.eq.s32.totalorder %s26, 1
      %p224 = scmp.ne.s32.totalorder %s219, %s221
      %p225 = scmp.eq.s32.totalorder %s26, 0
      %p226 = por %p224, %p225
      %p227 = scmp.ne.s32.totalorder %s219, %s221
      %p228 = scmp.eq.s32.totalorder %s31, 1
      %p229 = por %p227, %p228
      %p230 = scmp.ne.s32.totalorder %s221, %s222
      %p231 = scmp.eq.s32.totalorder %s31, 0
      %p232 = por %p230, %p231
      %p233 = scmp.ne.s32.totalorder %s221, %s222
      %p234 = scmp.eq.s32.totalorder %s32, 1
      %p235 = por %p233, %p234
      %p237 = scmp.ne.s32.totalorder %s222, %s236
      %p238 = scmp.eq.s32.totalorder %s32, 0
      %p239 = por %p237, %p238
      %s241 = sadd.s32 %s240, 1
      %p244 = scmp.eq.s32.totalorder %s26, 1
      %p245 = scmp.ne.s32.totalorder %s240, %s242
      %p246 = scmp.eq.s32.totalorder %s26, 0
      %p247 = por %p245, %p246
      %p248 = scmp.ne.s32.totalorder %s240, %s242
      %p249 = scmp.eq.s32.totalorder %s31, 1
      %p250 = por %p248, %p249
      %p251 = scmp.ne.s32.totalorder %s242, %s243
      %p252 = scmp.eq.s32.totalorder %s31, 0
      %p253 = por %p251, %p252
      %p254 = scmp.ne.s32.totalorder %s242, %s243
      %p255 = scmp.eq.s32.totalorder %s32, 1
      %p256 = por %p254, %p255
      %p258 = scmp.ne.s32.totalorder %s243, %s257
      %p259 = scmp.eq.s32.totalorder %s32, 0
      %p260 = por %p258, %p259
      %s262 = sadd.s32 %s261, 1
      %p265 = scmp.eq.s32.totalorder %s26, 1
      %p266 = scmp.ne.s32.totalorder %s261, %s263
      %p267 = scmp.eq.s32.totalorder %s26, 0
      %p268 = por %p266, %p267
      %p269 = scmp.ne.s32.totalorder %s261, %s263
      %p270 = scmp.eq.s32.totalorder %s31, 1
      %p271 = por %p269, %p270
      %p272 = scmp.ne.s32.totalorder %s263, %s264
      %p273 = scmp.eq.s32.totalorder %s31, 0
      %p274 = por %p272, %p273
      %p275 = scmp.ne.s32.totalorder %s263, %s264
      %p276 = scmp.eq.s32.totalorder %s32, 1
      %p277 = por %p275, %p276
      %p279 = scmp.ne.s32.totalorder %s264, %s278
      %p280 = scmp.eq.s32.totalorder %s32, 0
      %p281 = por %p279, %p280
      %s283 = sadd.s32 %s282, 1
      %p286 = scmp.eq.s32.totalorder %s26, 1
      %p287 = scmp.ne.s32.totalorder %s282, %s284
      %p288 = scmp.eq.s32.totalorder %s26, 0
      %p289 = por %p287, %p288
      %p290 = scmp.ne.s32.totalorder %s282, %s284
      %p291 = scmp.eq.s32.totalorder %s31, 1
      %p292 = por %p290, %p291
      %p293 = scmp.ne.s32.totalorder %s284, %s285
      %p294 = scmp.eq.s32.totalorder %s31, 0
      %p295 = por %p293, %p294
      %p296 = scmp.ne.s32.totalorder %s284, %s285
      %p297 = scmp.eq.s32.totalorder %s32, 1
      %p298 = por %p296, %p297
      %p300 = scmp.ne.s32.totalorder %s285, %s299
      %p301 = scmp.eq.s32.totalorder %s32, 0
      %p302 = por %p300, %p301
      %s304 = sadd.s32 %s303, 1
      %p307 = scmp.eq.s32.totalorder %s26, 1
      %p308 = scmp.ne.s32.totalorder %s303, %s305
      %p309 = scmp.eq.s32.totalorder %s26, 0
      %p310 = por %p308, %p309
      %p311 = scmp.ne.s32.totalorder %s303, %s305
      %p312 = scmp.eq.s32.totalorder %s31, 1
      %p313 = por %p311, %p312
      %p314 = scmp.ne.s32.totalorder %s305, %s306
      %p315 = scmp.eq.s32.totalorder %s31, 0
      %p316 = por %p314, %p315
      %p317 = scmp.ne.s32.totalorder %s305, %s306
      %p318 = scmp.eq.s32.totalorder %s32, 1
      %p319 = por %p317, %p318
      %p321 = scmp.ne.s32.totalorder %s306, %s320
      %p322 = scmp.eq.s32.totalorder %s32, 0
      %p323 = por %p321, %p322
      %s325 = sadd.s32 %s324, 1
      %p328 = scmp.eq.s32.totalorder %s26, 1
      %p329 = scmp.ne.s32.totalorder %s324, %s326
      %p330 = scmp.eq.s32.totalorder %s26, 0
      %p331 = por %p329, %p330
      %p332 = scmp.ne.s32.totalorder %s324, %s326
      %p333 = scmp.eq.s32.totalorder %s31, 1
      %p334 = por %p332, %p333
      %p335 = scmp.ne.s32.totalorder %s326, %s327
      %p336 = scmp.eq.s32.totalorder %s31, 0
      %p337 = por %p335, %p336
      %p338 = scmp.ne.s32.totalorder %s326, %s327
      %p339 = scmp.eq.s32.totalorder %s32, 1
      %p340 = por %p338, %p339
      %p342 = scmp.ne.s32.totalorder %s327, %s341
      %p343 = scmp.eq.s32.totalorder %s32, 0
      %p344 = por %p342, %p343
      %s346 = sadd.s32 %s345, 1
      %p349 = scmp.eq.s32.totalorder %s26, 1
      %p350 = scmp.ne.s32.totalorder %s345, %s347
      %p351 = scmp.eq.s32.totalorder %s26, 0
      %p352 = por %p350, %p351
      %p353 = scmp.ne.s32.totalorder %s345, %s347
      %p354 = scmp.eq.s32.totalorder %s31, 1
      %p355 = por %p353, %p354
      %p356 = scmp.ne.s32.totalorder %s347, %s348
      %p357 = scmp.eq.s32.totalorder %s31, 0
      %p358 = por %p356, %p357
      %p359 = scmp.ne.s32.totalorder %s347, %s348
      %p360 = scmp.eq.s32.totalorder %s32, 1
      %p361 = por %p359, %p360
      %p363 = scmp.ne.s32.totalorder %s348, %s362
      %p364 = scmp.eq.s32.totalorder %s32, 0
      %p365 = por %p363, %p364
      %s367 = sadd.s32 %s366, 1
      %p370 = scmp.eq.s32.totalorder %s26, 1
      %p371 = scmp.ne.s32.totalorder %s366, %s368
      %p372 = scmp.eq.s32.totalorder %s26, 0
      %p373 = por %p371, %p372
      %p374 = scmp.ne.s32.totalorder %s366, %s368
      %p375 = scmp.eq.s32.totalorder %s31, 1
      %p376 = por %p374, %p375
      %p377 = scmp.ne.s32.totalorder %s368, %s369
      %p378 = scmp.eq.s32.totalorder %s31, 0
      %p379 = por %p377, %p378
      %p380 = scmp.ne.s32.totalorder %s368, %s369
      %p381 = scmp.eq.s32.totalorder %s32, 1
      %p382 = por %p380, %p381
      %p384 = scmp.ne.s32.totalorder %s369, %s383
      %p385 = scmp.eq.s32.totalorder %s32, 0
      %p386 = por %p384, %p385
      %s388 = sadd.s32 %s387, 1
      %p391 = scmp.eq.s32.totalorder %s26, 1
      %p392 = scmp.ne.s32.totalorder %s387, %s389
      %p393 = scmp.eq.s32.totalorder %s26, 0
      %p394 = por %p392, %p393
      %p395 = scmp.ne.s32.totalorder %s387, %s389
      %p396 = scmp.eq.s32.totalorder %s31, 1
      %p397 = por %p395, %p396
      %p398 = scmp.ne.s32.totalorder %s389, %s390
      %p399 = scmp.eq.s32.totalorder %s31, 0
      %p400 = por %p398, %p399
      %p401 = scmp.ne.s32.totalorder %s389, %s390
      %p402 = scmp.eq.s32.totalorder %s32, 1
      %p403 = por %p401, %p402
      %p405 = scmp.ne.s32.totalorder %s390, %s404
      %p406 = scmp.eq.s32.totalorder %s32, 0
      %p407 = por %p405, %p406
      %s408 = ssub.s32 %s33, %s45
      %s409 = ssub.s32 %s34, %s41
      %s410 = sor.u32 %s408, %s409
      %p411 = scmp.eq.s32.totalorder %s410, 0
      %s413 = sadd.s32 %s412, 1
      %s414 = scalar_select %p411, %s412, %s413
      %p417 = pneg %p411
      %p418 = scmp.eq.s32.totalorder %s26, 1
      %p419 = por %p417, %p418
      %p420 = scmp.ne.s32.totalorder %s412, %s415
      %p421 = scmp.eq.s32.totalorder %s26, 0
      %p422 = por %p420, %p421
      %p423 = scmp.ne.s32.totalorder %s412, %s415
      %p424 = scmp.eq.s32.totalorder %s31, 1
      %p425 = por %p423, %p424
      %p426 = scmp.ne.s32.totalorder %s415, %s416
      %p427 = scmp.eq.s32.totalorder %s31, 0
      %p428 = por %p426, %p427
      %p429 = scmp.ne.s32.totalorder %s415, %s416
      %p430 = scmp.eq.s32.totalorder %s32, 1
      %p431 = por %p429, %p430
      %p433 = scmp.ne.s32.totalorder %s416, %s432
      %p434 = scmp.eq.s32.totalorder %s32, 0
      %p435 = por %p433, %p434
      %p436 = scmp.le.s32.totalorder 1, %s26
      %p437 = scmp.lt.s32.totalorder %s26, 3
      %p438 = pnand %p436, %p437
      %p439 = pneg %p438
      // Predicated region
      $region9: #{tpu_custom_call.1} parent=5 // pred_check
        _
      $region10: #{tpu_custom_call.1} parent=5 // pred_check_branch
        %441 = sbr.rel (%p438) target = $region12
      $region11: #{tpu_custom_call.1} parent=5 // pred_region
        %s442 = ssub.s32 %s26, 1
        // Predicated region
        $region13: #{tpu_custom_call.1} parent=11 // pred_check
          %p443 = pneg %p85
        $region14: #{tpu_custom_call.1} parent=11 // pred_check_branch
          %445 = sbr.rel (%p443) target = $region16
        $region15: #{tpu_custom_call.1} parent=11 // pred_region
          _
        $region16: #{tpu_custom_call.1} parent=11 // pred_fallthru
          _
        // Predicated region
        $region17: #{tpu_custom_call.1} parent=11 // pred_check
          %p446 = pneg %p106
        $region18: #{tpu_custom_call.1} parent=11 // pred_check_branch
          %448 = sbr.rel (%p446) target = $region20
        $region19: #{tpu_custom_call.1} parent=11 // pred_region
          _
        $region20: #{tpu_custom_call.1} parent=11 // pred_fallthru
          _
        // Predicated region
        $region21: #{tpu_custom_call.1} parent=11 // pred_check
          %p449 = pneg %p127
        $region22: #{tpu_custom_call.1} parent=11 // pred_check_branch
          %451 = sbr.rel (%p449) target = $region24
        $region23: #{tpu_custom_call.1} parent=11 // pred_region
          _
        $region24: #{tpu_custom_call.1} parent=11 // pred_fallthru
          _
        // Predicated region
        $region25: #{tpu_custom_call.1} parent=11 // pred_check
          %p452 = pneg %p148
        $region26: #{tpu_custom_call.1} parent=11 // pred_check_branch
          %454 = sbr.rel (%p452) target = $region28
        $region27: #{tpu_custom_call.1} parent=11 // pred_region
          _
        $region28: #{tpu_custom_call.1} parent=11 // pred_fallthru
          _
        // Predicated region
        $region29: #{tpu_custom_call.1} parent=11 // pred_check
          %p455 = pneg %p169
        $region30: #{tpu_custom_call.1} parent=11 // pred_check_branch
          %457 = sbr.rel (%p455) target = $region32
        $region31: #{tpu_custom_call.1} parent=11 // pred_region
          _
        $region32: #{tpu_custom_call.1} parent=11 // pred_fallthru
          _
        // Predicated region
        $region33: #{tpu_custom_call.1} parent=11 // pred_check
          %p458 = pneg %p190
        $region34: #{tpu_custom_call.1} parent=11 // pred_check_branch
          %460 = sbr.rel (%p458) target = $region36
        $region35: #{tpu_custom_call.1} parent=11 // pred_region
          _
        $region36: #{tpu_custom_call.1} parent=11 // pred_fallthru
          _
        // Predicated region
        $region37: #{tpu_custom_call.1} parent=11 // pred_check
          %p461 = pneg %p211
        $region38: #{tpu_custom_call.1} parent=11 // pred_check_branch
          %463 = sbr.rel (%p461) target = $region40
        $region39: #{tpu_custom_call.1} parent=11 // pred_region
          _
        $region40: #{tpu_custom_call.1} parent=11 // pred_fallthru
          _
        // Predicated region
        $region41: #{tpu_custom_call.1} parent=11 // pred_check
          %p464 = pneg %p232
        $region42: #{tpu_custom_call.1} parent=11 // pred_check_branch
          %466 = sbr.rel (%p464) target = $region44
        $region43: #{tpu_custom_call.1} parent=11 // pred_region
          _
        $region44: #{tpu_custom_call.1} parent=11 // pred_fallthru
          _
        // Predicated region
        $region45: #{tpu_custom_call.1} parent=11 // pred_check
          %p467 = pneg %p253
        $region46: #{tpu_custom_call.1} parent=11 // pred_check_branch
          %469 = sbr.rel (%p467) target = $region48
        $region47: #{tpu_custom_call.1} parent=11 // pred_region
          _
        $region48: #{tpu_custom_call.1} parent=11 // pred_fallthru
          _
        // Predicated region
        $region49: #{tpu_custom_call.1} parent=11 // pred_check
          %p470 = pneg %p274
        $region50: #{tpu_custom_call.1} parent=11 // pred_check_branch
          %472 = sbr.rel (%p470) target = $region52
        $region51: #{tpu_custom_call.1} parent=11 // pred_region
          _
        $region52: #{tpu_custom_call.1} parent=11 // pred_fallthru
          _
        // Predicated region
        $region53: #{tpu_custom_call.1} parent=11 // pred_check
          %p473 = pneg %p295
        $region54: #{tpu_custom_call.1} parent=11 // pred_check_branch
          %475 = sbr.rel (%p473) target = $region56
        $region55: #{tpu_custom_call.1} parent=11 // pred_region
          _
        $region56: #{tpu_custom_call.1} parent=11 // pred_fallthru
          _
        // Predicated region
        $region57: #{tpu_custom_call.1} parent=11 // pred_check
          %p476 = pneg %p316
        $region58: #{tpu_custom_call.1} parent=11 // pred_check_branch
          %478 = sbr.rel (%p476) target = $region60
        $region59: #{tpu_custom_call.1} parent=11 // pred_region
          _
        $region60: #{tpu_custom_call.1} parent=11 // pred_fallthru
          _
        // Predicated region
        $region61: #{tpu_custom_call.1} parent=11 // pred_check
          %p479 = pneg %p337
        $region62: #{tpu_custom_call.1} parent=11 // pred_check_branch
          %481 = sbr.rel (%p479) target = $region64
        $region63: #{tpu_custom_call.1} parent=11 // pred_region
          _
        $region64: #{tpu_custom_call.1} parent=11 // pred_fallthru
          _
        // Predicated region
        $region65: #{tpu_custom_call.1} parent=11 // pred_check
          %p482 = pneg %p358
        $region66: #{tpu_custom_call.1} parent=11 // pred_check_branch
          %484 = sbr.rel (%p482) target = $region68
        $region67: #{tpu_custom_call.1} parent=11 // pred_region
          _
        $region68: #{tpu_custom_call.1} parent=11 // pred_fallthru
          _
        // Predicated region
        $region69: #{tpu_custom_call.1} parent=11 // pred_check
          %p485 = pneg %p379
        $region70: #{tpu_custom_call.1} parent=11 // pred_check_branch
          %487 = sbr.rel (%p485) target = $region72
        $region71: #{tpu_custom_call.1} parent=11 // pred_region
          _
        $region72: #{tpu_custom_call.1} parent=11 // pred_fallthru
          _
        // Predicated region
        $region73: #{tpu_custom_call.1} parent=11 // pred_check
          %p488 = pneg %p400
        $region74: #{tpu_custom_call.1} parent=11 // pred_check_branch
          %490 = sbr.rel (%p488) target = $region76
        $region75: #{tpu_custom_call.1} parent=11 // pred_region
          _
        $region76: #{tpu_custom_call.1} parent=11 // pred_fallthru
          _
      $region12: #{tpu_custom_call.1} parent=5 // pred_fallthru
        _
      %p491 = scmp.lt.s32.totalorder %s26, 2
      // Predicated region
      $region77: #{tpu_custom_call.1} parent=5 // pred_check
        %p492 = pneg %p491
      $region78: #{tpu_custom_call.1} parent=5 // pred_check_branch
        %494 = sbr.rel (%p492) target = $region80
      $region79: #{tpu_custom_call.1} parent=5 // pred_region
        // Predicated region
        $region81: #{tpu_custom_call.1} parent=79 // pred_check
          %p495 = pneg %p58
        $region82: #{tpu_custom_call.1} parent=79 // pred_check_branch
          %497 = sbr.rel (%p495) target = $region84
        $region83: #{tpu_custom_call.1} parent=79 // pred_region
          %p498 = scmp.lt.s32.totalorder %s33, 1
          %s499 = scalar_select %p498, %s33, 1
          %s500 = smul.addr %s499, 8
          %s501 = scalar_lea.vmem %s0, %s500
        $region84: #{tpu_custom_call.1} parent=79 // pred_fallthru
          _
      $region80: #{tpu_custom_call.1} parent=5 // pred_fallthru
        _
      %p502 = scmp.le.s32.totalorder 1, %s26
      %p503 = scmp.lt.s32.totalorder %s26, 3
      %p504 = pnand %p502, %p503
      %p505 = pneg %p504
      // Predicated region
      $region85: #{tpu_custom_call.1} parent=5 // pred_check
        _
      $region86: #{tpu_custom_call.1} parent=5 // pred_check_branch
        %507 = sbr.rel (%p504) target = $region88
      $region87: #{tpu_custom_call.1} parent=5 // pred_region
        %s508 = ssub.s32 %s26, 1
        %p509 = scmp.lt.s32.totalorder %s35, 1
        %s510 = scalar_select %p509, %s35, 1
        %s511 = smul.addr %s510, 8
        %s512 = scalar_lea.vmem %s0, %s511
        %p513 = pneg %p64
        %p514 = pneg %p61
        %p515 = pneg %p85
        %p516 = pneg %p82
        %p517 = pneg %p106
        %p518 = pneg %p103
        %p519 = pneg %p127
        %p520 = pneg %p124
        %p521 = pneg %p148
        %p522 = pneg %p145
        %p523 = pneg %p169
        %p524 = pneg %p166
        %p525 = pneg %p190
        %p526 = pneg %p187
        %p527 = pneg %p211
        %p528 = pneg %p208
        %p529 = pneg %p232
        %p530 = pneg %p229
        %p531 = pneg %p253
        %p532 = pneg %p250
        %p533 = pneg %p274
        %p534 = pneg %p271
        %p535 = pneg %p295
        %p536 = pneg %p292
        %p537 = pneg %p316
        %p538 = pneg %p313
        %p539 = pneg %p337
        %p540 = pneg %p334
        %p541 = pneg %p358
        %p542 = pneg %p355
        %p543 = pneg %p379
        %p544 = pneg %p376
        %p545 = pneg %p400
        %p546 = pneg %p397
        %p547 = pneg %p428
        %p548 = pneg %p425
        %s549 = sand.u32 %s415, 1
        %s550 = scalar_lea.sflag [#allocation5], %s549
        %s551 = sand.u32 %s415, 1
        %s552 = smul.addr %s551, 8
        %s553 = scalar_lea.vmem [#allocation4], %s552
        %p554 = scmp.lt.s32.totalorder %s35, 1
        %s555 = scalar_select %p554, %s35, 1
        %s556 = smul.addr %s555, 8
        %s557 = scalar_lea.vmem %s0, %s556
        %p559 = scmp.eq.s32.totalorder %s36, 0
        // Predicated region
        $region89: #{tpu_custom_call.1} parent=87 // pred_check
          %p560 = pneg %p559
        $region90: #{tpu_custom_call.1} parent=87 // pred_check_branch
          %562 = sbr.rel (%p560) target = $region92
        $region91: #{tpu_custom_call.1} parent=87 // pred_region
          %v563 = vld [vmem:[%s557] sm:$0xff]
          %v564 = vld [vmem:[%s1] sm:$0x1]
          %v565 = vld [vmem:[%s2] sm:$0x1]
          %vm566 = vcmask 261120
          %v567 = vsel %vm566, %v563, 0.0
          %568 = vadd.xlane.f32.xlu0 %v567
          %v569 = vpop.xlane.xlu0 %568
          %v570 = vrcp.pop 32.0
          %v571 = vmul.f32 %v569, %v570
          %v572 = vsub.f32 %v563, %v571
          %v573 = vmul.f32 %v572, %v572
          %v574 = vsel %vm566, %v573, 0.0
          %575 = vadd.xlane.f32.xlu0 %v574
          %v576 = vpop.xlane.xlu0 %575
          %v577 = vmul.f32 %v576, %v570
          %v578 = vadd.f32 %v577, 1e-05
          %v579 = vrsqrt.pop %v578
          %v580 = vmul.f32 %v572, %v579
          %v582 = vlaneseq
          %v583 = vshrl.u32 %v582, 7
          %v584 = vsub.s32 0, %v583
          %v585 = vrot.slane %v564, %v584
          %v587 = vmul.f32 %v580, %v585
          %v589 = vlaneseq
          %v590 = vshrl.u32 %v589, 7
          %v591 = vsub.s32 0, %v590
          %v592 = vrot.slane %v565, %v591
          %v594 = vadd.f32 %v587, %v592
          %v595 = vpack.c.bf16 %v594, %v594
          %v596 = vld [vmem:[%s5] sm:$0xf]
          %v597 = vld [vmem:[%s5 + $0x4] sm:$0xf]
          %v598 = vld [vmem:[%s5 + $0x8] sm:$0xf]
          %v599 = vld [vmem:[%s5 + $0xc] sm:$0xf]
          %v600 = vld [vmem:[%s6] sm:$0x1]
          %v602 = vlaneseq
          %v603 = vshrl.u32 %v602, 7
          %v604 = vsub.s32 0, %v603
          %v605 = vrot.slane %v600, %v604
          %v611 = vunpack.c.l.b16 %v596
          %v612 = vunpack.c.l.b16 %v597
          %v613 = vunpack.c.l.b16 %v598
          %v614 = vunpack.c.l.b16 %v599
          %v615 = vpack.c.b16 %v612, %v611
          %v616 = vpack.c.b16 %v614, %v613
          %v620 = vsel %vm566, %v595, 0
          %622 = vmatprep.subr.bf16.mxu0 0
          %623 = vmatpush1.bf16.msra.mxu0 0
          %624 = vmatprep.subr.bf16.mxu0 0
          %625 = vmatpush1.bf16.msra.mxu0 0
          %626 = vmatprep.subr.bf16.mxu0 0
          %627 = vmatpush1.bf16.msra.mxu0 0
          %628 = vmatprep.subr.bf16.mxu0 0
          %629 = vmatpush1.bf16.msra.mxu0 0
          %630 = vmatprep.subr.bf16.mxu0 0
          %631 = vmatpush1.bf16.msra.mxu0 0
          %632 = vmatprep.subr.bf16.mxu0 0
          %633 = vmatpush1.bf16.msra.mxu0 0
          %634 = vmatprep.subr.bf16.mxu0 0
          %635 = vmatpush1.bf16.msra.mxu0 %v616
          %636 = vmatprep.subr.bf16.mxu0 0
          %637 = vmatpush1.bf16.msra.mxu0 %v615
          %638 = vmatprep.subr.bf16.mxu0 0
          %639 = vmatpush2.bf16.msra.mxu0 0
          %640 = vmatprep.subr.bf16.mxu0 0
          %641 = vmatpush2.bf16.msra.mxu0 0
          %642 = vmatprep.subr.bf16.mxu0 0
          %643 = vmatpush2.bf16.msra.mxu0 0
          %644 = vmatprep.subr.bf16.mxu0 0
          %645 = vmatpush2.bf16.msra.mxu0 0
          %646 = vmatprep.subr.bf16.mxu0 0
          %647 = vmatpush2.bf16.msra.mxu0 0
          %648 = vmatprep.subr.bf16.mxu0 0
          %649 = vmatpush2.bf16.msra.mxu0 0
          %650 = vmatprep.subr.bf16.mxu0 0
          %651 = vmatpush2.bf16.msra.mxu0 0
          %652 = vmatprep.subr.bf16.mxu0 0
          %653 = vmatpush2.bf16.msra.mxu0 0
          %654 = vmatprep.mubr.bf16.mxu0 0
          %655 = vmatmul.mubr.bf16.gmra.mxu0 %v620
          %v656 = vpop.f32.mrf.mxu0
          %v657 = vadd.f32 %v605, %v656
          %v658 = vpop.f32.mrf.mxu0
          %v659 = vpop.f32.mrf.mxu0
          %v660 = vpop.f32.mrf.mxu0
          %661 = vdwg.mxu0
          %v662 = vpack.c.bf16 %v657, %v657
          %vm663 = vcmask 60416
          %664 = vst.msk [vmem:[#allocation2] sm:$0xf] %vm663, %v662
          %v665 = vld [vmem:[%s7] sm:$0xf]
          %v666 = vld [vmem:[%s7 + $0x4] sm:$0xf]
          %v667 = vld [vmem:[%s7 + $0x8] sm:$0xf]
          %v668 = vld [vmem:[%s7 + $0xc] sm:$0xf]
          %v669 = vld [vmem:[%s8] sm:$0x1]
          %v671 = vlaneseq
          %v672 = vshrl.u32 %v671, 7
          %v673 = vsub.s32 0, %v672
          %v674 = vrot.slane %v669, %v673
          %v680 = vunpack.c.l.b16 %v665
          %v681 = vunpack.c.l.b16 %v666
          %v682 = vunpack.c.l.b16 %v667
          %v683 = vunpack.c.l.b16 %v668
          %v684 = vpack.c.b16 %v681, %v680
          %v685 = vpack.c.b16 %v683, %v682
          %688 = vmatprep.subr.bf16.mxu0 0
          %689 = vmatpush1.bf16.msra.mxu0 0
          %690 = vmatprep.subr.bf16.mxu0 0
          %691 = vmatpush1.bf16.msra.mxu0 0
          %692 = vmatprep.subr.bf16.mxu0 0
          %693 = vmatpush1.bf16.msra.mxu0 0
          %694 = vmatprep.subr.bf16.mxu0 0
          %695 = vmatpush1.bf16.msra.mxu0 0
          %696 = vmatprep.subr.bf16.mxu0 0
          %697 = vmatpush1.bf16.msra.mxu0 0
          %698 = vmatprep.subr.bf16.mxu0 0
          %699 = vmatpush1.bf16.msra.mxu0 0
          %700 = vmatprep.subr.bf16.mxu0 0
          %701 = vmatpush1.bf16.msra.mxu0 %v685
          %702 = vmatprep.subr.bf16.mxu0 0
          %703 = vmatpush1.bf16.msra.mxu0 %v684
          %704 = vmatprep.subr.bf16.mxu0 0
          %705 = vmatpush2.bf16.msra.mxu0 0
          %706 = vmatprep.subr.bf16.mxu0 0
          %707 = vmatpush2.bf16.msra.mxu0 0
          %708 = vmatprep.subr.bf16.mxu0 0
          %709 = vmatpush2.bf16.msra.mxu0 0
          %710 = vmatprep.subr.bf16.mxu0 0
          %711 = vmatpush2.bf16.msra.mxu0 0
          %712 = vmatprep.subr.bf16.mxu0 0
          %713 = vmatpush2.bf16.msra.mxu0 0
          %714 = vmatprep.subr.bf16.mxu0 0
          %715 = vmatpush2.bf16.msra.mxu0 0
          %716 = vmatprep.subr.bf16.mxu0 0
          %717 = vmatpush2.bf16.msra.mxu0 0
          %718 = vmatprep.subr.bf16.mxu0 0
          %719 = vmatpush2.bf16.msra.mxu0 0
          %720 = vmatprep.mubr.bf16.mxu0 0
          %721 = vmatmul.mubr.bf16.gmra.mxu0 %v620
          %v722 = vpop.f32.mrf.mxu0
          %v723 = vadd.f32 %v674, %v722
          %v724 = vpop.f32.mrf.mxu0
          %v725 = vpop.f32.mrf.mxu0
          %v726 = vpop.f32.mrf.mxu0
          %727 = vdwg.mxu0
          %v728 = vpack.c.bf16 %v723, %v723
          %729 = vst.msk [vmem:[#allocation3] sm:$0xf] %vm663, %v728
          %s730 = scalar_lea.vmem %s5, 16
          %v731 = vld [vmem:[%s730] sm:$0xf]
          %v732 = vld [vmem:[%s730 + $0x4] sm:$0xf]
          %v733 = vld [vmem:[%s730 + $0x8] sm:$0xf]
          %v734 = vld [vmem:[%s730 + $0xc] sm:$0xf]
          %s735 = scalar_lea.vmem %s6, 1
          %v736 = vld [vmem:[%s735] sm:$0x1]
          %v738 = vlaneseq
          %v739 = vshrl.u32 %v738, 7
          %v740 = vsub.s32 0, %v739
          %v741 = vrot.slane %v736, %v740
          %v747 = vunpack.c.l.b16 %v731
          %v748 = vunpack.c.l.b16 %v732
          %v749 = vunpack.c.l.b16 %v733
          %v750 = vunpack.c.l.b16 %v734
          %v751 = vpack.c.b16 %v748, %v747
          %v752 = vpack.c.b16 %v750, %v749
          %755 = vmatprep.subr.bf16.mxu0 0
          %756 = vmatpush1.bf16.msra.mxu0 0
          %757 = vmatprep.subr.bf16.mxu0 0
          %758 = vmatpush1.bf16.msra.mxu0 0
          %759 = vmatprep.subr.bf16.mxu0 0
          %760 = vmatpush1.bf16.msra.mxu0 0
          %761 = vmatprep.subr.bf16.mxu0 0
          %762 = vmatpush1.bf16.msra.mxu0 0
          %763 = vmatprep.subr.bf16.mxu0 0
          %764 = vmatpush1.bf16.msra.mxu0 0
          %765 = vmatprep.subr.bf16.mxu0 0
          %766 = vmatpush1.bf16.msra.mxu0 0
          %767 = vmatprep.subr.bf16.mxu0 0
          %768 = vmatpush1.bf16.msra.mxu0 %v752
          %769 = vmatprep.subr.bf16.mxu0 0
          %770 = vmatpush1.bf16.msra.mxu0 %v751
          %771 = vmatprep.subr.bf16.mxu0 0
          %772 = vmatpush2.bf16.msra.mxu0 0
          %773 = vmatprep.subr.bf16.mxu0 0
          %774 = vmatpush2.bf16.msra.mxu0 0
          %775 = vmatprep.subr.bf16.mxu0 0
          %776 = vmatpush2.bf16.msra.mxu0 0
          %777 = vmatprep.subr.bf16.mxu0 0
          %778 = vmatpush2.bf16.msra.mxu0 0
          %779 = vmatprep.subr.bf16.mxu0 0
          %780 = vmatpush2.bf16.msra.mxu0 0
          %781 = vmatprep.subr.bf16.mxu0 0
          %782 = vmatpush2.bf16.msra.mxu0 0
          %783 = vmatprep.subr.bf16.mxu0 0
          %784 = vmatpush2.bf16.msra.mxu0 0
          %785 = vmatprep.subr.bf16.mxu0 0
          %786 = vmatpush2.bf16.msra.mxu0 0
          %787 = vmatprep.mubr.bf16.mxu0 0
          %788 = vmatmul.mubr.bf16.gmra.mxu0 %v620
          %v789 = vpop.f32.mrf.mxu0
          %v790 = vadd.f32 %v741, %v789
          %v791 = vpop.f32.mrf.mxu0
          %v792 = vpop.f32.mrf.mxu0
          %v793 = vpop.f32.mrf.mxu0
          %794 = vdwg.mxu0
          %v795 = vpack.c.bf16 %v790, %v790
          %s796 = scalar_lea.vmem [#allocation2], 4
          %797 = vst.msk [vmem:[%s796] sm:$0xf] %vm663, %v795
          %s798 = scalar_lea.vmem %s7, 16
          %v799 = vld [vmem:[%s798] sm:$0xf]
          %v800 = vld [vmem:[%s798 + $0x4] sm:$0xf]
          %v801 = vld [vmem:[%s798 + $0x8] sm:$0xf]
          %v802 = vld [vmem:[%s798 + $0xc] sm:$0xf]
          %s803 = scalar_lea.vmem %s8, 1
          %v804 = vld [vmem:[%s803] sm:$0x1]
          %v806 = vlaneseq
          %v807 = vshrl.u32 %v806, 7
          %v808 = vsub.s32 0, %v807
          %v809 = vrot.slane %v804, %v808
          %v815 = vunpack.c.l.b16 %v799
          %v816 = vunpack.c.l.b16 %v800
          %v817 = vunpack.c.l.b16 %v801
          %v818 = vunpack.c.l.b16 %v802
          %v819 = vpack.c.b16 %v816, %v815
          %v820 = vpack.c.b16 %v818, %v817
          %823 = vmatprep.subr.bf16.mxu0 0
          %824 = vmatpush1.bf16.msra.mxu0 0
          %825 = vmatprep.subr.bf16.mxu0 0
          %826 = vmatpush1.bf16.msra.mxu0 0
          %827 = vmatprep.subr.bf16.mxu0 0
          %828 = vmatpush1.bf16.msra.mxu0 0
          %829 = vmatprep.subr.bf16.mxu0 0
          %830 = vmatpush1.bf16.msra.mxu0 0
          %831 = vmatprep.subr.bf16.mxu0 0
          %832 = vmatpush1.bf16.msra.mxu0 0
          %833 = vmatprep.subr.bf16.mxu0 0
          %834 = vmatpush1.bf16.msra.mxu0 0
          %835 = vmatprep.subr.bf16.mxu0 0
          %836 = vmatpush1.bf16.msra.mxu0 %v820
          %837 = vmatprep.subr.bf16.mxu0 0
          %838 = vmatpush1.bf16.msra.mxu0 %v819
          %839 = vmatprep.subr.bf16.mxu0 0
          %840 = vmatpush2.bf16.msra.mxu0 0
          %841 = vmatprep.subr.bf16.mxu0 0
          %842 = vmatpush2.bf16.msra.mxu0 0
          %843 = vmatprep.subr.bf16.mxu0 0
          %844 = vmatpush2.bf16.msra.mxu0 0
          %845 = vmatprep.subr.bf16.mxu0 0
          %846 = vmatpush2.bf16.msra.mxu0 0
          %847 = vmatprep.subr.bf16.mxu0 0
          %848 = vmatpush2.bf16.msra.mxu0 0
          %849 = vmatprep.subr.bf16.mxu0 0
          %850 = vmatpush2.bf16.msra.mxu0 0
          %851 = vmatprep.subr.bf16.mxu0 0
          %852 = vmatpush2.bf16.msra.mxu0 0
          %853 = vmatprep.subr.bf16.mxu0 0
          %854 = vmatpush2.bf16.msra.mxu0 0
          %855 = vmatprep.mubr.bf16.mxu0 0
          %856 = vmatmul.mubr.bf16.gmra.mxu0 %v620
          %v857 = vpop.f32.mrf.mxu0
          %v858 = vadd.f32 %v809, %v857
          %v859 = vpop.f32.mrf.mxu0
          %v860 = vpop.f32.mrf.mxu0
          %v861 = vpop.f32.mrf.mxu0
          %862 = vdwg.mxu0
          %v863 = vpack.c.bf16 %v858, %v858
          %s864 = scalar_lea.vmem [#allocation3], 4
          %865 = vst.msk [vmem:[%s864] sm:$0xf] %vm663, %v863
          %s866 = scalar_lea.vmem %s5, 32
          %v867 = vld [vmem:[%s866] sm:$0xf]
          %v868 = vld [vmem:[%s866 + $0x4] sm:$0xf]
          %v869 = vld [vmem:[%s866 + $0x8] sm:$0xf]
          %v870 = vld [vmem:[%s866 + $0xc] sm:$0xf]
          %s871 = scalar_lea.vmem %s6, 2
          %v872 = vld [vmem:[%s871] sm:$0x1]
          %v874 = vlaneseq
          %v875 = vshrl.u32 %v874, 7
          %v876 = vsub.s32 0, %v875
          %v877 = vrot.slane %v872, %v876
          %v883 = vunpack.c.l.b16 %v867
          %v884 = vunpack.c.l.b16 %v868
          %v885 = vunpack.c.l.b16 %v869
          %v886 = vunpack.c.l.b16 %v870
          %v887 = vpack.c.b16 %v884, %v883
          %v888 = vpack.c.b16 %v886, %v885
          %891 = vmatprep.subr.bf16.mxu0 0
          %892 = vmatpush1.bf16.msra.mxu0 0
          %893 = vmatprep.subr.bf16.mxu0 0
          %894 = vmatpush1.bf16.msra.mxu0 0
          %895 = vmatprep.subr.bf16.mxu0 0
          %896 = vmatpush1.bf16.msra.mxu0 0
          %897 = vmatprep.subr.bf16.mxu0 0
          %898 = vmatpush1.bf16.msra.mxu0 0
          %899 = vmatprep.subr.bf16.mxu0 0
          %900 = vmatpush1.bf16.msra.mxu0 0
          %901 = vmatprep.subr.bf16.mxu0 0
          %902 = vmatpush1.bf16.msra.mxu0 0
          %903 = vmatprep.subr.bf16.mxu0 0
          %904 = vmatpush1.bf16.msra.mxu0 %v888
          %905 = vmatprep.subr.bf16.mxu0 0
          %906 = vmatpush1.bf16.msra.mxu0 %v887
          %907 = vmatprep.subr.bf16.mxu0 0
          %908 = vmatpush2.bf16.msra.mxu0 0
          %909 = vmatprep.subr.bf16.mxu0 0
          %910 = vmatpush2.bf16.msra.mxu0 0
          %911 = vmatprep.subr.bf16.mxu0 0
          %912 = vmatpush2.bf16.msra.mxu0 0
          %913 = vmatprep.subr.bf16.mxu0 0
          %914 = vmatpush2.bf16.msra.mxu0 0
          %915 = vmatprep.subr.bf16.mxu0 0
          %916 = vmatpush2.bf16.msra.mxu0 0
          %917 = vmatprep.subr.bf16.mxu0 0
          %918 = vmatpush2.bf16.msra.mxu0 0
          %919 = vmatprep.subr.bf16.mxu0 0
          %920 = vmatpush2.bf16.msra.mxu0 0
          %921 = vmatprep.subr.bf16.mxu0 0
          %922 = vmatpush2.bf16.msra.mxu0 0
          %923 = vmatprep.mubr.bf16.mxu0 0
          %924 = vmatmul.mubr.bf16.gmra.mxu0 %v620
          %v925 = vpop.f32.mrf.mxu0
          %v926 = vadd.f32 %v877, %v925
          %v927 = vpop.f32.mrf.mxu0
          %v928 = vpop.f32.mrf.mxu0
          %v929 = vpop.f32.mrf.mxu0
          %930 = vdwg.mxu0
          %v931 = vpack.c.bf16 %v926, %v926
          %s932 = scalar_lea.vmem [#allocation2], 8
          %933 = vst.msk [vmem:[%s932] sm:$0xf] %vm663, %v931
          %s934 = scalar_lea.vmem %s7, 32
          %v935 = vld [vmem:[%s934] sm:$0xf]
          %v936 = vld [vmem:[%s934 + $0x4] sm:$0xf]
          %v937 = vld [vmem:[%s934 + $0x8] sm:$0xf]
          %v938 = vld [vmem:[%s934 + $0xc] sm:$0xf]
          %s939 = scalar_lea.vmem %s8, 2
          %v940 = vld [vmem:[%s939] sm:$0x1]
          %v942 = vlaneseq
          %v943 = vshrl.u32 %v942, 7
          %v944 = vsub.s32 0, %v943
          %v945 = vrot.slane %v940, %v944
          %v951 = vunpack.c.l.b16 %v935
          %v952 = vunpack.c.l.b16 %v936
          %v953 = vunpack.c.l.b16 %v937
          %v954 = vunpack.c.l.b16 %v938
          %v955 = vpack.c.b16 %v952, %v951
          %v956 = vpack.c.b16 %v954, %v953
          %959 = vmatprep.subr.bf16.mxu0 0
          %960 = vmatpush1.bf16.msra.mxu0 0
          %961 = vmatprep.subr.bf16.mxu0 0
          %962 = vmatpush1.bf16.msra.mxu0 0
          %963 = vmatprep.subr.bf16.mxu0 0
          %964 = vmatpush1.bf16.msra.mxu0 0
          %965 = vmatprep.subr.bf16.mxu0 0
          %966 = vmatpush1.bf16.msra.mxu0 0
          %967 = vmatprep.subr.bf16.mxu0 0
          %968 = vmatpush1.bf16.msra.mxu0 0
          %969 = vmatprep.subr.bf16.mxu0 0
          %970 = vmatpush1.bf16.msra.mxu0 0
          %971 = vmatprep.subr.bf16.mxu0 0
          %972 = vmatpush1.bf16.msra.mxu0 %v956
          %973 = vmatprep.subr.bf16.mxu0 0
          %974 = vmatpush1.bf16.msra.mxu0 %v955
          %975 = vmatprep.subr.bf16.mxu0 0
          %976 = vmatpush2.bf16.msra.mxu0 0
          %977 = vmatprep.subr.bf16.mxu0 0
          %978 = vmatpush2.bf16.msra.mxu0 0
          %979 = vmatprep.subr.bf16.mxu0 0
          %980 = vmatpush2.bf16.msra.mxu0 0
          %981 = vmatprep.subr.bf16.mxu0 0
          %982 = vmatpush2.bf16.msra.mxu0 0
          %983 = vmatprep.subr.bf16.mxu0 0
          %984 = vmatpush2.bf16.msra.mxu0 0
          %985 = vmatprep.subr.bf16.mxu0 0
          %986 = vmatpush2.bf16.msra.mxu0 0
          %987 = vmatprep.subr.bf16.mxu0 0
          %988 = vmatpush2.bf16.msra.mxu0 0
          %989 = vmatprep.subr.bf16.mxu0 0
          %990 = vmatpush2.bf16.msra.mxu0 0
          %991 = vmatprep.mubr.bf16.mxu0 0
          %992 = vmatmul.mubr.bf16.gmra.mxu0 %v620
          %v993 = vpop.f32.mrf.mxu0
          %v994 = vadd.f32 %v945, %v993
          %v995 = vpop.f32.mrf.mxu0
          %v996 = vpop.f32.mrf.mxu0
          %v997 = vpop.f32.mrf.mxu0
          %998 = vdwg.mxu0
          %v999 = vpack.c.bf16 %v994, %v994
          %s1000 = scalar_lea.vmem [#allocation3], 8
          %1001 = vst.msk [vmem:[%s1000] sm:$0xf] %vm663, %v999
          %s1002 = scalar_lea.vmem %s5, 48
          %v1003 = vld [vmem:[%s1002] sm:$0xf]
          %v1004 = vld [vmem:[%s1002 + $0x4] sm:$0xf]
          %v1005 = vld [vmem:[%s1002 + $0x8] sm:$0xf]
          %v1006 = vld [vmem:[%s1002 + $0xc] sm:$0xf]
          %s1007 = scalar_lea.vmem %s6, 3
          %v1008 = vld [vmem:[%s1007] sm:$0x1]
          %v1010 = vlaneseq
          %v1011 = vshrl.u32 %v1010, 7
          %v1012 = vsub.s32 0, %v1011
          %v1013 = vrot.slane %v1008, %v1012
          %v1019 = vunpack.c.l.b16 %v1003
          %v1020 = vunpack.c.l.b16 %v1004
          %v1021 = vunpack.c.l.b16 %v1005
          %v1022 = vunpack.c.l.b16 %v1006
          %v1023 = vpack.c.b16 %v1020, %v1019
          %v1024 = vpack.c.b16 %v1022, %v1021
          %1027 = vmatprep.subr.bf16.mxu0 0
          %1028 = vmatpush1.bf16.msra.mxu0 0
          %1029 = vmatprep.subr.bf16.mxu0 0
          %1030 = vmatpush1.bf16.msra.mxu0 0
          %1031 = vmatprep.subr.bf16.mxu0 0
          %1032 = vmatpush1.bf16.msra.mxu0 0
          %1033 = vmatprep.subr.bf16.mxu0 0
          %1034 = vmatpush1.bf16.msra.mxu0 0
          %1035 = vmatprep.subr.bf16.mxu0 0
          %1036 = vmatpush1.bf16.msra.mxu0 0
          %1037 = vmatprep.subr.bf16.mxu0 0
          %1038 = vmatpush1.bf16.msra.mxu0 0
          %1039 = vmatprep.subr.bf16.mxu0 0
          %1040 = vmatpush1.bf16.msra.mxu0 %v1024
          %1041 = vmatprep.subr.bf16.mxu0 0
          %1042 = vmatpush1.bf16.msra.mxu0 %v1023
          %1043 = vmatprep.subr.bf16.mxu0 0
          %1044 = vmatpush2.bf16.msra.mxu0 0
          %1045 = vmatprep.subr.bf16.mxu0 0
          %1046 = vmatpush2.bf16.msra.mxu0 0
          %1047 = vmatprep.subr.bf16.mxu0 0
          %1048 = vmatpush2.bf16.msra.mxu0 0
          %1049 = vmatprep.subr.bf16.mxu0 0
          %1050 = vmatpush2.bf16.msra.mxu0 0
          %1051 = vmatprep.subr.bf16.mxu0 0
          %1052 = vmatpush2.bf16.msra.mxu0 0
          %1053 = vmatprep.subr.bf16.mxu0 0
          %1054 = vmatpush2.bf16.msra.mxu0 0
          %1055 = vmatprep.subr.bf16.mxu0 0
          %1056 = vmatpush2.bf16.msra.mxu0 0
          %1057 = vmatprep.subr.bf16.mxu0 0
          %1058 = vmatpush2.bf16.msra.mxu0 0
          %1059 = vmatprep.mubr.bf16.mxu0 0
          %1060 = vmatmul.mubr.bf16.gmra.mxu0 %v620
          %v1061 = vpop.f32.mrf.mxu0
          %v1062 = vadd.f32 %v1013, %v1061
          %v1063 = vpop.f32.mrf.mxu0
          %v1064 = vpop.f32.mrf.mxu0
          %v1065 = vpop.f32.mrf.mxu0
          %1066 = vdwg.mxu0
          %v1067 = vpack.c.bf16 %v1062, %v1062
          %s1068 = scalar_lea.vmem [#allocation2], 12
          %1069 = vst.msk [vmem:[%s1068] sm:$0xf] %vm663, %v1067
          %s1070 = scalar_lea.vmem %s7, 48
          %v1071 = vld [vmem:[%s1070] sm:$0xf]
          %v1072 = vld [vmem:[%s1070 + $0x4] sm:$0xf]
          %v1073 = vld [vmem:[%s1070 + $0x8] sm:$0xf]
          %v1074 = vld [vmem:[%s1070 + $0xc] sm:$0xf]
          %s1075 = scalar_lea.vmem %s8, 3
          %v1076 = vld [vmem:[%s1075] sm:$0x1]
          %v1078 = vlaneseq
          %v1079 = vshrl.u32 %v1078, 7
          %v1080 = vsub.s32 0, %v1079
          %v1081 = vrot.slane %v1076, %v1080
          %v1087 = vunpack.c.l.b16 %v1071
          %v1088 = vunpack.c.l.b16 %v1072
          %v1089 = vunpack.c.l.b16 %v1073
          %v1090 = vunpack.c.l.b16 %v1074
          %v1091 = vpack.c.b16 %v1088, %v1087
          %v1092 = vpack.c.b16 %v1090, %v1089
          %1095 = vmatprep.subr.bf16.mxu0 0
          %1096 = vmatpush1.bf16.msra.mxu0 0
          %1097 = vmatprep.subr.bf16.mxu0 0
          %1098 = vmatpush1.bf16.msra.mxu0 0
          %1099 = vmatprep.subr.bf16.mxu0 0
          %1100 = vmatpush1.bf16.msra.mxu0 0
          %1101 = vmatprep.subr.bf16.mxu0 0
          %1102 = vmatpush1.bf16.msra.mxu0 0
          %1103 = vmatprep.subr.bf16.mxu0 0
          %1104 = vmatpush1.bf16.msra.mxu0 0
          %1105 = vmatprep.subr.bf16.mxu0 0
          %1106 = vmatpush1.bf16.msra.mxu0 0
          %1107 = vmatprep.subr.bf16.mxu0 0
          %1108 = vmatpush1.bf16.msra.mxu0 %v1092
          %1109 = vmatprep.subr.bf16.mxu0 0
          %1110 = vmatpush1.bf16.msra.mxu0 %v1091
          %1111 = vmatprep.subr.bf16.mxu0 0
          %1112 = vmatpush2.bf16.msra.mxu0 0
          %1113 = vmatprep.subr.bf16.mxu0 0
          %1114 = vmatpush2.bf16.msra.mxu0 0
          %1115 = vmatprep.subr.bf16.mxu0 0
          %1116 = vmatpush2.bf16.msra.mxu0 0
          %1117 = vmatprep.subr.bf16.mxu0 0
          %1118 = vmatpush2.bf16.msra.mxu0 0
          %1119 = vmatprep.subr.bf16.mxu0 0
          %1120 = vmatpush2.bf16.msra.mxu0 0
          %1121 = vmatprep.subr.bf16.mxu0 0
          %1122 = vmatpush2.bf16.msra.mxu0 0
          %1123 = vmatprep.subr.bf16.mxu0 0
          %1124 = vmatpush2.bf16.msra.mxu0 0
          %1125 = vmatprep.subr.bf16.mxu0 0
          %1126 = vmatpush2.bf16.msra.mxu0 0
          %1127 = vmatprep.mubr.bf16.mxu0 0
          %1128 = vmatmul.mubr.bf16.gmra.mxu0 %v620
          %v1129 = vpop.f32.mrf.mxu0
          %v1130 = vadd.f32 %v1081, %v1129
          %v1131 = vpop.f32.mrf.mxu0
          %v1132 = vpop.f32.mrf.mxu0
          %v1133 = vpop.f32.mrf.mxu0
          %1134 = vdwg.mxu0
          %v1135 = vpack.c.bf16 %v1130, %v1130
          %s1136 = scalar_lea.vmem [#allocation3], 12
          %1137 = vst.msk [vmem:[%s1136] sm:$0xf] %vm663, %v1135
        $region92: #{tpu_custom_call.1} parent=87 // pred_fallthru
          _
        %s1138 = smul.u32 %s36, 8
        %s1139 = scalar_lea.vmem %s557, %s1138
        %v1140 = vld [vmem:[%s1139] sm:$0xff]
        %v1141 = vld [vmem:[%s1] sm:$0x1]
        %v1142 = vld [vmem:[%s2] sm:$0x1]
        %vm1143 = vcmask 261120
        %v1144 = vsel %vm1143, %v1140, 0.0
        %1145 = vadd.xlane.f32.xlu0 %v1144
        %v1146 = vpop.xlane.xlu0 %1145
        %v1147 = vrcp.pop 32.0
        %v1148 = vmul.f32 %v1146, %v1147
        %v1149 = vsub.f32 %v1140, %v1148
        %v1150 = vmul.f32 %v1149, %v1149
        %v1151 = vsel %vm1143, %v1150, 0.0
        %1152 = vadd.xlane.f32.xlu0 %v1151
        %v1153 = vpop.xlane.xlu0 %1152
        %v1154 = vmul.f32 %v1153, %v1147
        %v1155 = vadd.f32 %v1154, 1e-05
        %v1156 = vrsqrt.pop %v1155
        %v1157 = vmul.f32 %v1149, %v1156
        %v1159 = vlaneseq
        %v1160 = vshrl.u32 %v1159, 7
        %v1161 = vsub.s32 0, %v1160
        %v1162 = vrot.slane %v1141, %v1161
        %v1164 = vmul.f32 %v1157, %v1162
        %v1166 = vlaneseq
        %v1167 = vshrl.u32 %v1166, 7
        %v1168 = vsub.s32 0, %v1167
        %v1169 = vrot.slane %v1142, %v1168
        %v1171 = vadd.f32 %v1164, %v1169
        %v1172 = vpack.c.bf16 %v1171, %v1171
        %v1173 = vld [vmem:[%s3] sm:$0xf]
        %v1174 = vld [vmem:[%s3 + $0x4] sm:$0xf]
        %v1175 = vld [vmem:[%s3 + $0x8] sm:$0xf]
        %v1176 = vld [vmem:[%s3 + $0xc] sm:$0xf]
        %v1177 = vld [vmem:[%s4] sm:$0x1]
        %v1179 = vlaneseq
        %v1180 = vshrl.u32 %v1179, 7
        %v1181 = vsub.s32 0, %v1180
        %v1182 = vrot.slane %v1177, %v1181
        %v1188 = vunpack.c.l.b16 %v1173
        %v1189 = vunpack.c.l.b16 %v1174
        %v1190 = vunpack.c.l.b16 %v1175
        %v1191 = vunpack.c.l.b16 %v1176
        %v1192 = vpack.c.b16 %v1189, %v1188
        %v1193 = vpack.c.b16 %v1191, %v1190
        %v1197 = vsel %vm1143, %v1172, 0
        %1199 = vmatprep.subr.bf16.mxu0 0
        %1200 = vmatpush1.bf16.msra.mxu0 0
        %1201 = vmatprep.subr.bf16.mxu0 0
        %1202 = vmatpush1.bf16.msra.mxu0 0
        %1203 = vmatprep.subr.bf16.mxu0 0
        %1204 = vmatpush1.bf16.msra.mxu0 0
        %1205 = vmatprep.subr.bf16.mxu0 0
        %1206 = vmatpush1.bf16.msra.mxu0 0
        %1207 = vmatprep.subr.bf16.mxu0 0
        %1208 = vmatpush1.bf16.msra.mxu0 0
        %1209 = vmatprep.subr.bf16.mxu0 0
        %1210 = vmatpush1.bf16.msra.mxu0 0
        %1211 = vmatprep.subr.bf16.mxu0 0
        %1212 = vmatpush1.bf16.msra.mxu0 %v1193
        %1213 = vmatprep.subr.bf16.mxu0 0
        %1214 = vmatpush1.bf16.msra.mxu0 %v1192
        %1215 = vmatprep.subr.bf16.mxu0 0
        %1216 = vmatpush2.bf16.msra.mxu0 0
        %1217 = vmatprep.subr.bf16.mxu0 0
        %1218 = vmatpush2.bf16.msra.mxu0 0
        %1219 = vmatprep.subr.bf16.mxu0 0
        %1220 = vmatpush2.bf16.msra.mxu0 0
        %1221 = vmatprep.subr.bf16.mxu0 0
        %1222 = vmatpush2.bf16.msra.mxu0 0
        %1223 = vmatprep.subr.bf16.mxu0 0
        %1224 = vmatpush2.bf16.msra.mxu0 0
        %1225 = vmatprep.subr.bf16.mxu0 0
        %1226 = vmatpush2.bf16.msra.mxu0 0
        %1227 = vmatprep.subr.bf16.mxu0 0
        %1228 = vmatpush2.bf16.msra.mxu0 0
        %1229 = vmatprep.subr.bf16.mxu0 0
        %1230 = vmatpush2.bf16.msra.mxu0 0
        %1231 = vmatprep.mubr.bf16.mxu0 0
        %1232 = vmatmul.mubr.bf16.gmra.mxu0 %v1197
        %v1233 = vpop.f32.mrf.mxu0
        %v1234 = vadd.f32 %v1182, %v1233
        %v1235 = vpop.f32.mrf.mxu0
        %v1236 = vpop.f32.mrf.mxu0
        %v1237 = vpop.f32.mrf.mxu0
        %1238 = vdwg.mxu0
        %v1239 = vpack.c.bf16 %v1234, %v1234
        %v1240 = vld [vmem:[#allocation2] sm:$0xf]
        %v1241 = vld [vmem:[#allocation3] sm:$0xf]
        %vm1242 = vcmask 64512
        %v1244 = vsel %vm1242, %v1239, 0
        %v1247 = vsel %vm1242, %v1240, 0
        %1249 = vmatprep.subr.bf16.mxu0 0
        %1250 = vmatpush1.bf16.xpose.msra.mxu0 0
        %1251 = vmatprep.subr.bf16.mxu0 0
        %1252 = vmatpush1.bf16.xpose.msra.mxu0 0
        %1253 = vmatprep.subr.bf16.mxu0 0
        %1254 = vmatpush1.bf16.xpose.msra.mxu0 0
        %1255 = vmatprep.subr.bf16.mxu0 0
        %1256 = vmatpush1.bf16.xpose.msra.mxu0 0
        %1257 = vmatprep.subr.bf16.mxu0 0
        %1258 = vmatpush1.bf16.xpose.msra.mxu0 0
        %1259 = vmatprep.subr.bf16.mxu0 0
        %1260 = vmatpush1.bf16.xpose.msra.mxu0 0
        %1261 = vmatprep.subr.bf16.mxu0 0
        %1262 = vmatpush1.bf16.xpose.msra.mxu0 0
        %1263 = vmatprep.subr.bf16.mxu0 0
        %1264 = vmatpush1.bf16.xpose.msra.mxu0 %v1247
        %1265 = vmatprep.subr.bf16.mxu0 0
        %1266 = vmatpush2.bf16.xpose.msra.mxu0 0
        %1267 = vmatprep.subr.bf16.mxu0 0
        %1268 = vmatpush2.bf16.xpose.msra.mxu0 0
        %1269 = vmatprep.subr.bf16.mxu0 0
        %1270 = vmatpush2.bf16.xpose.msra.mxu0 0
        %1271 = vmatprep.subr.bf16.mxu0 0
        %1272 = vmatpush2.bf16.xpose.msra.mxu0 0
        %1273 = vmatprep.subr.bf16.mxu0 0
        %1274 = vmatpush2.bf16.xpose.msra.mxu0 0
        %1275 = vmatprep.subr.bf16.mxu0 0
        %1276 = vmatpush2.bf16.xpose.msra.mxu0 0
        %1277 = vmatprep.subr.bf16.mxu0 0
        %1278 = vmatpush2.bf16.xpose.msra.mxu0 0
        %1279 = vmatprep.subr.bf16.mxu0 0
        %1280 = vmatpush2.bf16.xpose.msra.mxu0 0
        %1281 = vmatprep.mubr.bf16.mxu0 0
        %1282 = vmatmul.mubr.bf16.gmra.mxu0 %v1244
        %v1283 = vpop.f32.mrf.mxu0
        %v1284 = vadd.f32 0.0, %v1283
        %v1285 = vpop.f32.mrf.mxu0
        %v1286 = vpop.f32.mrf.mxu0
        %v1287 = vpop.f32.mrf.mxu0
        %1288 = vdwg.mxu0
        %v1289 = vsel %vm1242, %v1284, -inf
        %1290 = vmax.xlane.f32.xlu0 %v1289
        %v1291 = vpop.xlane.xlu0 %1290
        %v1292 = vsub.f32 %v1284, %v1291
        %v1293 = vmul.f32 %v1292, 1.442695
        %v1294 = vpow.pop %v1293
        %v1295 = vsel %vm1242, %v1294, 0.0
        %1296 = vadd.xlane.f32.xlu0 %v1295
        %v1297 = vpop.xlane.xlu0 %1296
        %v1298 = vrcp.pop %v1297
        %v1299 = vmul.f32 %v1294, %v1298
        %v1300 = vpack.c.bf16 %v1299, %v1299
        %v1302 = vsel %vm1242, %v1300, 0
        %vm1304 = vcmask 1043456
        %v1306 = vsel %vm1304, %v1241, 0
        %1308 = vmatprep.subr.bf16.mxu0 0
        %1309 = vmatpush1.bf16.msra.mxu0 0
        %1310 = vmatprep.subr.bf16.mxu0 0
        %1311 = vmatpush1.bf16.msra.mxu0 0
        %1312 = vmatprep.subr.bf16.mxu0 0
        %1313 = vmatpush1.bf16.msra.mxu0 0
        %1314 = vmatprep.subr.bf16.mxu0 0
        %1315 = vmatpush1.bf16.msra.mxu0 0
        %1316 = vmatprep.subr.bf16.mxu0 0
        %1317 = vmatpush1.bf16.msra.mxu0 0
        %1318 = vmatprep.subr.bf16.mxu0 0
        %1319 = vmatpush1.bf16.msra.mxu0 0
        %1320 = vmatprep.subr.bf16.mxu0 0
        %1321 = vmatpush1.bf16.msra.mxu0 0
        %1322 = vmatprep.subr.bf16.mxu0 0
        %1323 = vmatpush1.bf16.msra.mxu0 %v1306
        %1324 = vmatprep.subr.bf16.mxu0 0
        %1325 = vmatpush2.bf16.msra.mxu0 0
        %1326 = vmatprep.subr.bf16.mxu0 0
        %1327 = vmatpush2.bf16.msra.mxu0 0
        %1328 = vmatprep.subr.bf16.mxu0 0
        %1329 = vmatpush2.bf16.msra.mxu0 0
        %1330 = vmatprep.subr.bf16.mxu0 0
        %1331 = vmatpush2.bf16.msra.mxu0 0
        %1332 = vmatprep.subr.bf16.mxu0 0
        %1333 = vmatpush2.bf16.msra.mxu0 0
        %1334 = vmatprep.subr.bf16.mxu0 0
        %1335 = vmatpush2.bf16.msra.mxu0 0
        %1336 = vmatprep.subr.bf16.mxu0 0
        %1337 = vmatpush2.bf16.msra.mxu0 0
        %1338 = vmatprep.subr.bf16.mxu0 0
        %1339 = vmatpush2.bf16.msra.mxu0 0
        %1340 = vmatprep.mubr.bf16.mxu0 0
        %1341 = vmatmul.mubr.bf16.gmra.mxu0 %v1302
        %v1342 = vpop.f32.mrf.mxu0
        %v1343 = vadd.f32 0.0, %v1342
        %v1344 = vpop.f32.mrf.mxu0
        %v1345 = vpop.f32.mrf.mxu0
        %v1346 = vpop.f32.mrf.mxu0
        %1347 = vdwg.mxu0
        %v1348 = vpack.c.bf16 %v1343, %v1343
        %v1349 = vld [vmem:[%s9] sm:$0xf]
        %s1350 = scalar_lea.vmem %s3, 16
        %v1351 = vld [vmem:[%s1350] sm:$0xf]
        %v1352 = vld [vmem:[%s1350 + $0x4] sm:$0xf]
        %v1353 = vld [vmem:[%s1350 + $0x8] sm:$0xf]
        %v1354 = vld [vmem:[%s1350 + $0xc] sm:$0xf]
        %s1355 = scalar_lea.vmem %s4, 1
        %v1356 = vld [vmem:[%s1355] sm:$0x1]
        %v1358 = vlaneseq
        %v1359 = vshrl.u32 %v1358, 7
        %v1360 = vsub.s32 0, %v1359
        %v1361 = vrot.slane %v1356, %v1360
        %v1367 = vunpack.c.l.b16 %v1351
        %v1368 = vunpack.c.l.b16 %v1352
        %v1369 = vunpack.c.l.b16 %v1353
        %v1370 = vunpack.c.l.b16 %v1354
        %v1371 = vpack.c.b16 %v1368, %v1367
        %v1372 = vpack.c.b16 %v1370, %v1369
        %1375 = vmatprep.subr.bf16.mxu0 0
        %1376 = vmatpush1.bf16.msra.mxu0 0
        %1377 = vmatprep.subr.bf16.mxu0 0
        %1378 = vmatpush1.bf16.msra.mxu0 0
        %1379 = vmatprep.subr.bf16.mxu0 0
        %1380 = vmatpush1.bf16.msra.mxu0 0
        %1381 = vmatprep.subr.bf16.mxu0 0
        %1382 = vmatpush1.bf16.msra.mxu0 0
        %1383 = vmatprep.subr.bf16.mxu0 0
        %1384 = vmatpush1.bf16.msra.mxu0 0
        %1385 = vmatprep.subr.bf16.mxu0 0
        %1386 = vmatpush1.bf16.msra.mxu0 0
        %1387 = vmatprep.subr.bf16.mxu0 0
        %1388 = vmatpush1.bf16.msra.mxu0 %v1372
        %1389 = vmatprep.subr.bf16.mxu0 0
        %1390 = vmatpush1.bf16.msra.mxu0 %v1371
        %1391 = vmatprep.subr.bf16.mxu0 0
        %1392 = vmatpush2.bf16.msra.mxu0 0
        %1393 = vmatprep.subr.bf16.mxu0 0
        %1394 = vmatpush2.bf16.msra.mxu0 0
        %1395 = vmatprep.subr.bf16.mxu0 0
        %1396 = vmatpush2.bf16.msra.mxu0 0
        %1397 = vmatprep.subr.bf16.mxu0 0
        %1398 = vmatpush2.bf16.msra.mxu0 0
        %1399 = vmatprep.subr.bf16.mxu0 0
        %1400 = vmatpush2.bf16.msra.mxu0 0
        %1401 = vmatprep.subr.bf16.mxu0 0
        %1402 = vmatpush2.bf16.msra.mxu0 0
        %1403 = vmatprep.subr.bf16.mxu0 0
        %1404 = vmatpush2.bf16.msra.mxu0 0
        %1405 = vmatprep.subr.bf16.mxu0 0
        %1406 = vmatpush2.bf16.msra.mxu0 0
        %1407 = vmatprep.mubr.bf16.mxu0 0
        %1408 = vmatmul.mubr.bf16.gmra.mxu0 %v1197
        %v1409 = vpop.f32.mrf.mxu0
        %v1410 = vadd.f32 %v1361, %v1409
        %v1411 = vpop.f32.mrf.mxu0
        %v1412 = vpop.f32.mrf.mxu0
        %v1413 = vpop.f32.mrf.mxu0
        %1414 = vdwg.mxu0
        %v1415 = vpack.c.bf16 %v1410, %v1410
        %s1416 = scalar_lea.vmem [#allocation2], 4
        %v1417 = vld [vmem:[%s1416] sm:$0xf]
        %s1418 = scalar_lea.vmem [#allocation3], 4
        %v1419 = vld [vmem:[%s1418] sm:$0xf]
        %v1421 = vsel %vm1242, %v1415, 0
        %v1424 = vsel %vm1242, %v1417, 0
        %1426 = vmatprep.subr.bf16.mxu0 0
        %1427 = vmatpush1.bf16.xpose.msra.mxu0 0
        %1428 = vmatprep.subr.bf16.mxu0 0
        %1429 = vmatpush1.bf16.xpose.msra.mxu0 0
        %1430 = vmatprep.subr.bf16.mxu0 0
        %1431 = vmatpush1.bf16.xpose.msra.mxu0 0
        %1432 = vmatprep.subr.bf16.mxu0 0
        %1433 = vmatpush1.bf16.xpose.msra.mxu0 0
        %1434 = vmatprep.subr.bf16.mxu0 0
        %1435 = vmatpush1.bf16.xpose.msra.mxu0 0
        %1436 = vmatprep.subr.bf16.mxu0 0
        %1437 = vmatpush1.bf16.xpose.msra.mxu0 0
        %1438 = vmatprep.subr.bf16.mxu0 0
        %1439 = vmatpush1.bf16.xpose.msra.mxu0 0
        %1440 = vmatprep.subr.bf16.mxu0 0
        %1441 = vmatpush1.bf16.xpose.msra.mxu0 %v1424
        %1442 = vmatprep.subr.bf16.mxu0 0
        %1443 = vmatpush2.bf16.xpose.msra.mxu0 0
        %1444 = vmatprep.subr.bf16.mxu0 0
        %1445 = vmatpush2.bf16.xpose.msra.mxu0 0
        %1446 = vmatprep.subr.bf16.mxu0 0
        %1447 = vmatpush2.bf16.xpose.msra.mxu0 0
        %1448 = vmatprep.subr.bf16.mxu0 0
        %1449 = vmatpush2.bf16.xpose.msra.mxu0 0
        %1450 = vmatprep.subr.bf16.mxu0 0
        %1451 = vmatpush2.bf16.xpose.msra.mxu0 0
        %1452 = vmatprep.subr.bf16.mxu0 0
        %1453 = vmatpush2.bf16.xpose.msra.mxu0 0
        %1454 = vmatprep.subr.bf16.mxu0 0
        %1455 = vmatpush2.bf16.xpose.msra.mxu0 0
        %1456 = vmatprep.subr.bf16.mxu0 0
        %1457 = vmatpush2.bf16.xpose.msra.mxu0 0
        %1458 = vmatprep.mubr.bf16.mxu0 0
        %1459 = vmatmul.mubr.bf16.gmra.mxu0 %v1421
        %v1460 = vpop.f32.mrf.mxu0
        %v1461 = vadd.f32 0.0, %v1460
        %v1462 = vpop.f32.mrf.mxu0
        %v1463 = vpop.f32.mrf.mxu0
        %v1464 = vpop.f32.mrf.mxu0
        %1465 = vdwg.mxu0
        %v1466 = vsel %vm1242, %v1461, -inf
        %1467 = vmax.xlane.f32.xlu0 %v1466
        %v1468 = vpop.xlane.xlu0 %1467
        %v1469 = vsub.f32 %v1461, %v1468
        %v1470 = vmul.f32 %v1469, 1.442695
        %v1471 = vpow.pop %v1470
        %v1472 = vsel %vm1242, %v1471, 0.0
        %1473 = vadd.xlane.f32.xlu0 %v1472
        %v1474 = vpop.xlane.xlu0 %1473
        %v1475 = vrcp.pop %v1474
        %v1476 = vmul.f32 %v1471, %v1475
        %v1477 = vpack.c.bf16 %v1476, %v1476
        %v1479 = vsel %vm1242, %v1477, 0
        %v1482 = vsel %vm1304, %v1419, 0
        %1484 = vmatprep.subr.bf16.mxu0 0
        %1485 = vmatpush1.bf16.msra.mxu0 0
        %1486 = vmatprep.subr.bf16.mxu0 0
        %1487 = vmatpush1.bf16.msra.mxu0 0
        %1488 = vmatprep.subr.bf16.mxu0 0
        %1489 = vmatpush1.bf16.msra.mxu0 0
        %1490 = vmatprep.subr.bf16.mxu0 0
        %1491 = vmatpush1.bf16.msra.mxu0 0
        %1492 = vmatprep.subr.bf16.mxu0 0
        %1493 = vmatpush1.bf16.msra.mxu0 0
        %1494 = vmatprep.subr.bf16.mxu0 0
        %1495 = vmatpush1.bf16.msra.mxu0 0
        %1496 = vmatprep.subr.bf16.mxu0 0
        %1497 = vmatpush1.bf16.msra.mxu0 0
        %1498 = vmatprep.subr.bf16.mxu0 0
        %1499 = vmatpush1.bf16.msra.mxu0 %v1482
        %1500 = vmatprep.subr.bf16.mxu0 0
        %1501 = vmatpush2.bf16.msra.mxu0 0
        %1502 = vmatprep.subr.bf16.mxu0 0
        %1503 = vmatpush2.bf16.msra.mxu0 0
        %1504 = vmatprep.subr.bf16.mxu0 0
        %1505 = vmatpush2.bf16.msra.mxu0 0
        %1506 = vmatprep.subr.bf16.mxu0 0
        %1507 = vmatpush2.bf16.msra.mxu0 0
        %1508 = vmatprep.subr.bf16.mxu0 0
        %1509 = vmatpush2.bf16.msra.mxu0 0
        %1510 = vmatprep.subr.bf16.mxu0 0
        %1511 = vmatpush2.bf16.msra.mxu0 0
        %1512 = vmatprep.subr.bf16.mxu0 0
        %1513 = vmatpush2.bf16.msra.mxu0 0
        %1514 = vmatprep.subr.bf16.mxu0 0
        %1515 = vmatpush2.bf16.msra.mxu0 0
        %1516 = vmatprep.mubr.bf16.mxu0 0
        %1517 = vmatmul.mubr.bf16.gmra.mxu0 %v1479
        %v1518 = vpop.f32.mrf.mxu0
        %v1519 = vadd.f32 0.0, %v1518
        %v1520 = vpop.f32.mrf.mxu0
        %v1521 = vpop.f32.mrf.mxu0
        %v1522 = vpop.f32.mrf.mxu0
        %1523 = vdwg.mxu0
        %v1524 = vpack.c.bf16 %v1519, %v1519
        %s1525 = scalar_lea.vmem %s9, 4
        %v1526 = vld [vmem:[%s1525] sm:$0xf]
        %v1528 = vsel %vm1242, %v1524, 0
        %v1531 = vsel %vm1304, %v1526, 0
        %1533 = vmatprep.subr.bf16.mxu0 0
        %1534 = vmatpush1.bf16.msra.mxu0 0
        %1535 = vmatprep.subr.bf16.mxu0 0
        %1536 = vmatpush1.bf16.msra.mxu0 0
        %1537 = vmatprep.subr.bf16.mxu0 0
        %1538 = vmatpush1.bf16.msra.mxu0 0
        %1539 = vmatprep.subr.bf16.mxu0 0
        %1540 = vmatpush1.bf16.msra.mxu0 0
        %1541 = vmatprep.subr.bf16.mxu0 0
        %1542 = vmatpush1.bf16.msra.mxu0 0
        %1543 = vmatprep.subr.bf16.mxu0 0
        %1544 = vmatpush1.bf16.msra.mxu0 0
        %1545 = vmatprep.subr.bf16.mxu0 0
        %1546 = vmatpush1.bf16.msra.mxu0 0
        %1547 = vmatprep.subr.bf16.mxu0 0
        %1548 = vmatpush1.bf16.msra.mxu0 %v1531
        %1549 = vmatprep.subr.bf16.mxu0 0
        %1550 = vmatpush2.bf16.msra.mxu0 0
        %1551 = vmatprep.subr.bf16.mxu0 0
        %1552 = vmatpush2.bf16.msra.mxu0 0
        %1553 = vmatprep.subr.bf16.mxu0 0
        %1554 = vmatpush2.bf16.msra.mxu0 0
        %1555 = vmatprep.subr.bf16.mxu0 0
        %1556 = vmatpush2.bf16.msra.mxu0 0
        %1557 = vmatprep.subr.bf16.mxu0 0
        %1558 = vmatpush2.bf16.msra.mxu0 0
        %1559 = vmatprep.subr.bf16.mxu0 0
        %1560 = vmatpush2.bf16.msra.mxu0 0
        %1561 = vmatprep.subr.bf16.mxu0 0
        %1562 = vmatpush2.bf16.msra.mxu0 0
        %1563 = vmatprep.subr.bf16.mxu0 0
        %1564 = vmatpush2.bf16.msra.mxu0 0
        %1565 = vmatprep.mubr.bf16.mxu0 0
        %1566 = vmatmul.mubr.bf16.gmra.mxu0 %v1528
        %v1567 = vpop.f32.mrf.mxu0
        %v1568 = vadd.f32 0.0, %v1567
        %v1569 = vpop.f32.mrf.mxu0
        %v1570 = vpop.f32.mrf.mxu0
        %v1571 = vpop.f32.mrf.mxu0
        %1572 = vdwg.mxu0
        %v1574 = vsel %vm1242, %v1348, 0
        %v1577 = vsel %vm1304, %v1349, 0
        %1579 = vmatprep.subr.bf16.mxu0 0
        %1580 = vmatpush1.bf16.msra.mxu0 0
        %1581 = vmatprep.subr.bf16.mxu0 0
        %1582 = vmatpush1.bf16.msra.mxu0 0
        %1583 = vmatprep.subr.bf16.mxu0 0
        %1584 = vmatpush1.bf16.msra.mxu0 0
        %1585 = vmatprep.subr.bf16.mxu0 0
        %1586 = vmatpush1.bf16.msra.mxu0 0
        %1587 = vmatprep.subr.bf16.mxu0 0
        %1588 = vmatpush1.bf16.msra.mxu0 0
        %1589 = vmatprep.subr.bf16.mxu0 0
        %1590 = vmatpush1.bf16.msra.mxu0 0
        %1591 = vmatprep.subr.bf16.mxu0 0
        %1592 = vmatpush1.bf16.msra.mxu0 0
        %1593 = vmatprep.subr.bf16.mxu0 0
        %1594 = vmatpush1.bf16.msra.mxu0 %v1577
        %1595 = vmatprep.subr.bf16.mxu0 0
        %1596 = vmatpush2.bf16.msra.mxu0 0
        %1597 = vmatprep.subr.bf16.mxu0 0
        %1598 = vmatpush2.bf16.msra.mxu0 0
        %1599 = vmatprep.subr.bf16.mxu0 0
        %1600 = vmatpush2.bf16.msra.mxu0 0
        %1601 = vmatprep.subr.bf16.mxu0 0
        %1602 = vmatpush2.bf16.msra.mxu0 0
        %1603 = vmatprep.subr.bf16.mxu0 0
        %1604 = vmatpush2.bf16.msra.mxu0 0
        %1605 = vmatprep.subr.bf16.mxu0 0
        %1606 = vmatpush2.bf16.msra.mxu0 0
        %1607 = vmatprep.subr.bf16.mxu0 0
        %1608 = vmatpush2.bf16.msra.mxu0 0
        %1609 = vmatprep.subr.bf16.mxu0 0
        %1610 = vmatpush2.bf16.msra.mxu0 0
        %1611 = vmatprep.mubr.bf16.mxu0 0
        %1612 = vmatmul.mubr.bf16.gmra.mxu0 %v1574
        %v1613 = vpop.f32.mrf.mxu0
        %v1614 = vadd.f32 %v1568, %v1613
        %v1615 = vpop.f32.mrf.mxu0
        %v1616 = vpop.f32.mrf.mxu0
        %v1617 = vpop.f32.mrf.mxu0
        %1618 = vdwg.mxu0
        %s1619 = scalar_lea.vmem %s3, 32
        %v1620 = vld [vmem:[%s1619] sm:$0xf]
        %v1621 = vld [vmem:[%s1619 + $0x4] sm:$0xf]
        %v1622 = vld [vmem:[%s1619 + $0x8] sm:$0xf]
        %v1623 = vld [vmem:[%s1619 + $0xc] sm:$0xf]
        %s1624 = scalar_lea.vmem %s4, 2
        %v1625 = vld [vmem:[%s1624] sm:$0x1]
        %v1627 = vlaneseq
        %v1628 = vshrl.u32 %v1627, 7
        %v1629 = vsub.s32 0, %v1628
        %v1630 = vrot.slane %v1625, %v1629
        %v1636 = vunpack.c.l.b16 %v1620
        %v1637 = vunpack.c.l.b16 %v1621
        %v1638 = vunpack.c.l.b16 %v1622
        %v1639 = vunpack.c.l.b16 %v1623
        %v1640 = vpack.c.b16 %v1637, %v1636
        %v1641 = vpack.c.b16 %v1639, %v1638
        %1644 = vmatprep.subr.bf16.mxu0 0
        %1645 = vmatpush1.bf16.msra.mxu0 0
        %1646 = vmatprep.subr.bf16.mxu0 0
        %1647 = vmatpush1.bf16.msra.mxu0 0
        %1648 = vmatprep.subr.bf16.mxu0 0
        %1649 = vmatpush1.bf16.msra.mxu0 0
        %1650 = vmatprep.subr.bf16.mxu0 0
        %1651 = vmatpush1.bf16.msra.mxu0 0
        %1652 = vmatprep.subr.bf16.mxu0 0
        %1653 = vmatpush1.bf16.msra.mxu0 0
        %1654 = vmatprep.subr.bf16.mxu0 0
        %1655 = vmatpush1.bf16.msra.mxu0 0
        %1656 = vmatprep.subr.bf16.mxu0 0
        %1657 = vmatpush1.bf16.msra.mxu0 %v1641
        %1658 = vmatprep.subr.bf16.mxu0 0
        %1659 = vmatpush1.bf16.msra.mxu0 %v1640
        %1660 = vmatprep.subr.bf16.mxu0 0
        %1661 = vmatpush2.bf16.msra.mxu0 0
        %1662 = vmatprep.subr.bf16.mxu0 0
        %1663 = vmatpush2.bf16.msra.mxu0 0
        %1664 = vmatprep.subr.bf16.mxu0 0
        %1665 = vmatpush2.bf16.msra.mxu0 0
        %1666 = vmatprep.subr.bf16.mxu0 0
        %1667 = vmatpush2.bf16.msra.mxu0 0
        %1668 = vmatprep.subr.bf16.mxu0 0
        %1669 = vmatpush2.bf16.msra.mxu0 0
        %1670 = vmatprep.subr.bf16.mxu0 0
        %1671 = vmatpush2.bf16.msra.mxu0 0
        %1672 = vmatprep.subr.bf16.mxu0 0
        %1673 = vmatpush2.bf16.msra.mxu0 0
        %1674 = vmatprep.subr.bf16.mxu0 0
        %1675 = vmatpush2.bf16.msra.mxu0 0
        %1676 = vmatprep.mubr.bf16.mxu0 0
        %1677 = vmatmul.mubr.bf16.gmra.mxu0 %v1197
        %v1678 = vpop.f32.mrf.mxu0
        %v1679 = vadd.f32 %v1630, %v1678
        %v1680 = vpop.f32.mrf.mxu0
        %v1681 = vpop.f32.mrf.mxu0
        %v1682 = vpop.f32.mrf.mxu0
        %1683 = vdwg.mxu0
        %v1684 = vpack.c.bf16 %v1679, %v1679
        %s1685 = scalar_lea.vmem [#allocation2], 8
        %v1686 = vld [vmem:[%s1685] sm:$0xf]
        %s1687 = scalar_lea.vmem [#allocation3], 8
        %v1688 = vld [vmem:[%s1687] sm:$0xf]
        %v1690 = vsel %vm1242, %v1684, 0
        %v1693 = vsel %vm1242, %v1686, 0
        %1695 = vmatprep.subr.bf16.mxu0 0
        %1696 = vmatpush1.bf16.xpose.msra.mxu0 0
        %1697 = vmatprep.subr.bf16.mxu0 0
        %1698 = vmatpush1.bf16.xpose.msra.mxu0 0
        %1699 = vmatprep.subr.bf16.mxu0 0
        %1700 = vmatpush1.bf16.xpose.msra.mxu0 0
        %1701 = vmatprep.subr.bf16.mxu0 0
        %1702 = vmatpush1.bf16.xpose.msra.mxu0 0
        %1703 = vmatprep.subr.bf16.mxu0 0
        %1704 = vmatpush1.bf16.xpose.msra.mxu0 0
        %1705 = vmatprep.subr.bf16.mxu0 0
        %1706 = vmatpush1.bf16.xpose.msra.mxu0 0
        %1707 = vmatprep.subr.bf16.mxu0 0
        %1708 = vmatpush1.bf16.xpose.msra.mxu0 0
        %1709 = vmatprep.subr.bf16.mxu0 0
        %1710 = vmatpush1.bf16.xpose.msra.mxu0 %v1693
        %1711 = vmatprep.subr.bf16.mxu0 0
        %1712 = vmatpush2.bf16.xpose.msra.mxu0 0
        %1713 = vmatprep.subr.bf16.mxu0 0
        %1714 = vmatpush2.bf16.xpose.msra.mxu0 0
        %1715 = vmatprep.subr.bf16.mxu0 0
        %1716 = vmatpush2.bf16.xpose.msra.mxu0 0
        %1717 = vmatprep.subr.bf16.mxu0 0
        %1718 = vmatpush2.bf16.xpose.msra.mxu0 0
        %1719 = vmatprep.subr.bf16.mxu0 0
        %1720 = vmatpush2.bf16.xpose.msra.mxu0 0
        %1721 = vmatprep.subr.bf16.mxu0 0
        %1722 = vmatpush2.bf16.xpose.msra.mxu0 0
        %1723 = vmatprep.subr.bf16.mxu0 0
        %1724 = vmatpush2.bf16.xpose.msra.mxu0 0
        %1725 = vmatprep.subr.bf16.mxu0 0
        %1726 = vmatpush2.bf16.xpose.msra.mxu0 0
        %1727 = vmatprep.mubr.bf16.mxu0 0
        %1728 = vmatmul.mubr.bf16.gmra.mxu0 %v1690
        %v1729 = vpop.f32.mrf.mxu0
        %v1730 = vadd.f32 0.0, %v1729
        %v1731 = vpop.f32.mrf.mxu0
        %v1732 = vpop.f32.mrf.mxu0
        %v1733 = vpop.f32.mrf.mxu0
        %1734 = vdwg.mxu0
        %v1735 = vsel %vm1242, %v1730, -inf
        %1736 = vmax.xlane.f32.xlu0 %v1735
        %v1737 = vpop.xlane.xlu0 %1736
        %v1738 = vsub.f32 %v1730, %v1737
        %v1739 = vmul.f32 %v1738, 1.442695
        %v1740 = vpow.pop %v1739
        %v1741 = vsel %vm1242, %v1740, 0.0
        %1742 = vadd.xlane.f32.xlu0 %v1741
        %v1743 = vpop.xlane.xlu0 %1742
        %v1744 = vrcp.pop %v1743
        %v1745 = vmul.f32 %v1740, %v1744
        %v1746 = vpack.c.bf16 %v1745, %v1745
        %v1748 = vsel %vm1242, %v1746, 0
        %v1751 = vsel %vm1304, %v1688, 0
        %1753 = vmatprep.subr.bf16.mxu0 0
        %1754 = vmatpush1.bf16.msra.mxu0 0
        %1755 = vmatprep.subr.bf16.mxu0 0
        %1756 = vmatpush1.bf16.msra.mxu0 0
        %1757 = vmatprep.subr.bf16.mxu0 0
        %1758 = vmatpush1.bf16.msra.mxu0 0
        %1759 = vmatprep.subr.bf16.mxu0 0
        %1760 = vmatpush1.bf16.msra.mxu0 0
        %1761 = vmatprep.subr.bf16.mxu0 0
        %1762 = vmatpush1.bf16.msra.mxu0 0
        %1763 = vmatprep.subr.bf16.mxu0 0
        %1764 = vmatpush1.bf16.msra.mxu0 0
        %1765 = vmatprep.subr.bf16.mxu0 0
        %1766 = vmatpush1.bf16.msra.mxu0 0
        %1767 = vmatprep.subr.bf16.mxu0 0
        %1768 = vmatpush1.bf16.msra.mxu0 %v1751
        %1769 = vmatprep.subr.bf16.mxu0 0
        %1770 = vmatpush2.bf16.msra.mxu0 0
        %1771 = vmatprep.subr.bf16.mxu0 0
        %1772 = vmatpush2.bf16.msra.mxu0 0
        %1773 = vmatprep.subr.bf16.mxu0 0
        %1774 = vmatpush2.bf16.msra.mxu0 0
        %1775 = vmatprep.subr.bf16.mxu0 0
        %1776 = vmatpush2.bf16.msra.mxu0 0
        %1777 = vmatprep.subr.bf16.mxu0 0
        %1778 = vmatpush2.bf16.msra.mxu0 0
        %1779 = vmatprep.subr.bf16.mxu0 0
        %1780 = vmatpush2.bf16.msra.mxu0 0
        %1781 = vmatprep.subr.bf16.mxu0 0
        %1782 = vmatpush2.bf16.msra.mxu0 0
        %1783 = vmatprep.subr.bf16.mxu0 0
        %1784 = vmatpush2.bf16.msra.mxu0 0
        %1785 = vmatprep.mubr.bf16.mxu0 0
        %1786 = vmatmul.mubr.bf16.gmra.mxu0 %v1748
        %v1787 = vpop.f32.mrf.mxu0
        %v1788 = vadd.f32 0.0, %v1787
        %v1789 = vpop.f32.mrf.mxu0
        %v1790 = vpop.f32.mrf.mxu0
        %v1791 = vpop.f32.mrf.mxu0
        %1792 = vdwg.mxu0
        %v1793 = vpack.c.bf16 %v1788, %v1788
        %s1794 = scalar_lea.vmem %s9, 8
        %v1795 = vld [vmem:[%s1794] sm:$0xf]
        %v1797 = vsel %vm1242, %v1793, 0
        %v1800 = vsel %vm1304, %v1795, 0
        %1802 = vmatprep.subr.bf16.mxu0 0
        %1803 = vmatpush1.bf16.msra.mxu0 0
        %1804 = vmatprep.subr.bf16.mxu0 0
        %1805 = vmatpush1.bf16.msra.mxu0 0
        %1806 = vmatprep.subr.bf16.mxu0 0
        %1807 = vmatpush1.bf16.msra.mxu0 0
        %1808 = vmatprep.subr.bf16.mxu0 0
        %1809 = vmatpush1.bf16.msra.mxu0 0
        %1810 = vmatprep.subr.bf16.mxu0 0
        %1811 = vmatpush1.bf16.msra.mxu0 0
        %1812 = vmatprep.subr.bf16.mxu0 0
        %1813 = vmatpush1.bf16.msra.mxu0 0
        %1814 = vmatprep.subr.bf16.mxu0 0
        %1815 = vmatpush1.bf16.msra.mxu0 0
        %1816 = vmatprep.subr.bf16.mxu0 0
        %1817 = vmatpush1.bf16.msra.mxu0 %v1800
        %1818 = vmatprep.subr.bf16.mxu0 0
        %1819 = vmatpush2.bf16.msra.mxu0 0
        %1820 = vmatprep.subr.bf16.mxu0 0
        %1821 = vmatpush2.bf16.msra.mxu0 0
        %1822 = vmatprep.subr.bf16.mxu0 0
        %1823 = vmatpush2.bf16.msra.mxu0 0
        %1824 = vmatprep.subr.bf16.mxu0 0
        %1825 = vmatpush2.bf16.msra.mxu0 0
        %1826 = vmatprep.subr.bf16.mxu0 0
        %1827 = vmatpush2.bf16.msra.mxu0 0
        %1828 = vmatprep.subr.bf16.mxu0 0
        %1829 = vmatpush2.bf16.msra.mxu0 0
        %1830 = vmatprep.subr.bf16.mxu0 0
        %1831 = vmatpush2.bf16.msra.mxu0 0
        %1832 = vmatprep.subr.bf16.mxu0 0
        %1833 = vmatpush2.bf16.msra.mxu0 0
        %1834 = vmatprep.mubr.bf16.mxu0 0
        %1835 = vmatmul.mubr.bf16.gmra.mxu0 %v1797
        %v1836 = vpop.f32.mrf.mxu0
        %v1837 = vadd.f32 0.0, %v1836
        %v1838 = vpop.f32.mrf.mxu0
        %v1839 = vpop.f32.mrf.mxu0
        %v1840 = vpop.f32.mrf.mxu0
        %1841 = vdwg.mxu0
        %v1842 = vadd.f32 %v1614, %v1837
        %s1843 = scalar_lea.vmem %s3, 48
        %v1844 = vld [vmem:[%s1843] sm:$0xf]
        %v1845 = vld [vmem:[%s1843 + $0x4] sm:$0xf]
        %v1846 = vld [vmem:[%s1843 + $0x8] sm:$0xf]
        %v1847 = vld [vmem:[%s1843 + $0xc] sm:$0xf]
        %s1848 = scalar_lea.vmem %s4, 3
        %v1849 = vld [vmem:[%s1848] sm:$0x1]
        %v1851 = vlaneseq
        %v1852 = vshrl.u32 %v1851, 7
        %v1853 = vsub.s32 0, %v1852
        %v1854 = vrot.slane %v1849, %v1853
        %v1860 = vunpack.c.l.b16 %v1844
        %v1861 = vunpack.c.l.b16 %v1845
        %v1862 = vunpack.c.l.b16 %v1846
        %v1863 = vunpack.c.l.b16 %v1847
        %v1864 = vpack.c.b16 %v1861, %v1860
        %v1865 = vpack.c.b16 %v1863, %v1862
        %1868 = vmatprep.subr.bf16.mxu0 0
        %1869 = vmatpush1.bf16.msra.mxu0 0
        %1870 = vmatprep.subr.bf16.mxu0 0
        %1871 = vmatpush1.bf16.msra.mxu0 0
        %1872 = vmatprep.subr.bf16.mxu0 0
        %1873 = vmatpush1.bf16.msra.mxu0 0
        %1874 = vmatprep.subr.bf16.mxu0 0
        %1875 = vmatpush1.bf16.msra.mxu0 0
        %1876 = vmatprep.subr.bf16.mxu0 0
        %1877 = vmatpush1.bf16.msra.mxu0 0
        %1878 = vmatprep.subr.bf16.mxu0 0
        %1879 = vmatpush1.bf16.msra.mxu0 0
        %1880 = vmatprep.subr.bf16.mxu0 0
        %1881 = vmatpush1.bf16.msra.mxu0 %v1865
        %1882 = vmatprep.subr.bf16.mxu0 0
        %1883 = vmatpush1.bf16.msra.mxu0 %v1864
        %1884 = vmatprep.subr.bf16.mxu0 0
        %1885 = vmatpush2.bf16.msra.mxu0 0
        %1886 = vmatprep.subr.bf16.mxu0 0
        %1887 = vmatpush2.bf16.msra.mxu0 0
        %1888 = vmatprep.subr.bf16.mxu0 0
        %1889 = vmatpush2.bf16.msra.mxu0 0
        %1890 = vmatprep.subr.bf16.mxu0 0
        %1891 = vmatpush2.bf16.msra.mxu0 0
        %1892 = vmatprep.subr.bf16.mxu0 0
        %1893 = vmatpush2.bf16.msra.mxu0 0
        %1894 = vmatprep.subr.bf16.mxu0 0
        %1895 = vmatpush2.bf16.msra.mxu0 0
        %1896 = vmatprep.subr.bf16.mxu0 0
        %1897 = vmatpush2.bf16.msra.mxu0 0
        %1898 = vmatprep.subr.bf16.mxu0 0
        %1899 = vmatpush2.bf16.msra.mxu0 0
        %1900 = vmatprep.mubr.bf16.mxu0 0
        %1901 = vmatmul.mubr.bf16.gmra.mxu0 %v1197
        %v1902 = vpop.f32.mrf.mxu0
        %v1903 = vadd.f32 %v1854, %v1902
        %v1904 = vpop.f32.mrf.mxu0
        %v1905 = vpop.f32.mrf.mxu0
        %v1906 = vpop.f32.mrf.mxu0
        %1907 = vdwg.mxu0
        %v1908 = vpack.c.bf16 %v1903, %v1903
        %s1909 = scalar_lea.vmem [#allocation2], 12
        %v1910 = vld [vmem:[%s1909] sm:$0xf]
        %s1911 = scalar_lea.vmem [#allocation3], 12
        %v1912 = vld [vmem:[%s1911] sm:$0xf]
        %v1914 = vsel %vm1242, %v1908, 0
        %v1917 = vsel %vm1242, %v1910, 0
        %1919 = vmatprep.subr.bf16.mxu0 0
        %1920 = vmatpush1.bf16.xpose.msra.mxu0 0
        %1921 = vmatprep.subr.bf16.mxu0 0
        %1922 = vmatpush1.bf16.xpose.msra.mxu0 0
        %1923 = vmatprep.subr.bf16.mxu0 0
        %1924 = vmatpush1.bf16.xpose.msra.mxu0 0
        %1925 = vmatprep.subr.bf16.mxu0 0
        %1926 = vmatpush1.bf16.xpose.msra.mxu0 0
        %1927 = vmatprep.subr.bf16.mxu0 0
        %1928 = vmatpush1.bf16.xpose.msra.mxu0 0
        %1929 = vmatprep.subr.bf16.mxu0 0
        %1930 = vmatpush1.bf16.xpose.msra.mxu0 0
        %1931 = vmatprep.subr.bf16.mxu0 0
        %1932 = vmatpush1.bf16.xpose.msra.mxu0 0
        %1933 = vmatprep.subr.bf16.mxu0 0
        %1934 = vmatpush1.bf16.xpose.msra.mxu0 %v1917
        %1935 = vmatprep.subr.bf16.mxu0 0
        %1936 = vmatpush2.bf16.xpose.msra.mxu0 0
        %1937 = vmatprep.subr.bf16.mxu0 0
        %1938 = vmatpush2.bf16.xpose.msra.mxu0 0
        %1939 = vmatprep.subr.bf16.mxu0 0
        %1940 = vmatpush2.bf16.xpose.msra.mxu0 0
        %1941 = vmatprep.subr.bf16.mxu0 0
        %1942 = vmatpush2.bf16.xpose.msra.mxu0 0
        %1943 = vmatprep.subr.bf16.mxu0 0
        %1944 = vmatpush2.bf16.xpose.msra.mxu0 0
        %1945 = vmatprep.subr.bf16.mxu0 0
        %1946 = vmatpush2.bf16.xpose.msra.mxu0 0
        %1947 = vmatprep.subr.bf16.mxu0 0
        %1948 = vmatpush2.bf16.xpose.msra.mxu0 0
        %1949 = vmatprep.subr.bf16.mxu0 0
        %1950 = vmatpush2.bf16.xpose.msra.mxu0 0
        %1951 = vmatprep.mubr.bf16.mxu0 0
        %1952 = vmatmul.mubr.bf16.gmra.mxu0 %v1914
        %v1953 = vpop.f32.mrf.mxu0
        %v1954 = vadd.f32 0.0, %v1953
        %v1955 = vpop.f32.mrf.mxu0
        %v1956 = vpop.f32.mrf.mxu0
        %v1957 = vpop.f32.mrf.mxu0
        %1958 = vdwg.mxu0
        %v1959 = vsel %vm1242, %v1954, -inf
        %1960 = vmax.xlane.f32.xlu0 %v1959
        %v1961 = vpop.xlane.xlu0 %1960
        %v1962 = vsub.f32 %v1954, %v1961
        %v1963 = vmul.f32 %v1962, 1.442695
        %v1964 = vpow.pop %v1963
        %v1965 = vsel %vm1242, %v1964, 0.0
        %1966 = vadd.xlane.f32.xlu0 %v1965
        %v1967 = vpop.xlane.xlu0 %1966
        %v1968 = vrcp.pop %v1967
        %v1969 = vmul.f32 %v1964, %v1968
        %v1970 = vpack.c.bf16 %v1969, %v1969
        %v1972 = vsel %vm1242, %v1970, 0
        %v1975 = vsel %vm1304, %v1912, 0
        %1977 = vmatprep.subr.bf16.mxu0 0
        %1978 = vmatpush1.bf16.msra.mxu0 0
        %1979 = vmatprep.subr.bf16.mxu0 0
        %1980 = vmatpush1.bf16.msra.mxu0 0
        %1981 = vmatprep.subr.bf16.mxu0 0
        %1982 = vmatpush1.bf16.msra.mxu0 0
        %1983 = vmatprep.subr.bf16.mxu0 0
        %1984 = vmatpush1.bf16.msra.mxu0 0
        %1985 = vmatprep.subr.bf16.mxu0 0
        %1986 = vmatpush1.bf16.msra.mxu0 0
        %1987 = vmatprep.subr.bf16.mxu0 0
        %1988 = vmatpush1.bf16.msra.mxu0 0
        %1989 = vmatprep.subr.bf16.mxu0 0
        %1990 = vmatpush1.bf16.msra.mxu0 0
        %1991 = vmatprep.subr.bf16.mxu0 0
        %1992 = vmatpush1.bf16.msra.mxu0 %v1975
        %1993 = vmatprep.subr.bf16.mxu0 0
        %1994 = vmatpush2.bf16.msra.mxu0 0
        %1995 = vmatprep.subr.bf16.mxu0 0
        %1996 = vmatpush2.bf16.msra.mxu0 0
        %1997 = vmatprep.subr.bf16.mxu0 0
        %1998 = vmatpush2.bf16.msra.mxu0 0
        %1999 = vmatprep.subr.bf16.mxu0 0
        %2000 = vmatpush2.bf16.msra.mxu0 0
        %2001 = vmatprep.subr.bf16.mxu0 0
        %2002 = vmatpush2.bf16.msra.mxu0 0
        %2003 = vmatprep.subr.bf16.mxu0 0
        %2004 = vmatpush2.bf16.msra.mxu0 0
        %2005 = vmatprep.subr.bf16.mxu0 0
        %2006 = vmatpush2.bf16.msra.mxu0 0
        %2007 = vmatprep.subr.bf16.mxu0 0
        %2008 = vmatpush2.bf16.msra.mxu0 0
        %2009 = vmatprep.mubr.bf16.mxu0 0
        %2010 = vmatmul.mubr.bf16.gmra.mxu0 %v1972
        %v2011 = vpop.f32.mrf.mxu0
        %v2012 = vadd.f32 0.0, %v2011
        %v2013 = vpop.f32.mrf.mxu0
        %v2014 = vpop.f32.mrf.mxu0
        %v2015 = vpop.f32.mrf.mxu0
        %2016 = vdwg.mxu0
        %v2017 = vpack.c.bf16 %v2012, %v2012
        %s2018 = scalar_lea.vmem %s9, 12
        %v2019 = vld [vmem:[%s2018] sm:$0xf]
        %v2021 = vsel %vm1242, %v2017, 0
        %v2024 = vsel %vm1304, %v2019, 0
        %2026 = vmatprep.subr.bf16.mxu0 0
        %2027 = vmatpush1.bf16.msra.mxu0 0
        %2028 = vmatprep.subr.bf16.mxu0 0
        %2029 = vmatpush1.bf16.msra.mxu0 0
        %2030 = vmatprep.subr.bf16.mxu0 0
        %2031 = vmatpush1.bf16.msra.mxu0 0
        %2032 = vmatprep.subr.bf16.mxu0 0
        %2033 = vmatpush1.bf16.msra.mxu0 0
        %2034 = vmatprep.subr.bf16.mxu0 0
        %2035 = vmatpush1.bf16.msra.mxu0 0
        %2036 = vmatprep.subr.bf16.mxu0 0
        %2037 = vmatpush1.bf16.msra.mxu0 0
        %2038 = vmatprep.subr.bf16.mxu0 0
        %2039 = vmatpush1.bf16.msra.mxu0 0
        %2040 = vmatprep.subr.bf16.mxu0 0
        %2041 = vmatpush1.bf16.msra.mxu0 %v2024
        %2042 = vmatprep.subr.bf16.mxu0 0
        %2043 = vmatpush2.bf16.msra.mxu0 0
        %2044 = vmatprep.subr.bf16.mxu0 0
        %2045 = vmatpush2.bf16.msra.mxu0 0
        %2046 = vmatprep.subr.bf16.mxu0 0
        %2047 = vmatpush2.bf16.msra.mxu0 0
        %2048 = vmatprep.subr.bf16.mxu0 0
        %2049 = vmatpush2.bf16.msra.mxu0 0
        %2050 = vmatprep.subr.bf16.mxu0 0
        %2051 = vmatpush2.bf16.msra.mxu0 0
        %2052 = vmatprep.subr.bf16.mxu0 0
        %2053 = vmatpush2.bf16.msra.mxu0 0
        %2054 = vmatprep.subr.bf16.mxu0 0
        %2055 = vmatpush2.bf16.msra.mxu0 0
        %2056 = vmatprep.subr.bf16.mxu0 0
        %2057 = vmatpush2.bf16.msra.mxu0 0
        %2058 = vmatprep.mubr.bf16.mxu0 0
        %2059 = vmatmul.mubr.bf16.gmra.mxu0 %v2021
        %v2060 = vpop.f32.mrf.mxu0
        %v2061 = vadd.f32 0.0, %v2060
        %v2062 = vpop.f32.mrf.mxu0
        %v2063 = vpop.f32.mrf.mxu0
        %v2064 = vpop.f32.mrf.mxu0
        %2065 = vdwg.mxu0
        %v2066 = vadd.f32 %v1842, %v2061
        %v2067 = vld [vmem:[%s10] sm:$0x1]
        %v2069 = vlaneseq
        %v2070 = vshrl.u32 %v2069, 7
        %v2071 = vsub.s32 0, %v2070
        %v2072 = vrot.slane %v2067, %v2071
        %v2074 = vadd.f32 %v2066, %v2072
        %v2075 = vadd.f32 %v1140, %v2074
        %v2076 = vld [vmem:[%s11] sm:$0x1]
        %v2077 = vld [vmem:[%s12] sm:$0x1]
        %v2078 = vsel %vm1143, %v2075, 0.0
        %2079 = vadd.xlane.f32.xlu0 %v2078
        %v2080 = vpop.xlane.xlu0 %2079
        %v2081 = vmul.f32 %v2080, %v1147
        %v2082 = vsub.f32 %v2075, %v2081
        %v2083 = vmul.f32 %v2082, %v2082
        %v2084 = vsel %vm1143, %v2083, 0.0
        %2085 = vadd.xlane.f32.xlu0 %v2084
        %v2086 = vpop.xlane.xlu0 %2085
        %v2087 = vmul.f32 %v2086, %v1147
        %v2088 = vadd.f32 %v2087, 1e-05
        %v2089 = vrsqrt.pop %v2088
        %v2090 = vmul.f32 %v2082, %v2089
        %v2092 = vlaneseq
        %v2093 = vshrl.u32 %v2092, 7
        %v2094 = vsub.s32 0, %v2093
        %v2095 = vrot.slane %v2076, %v2094
        %v2097 = vmul.f32 %v2090, %v2095
        %v2099 = vlaneseq
        %v2100 = vshrl.u32 %v2099, 7
        %v2101 = vsub.s32 0, %v2100
        %v2102 = vrot.slane %v2077, %v2101
        %v2104 = vadd.f32 %v2097, %v2102
        %v2105 = vpack.c.bf16 %v2104, %v2104
        %v2106 = vld [vmem:[%s13] sm:$0xf]
        %v2107 = vld [vmem:[%s13 + $0x4] sm:$0xf]
        %v2108 = vld [vmem:[%s13 + $0x8] sm:$0xf]
        %v2109 = vld [vmem:[%s13 + $0xc] sm:$0xf]
        %v2110 = vld [vmem:[%s14] sm:$0x1]
        %v2112 = vlaneseq
        %v2113 = vshrl.u32 %v2112, 7
        %v2114 = vsub.s32 0, %v2113
        %v2115 = vrot.slane %v2110, %v2114
        %v2121 = vunpack.c.l.b16 %v2106
        %v2122 = vunpack.c.l.b16 %v2107
        %v2123 = vunpack.c.l.b16 %v2108
        %v2124 = vunpack.c.l.b16 %v2109
        %v2125 = vpack.c.b16 %v2122, %v2121
        %v2126 = vpack.c.b16 %v2124, %v2123
        %v2130 = vsel %vm1143, %v2105, 0
        %2132 = vmatprep.subr.bf16.mxu0 0
        %2133 = vmatpush1.bf16.msra.mxu0 0
        %2134 = vmatprep.subr.bf16.mxu0 0
        %2135 = vmatpush1.bf16.msra.mxu0 0
        %2136 = vmatprep.subr.bf16.mxu0 0
        %2137 = vmatpush1.bf16.msra.mxu0 0
        %2138 = vmatprep.subr.bf16.mxu0 0
        %2139 = vmatpush1.bf16.msra.mxu0 0
        %2140 = vmatprep.subr.bf16.mxu0 0
        %2141 = vmatpush1.bf16.msra.mxu0 0
        %2142 = vmatprep.subr.bf16.mxu0 0
        %2143 = vmatpush1.bf16.msra.mxu0 0
        %2144 = vmatprep.subr.bf16.mxu0 0
        %2145 = vmatpush1.bf16.msra.mxu0 %v2126
        %2146 = vmatprep.subr.bf16.mxu0 0
        %2147 = vmatpush1.bf16.msra.mxu0 %v2125
        %2148 = vmatprep.subr.bf16.mxu0 0
        %2149 = vmatpush2.bf16.msra.mxu0 0
        %2150 = vmatprep.subr.bf16.mxu0 0
        %2151 = vmatpush2.bf16.msra.mxu0 0
        %2152 = vmatprep.subr.bf16.mxu0 0
        %2153 = vmatpush2.bf16.msra.mxu0 0
        %2154 = vmatprep.subr.bf16.mxu0 0
        %2155 = vmatpush2.bf16.msra.mxu0 0
        %2156 = vmatprep.subr.bf16.mxu0 0
        %2157 = vmatpush2.bf16.msra.mxu0 0
        %2158 = vmatprep.subr.bf16.mxu0 0
        %2159 = vmatpush2.bf16.msra.mxu0 0
        %2160 = vmatprep.subr.bf16.mxu0 0
        %2161 = vmatpush2.bf16.msra.mxu0 0
        %2162 = vmatprep.subr.bf16.mxu0 0
        %2163 = vmatpush2.bf16.msra.mxu0 0
        %2164 = vmatprep.mubr.bf16.mxu0 0
        %2165 = vmatmul.mubr.bf16.gmra.mxu0 %v2130
        %v2166 = vpop.f32.mrf.mxu0
        %v2167 = vadd.f32 %v2115, %v2166
        %v2168 = vpop.f32.mrf.mxu0
        %v2169 = vpop.f32.mrf.mxu0
        %v2170 = vpop.f32.mrf.mxu0
        %2171 = vdwg.mxu0
        %v2172 = vmul.f32 %v2167, 0.5
        %v2173 = vmul.f32 %v2167, 0.044715
        %v2174 = vmul.f32 %v2173, %v2167
        %v2175 = vmul.f32 %v2174, %v2167
        %v2176 = vadd.f32 %v2167, %v2175
        %v2177 = vmul.f32 %v2176, 0.7978846
        %v2178 = vtanh.pop %v2177
        %v2179 = vadd.f32 %v2178, 1.0
        %v2180 = vmul.f32 %v2172, %v2179
        %v2181 = vpack.c.bf16 %v2180, %v2180
        %v2182 = vld [vmem:[%s15] sm:$0xf]
        %v2183 = vld [vmem:[%s15 + $0x4] sm:$0xf]
        %v2184 = vld [vmem:[%s15 + $0x8] sm:$0xf]
        %v2185 = vld [vmem:[%s15 + $0xc] sm:$0xf]
        %v2186 = vld [vmem:[%s15 + $0x10] sm:$0xf]
        %v2187 = vld [vmem:[%s15 + $0x14] sm:$0xf]
        %v2188 = vld [vmem:[%s15 + $0x18] sm:$0xf]
        %v2189 = vld [vmem:[%s15 + $0x1c] sm:$0xf]
        %v2190 = vld [vmem:[%s15 + $0x20] sm:$0xf]
        %v2191 = vld [vmem:[%s15 + $0x24] sm:$0xf]
        %v2192 = vld [vmem:[%s15 + $0x28] sm:$0xf]
        %v2193 = vld [vmem:[%s15 + $0x2c] sm:$0xf]
        %v2194 = vld [vmem:[%s15 + $0x30] sm:$0xf]
        %v2195 = vld [vmem:[%s15 + $0x34] sm:$0xf]
        %v2196 = vld [vmem:[%s15 + $0x38] sm:$0xf]
        %v2197 = vld [vmem:[%s15 + $0x3c] sm:$0xf]
        %v2198 = vld [vmem:[%s16] sm:$0x1]
        %v2200 = vlaneseq
        %v2201 = vshrl.u32 %v2200, 7
        %v2202 = vsub.s32 0, %v2201
        %v2203 = vrot.slane %v2198, %v2202
        %v2221 = vunpack.c.l.b16 %v2182
        %v2222 = vunpack.c.l.b16 %v2183
        %v2223 = vunpack.c.l.b16 %v2184
        %v2224 = vunpack.c.l.b16 %v2185
        %v2225 = vunpack.c.l.b16 %v2186
        %v2226 = vunpack.c.l.b16 %v2187
        %v2227 = vunpack.c.l.b16 %v2188
        %v2228 = vunpack.c.l.b16 %v2189
        %v2229 = vunpack.c.l.b16 %v2190
        %v2230 = vunpack.c.l.b16 %v2191
        %v2231 = vunpack.c.l.b16 %v2192
        %v2232 = vunpack.c.l.b16 %v2193
        %v2233 = vunpack.c.l.b16 %v2194
        %v2234 = vunpack.c.l.b16 %v2195
        %v2235 = vunpack.c.l.b16 %v2196
        %v2236 = vunpack.c.l.b16 %v2197
        %v2237 = vpack.c.b16 %v2222, %v2221
        %v2238 = vpack.c.b16 %v2224, %v2223
        %v2239 = vpack.c.b16 %v2226, %v2225
        %v2240 = vpack.c.b16 %v2228, %v2227
        %v2241 = vpack.c.b16 %v2230, %v2229
        %v2242 = vpack.c.b16 %v2232, %v2231
        %v2243 = vpack.c.b16 %v2234, %v2233
        %v2244 = vpack.c.b16 %v2236, %v2235
        %2253 = vmatprep.subr.bf16.mxu0 0
        %2254 = vmatpush1.bf16.msra.mxu0 %v2244
        %2255 = vmatprep.subr.bf16.mxu0 0
        %2256 = vmatpush1.bf16.msra.mxu0 %v2243
        %2257 = vmatprep.subr.bf16.mxu0 0
        %2258 = vmatpush1.bf16.msra.mxu0 %v2242
        %2259 = vmatprep.subr.bf16.mxu0 0
        %2260 = vmatpush1.bf16.msra.mxu0 %v2241
        %2261 = vmatprep.subr.bf16.mxu0 0
        %2262 = vmatpush1.bf16.msra.mxu0 %v2240
        %2263 = vmatprep.subr.bf16.mxu0 0
        %2264 = vmatpush1.bf16.msra.mxu0 %v2239
        %2265 = vmatprep.subr.bf16.mxu0 0
        %2266 = vmatpush1.bf16.msra.mxu0 %v2238
        %2267 = vmatprep.subr.bf16.mxu0 0
        %2268 = vmatpush1.bf16.msra.mxu0 %v2237
        %2269 = vmatprep.subr.bf16.mxu0 0
        %2270 = vmatpush2.bf16.msra.mxu0 0
        %2271 = vmatprep.subr.bf16.mxu0 0
        %2272 = vmatpush2.bf16.msra.mxu0 0
        %2273 = vmatprep.subr.bf16.mxu0 0
        %2274 = vmatpush2.bf16.msra.mxu0 0
        %2275 = vmatprep.subr.bf16.mxu0 0
        %2276 = vmatpush2.bf16.msra.mxu0 0
        %2277 = vmatprep.subr.bf16.mxu0 0
        %2278 = vmatpush2.bf16.msra.mxu0 0
        %2279 = vmatprep.subr.bf16.mxu0 0
        %2280 = vmatpush2.bf16.msra.mxu0 0
        %2281 = vmatprep.subr.bf16.mxu0 0
        %2282 = vmatpush2.bf16.msra.mxu0 0
        %2283 = vmatprep.subr.bf16.mxu0 0
        %2284 = vmatpush2.bf16.msra.mxu0 0
        %2285 = vmatprep.mubr.bf16.mxu0 0
        %2286 = vmatmul.mubr.bf16.gmra.mxu0 %v2181
        %v2287 = vpop.f32.mrf.mxu0
        %v2288 = vadd.f32 %v2203, %v2287
        %v2289 = vpop.f32.mrf.mxu0
        %v2290 = vpop.f32.mrf.mxu0
        %v2291 = vpop.f32.mrf.mxu0
        %2292 = vdwg.mxu0
        %v2293 = vadd.f32 %v2075, %v2288
        %2294 = vst.msk [vmem:[%s553] sm:$0xff] %vm1143, %v2293
        %s2295 = sand.u32 %s415, 1
        %s2296 = scalar_lea.sflag [#allocation5], %s2295
        %s2297 = sand.u32 %s415, 1
        %s2298 = smul.addr %s2297, 8
        %s2299 = scalar_lea.vmem [#allocation4], %s2298
        // Predicated region
        $region93: #{tpu_custom_call.1} parent=87 // pred_check
          %p2300 = pneg %p425
        $region94: #{tpu_custom_call.1} parent=87 // pred_check_branch
          %2302 = sbr.rel (%p2300) target = $region96
        $region95: #{tpu_custom_call.1} parent=87 // pred_region
          %s2304 = ssub.s32 128, 128
          %2305 = vsyncadd %s2296, %s2304
          %s2306 = sadd.s32 %s36, %s35
          %s2307 = smul.addr %s2306, 128
          %s2308 = scalar_lea.hbm %s17, %s2307
          %s2310 = sshll.u32 %s2299, 4
          %s2311 = int_to_ptr.vmem [resolvable:$true] %s2310
          %2313 = dma.vmem_to_hbm [thread:$0]  %s2311, 128, %s2308, %s2296
        $region96: #{tpu_custom_call.1} parent=87 // pred_fallthru
          _
      $region88: #{tpu_custom_call.1} parent=5 // pred_fallthru
        _
      %p2314 = scmp.le.s32.totalorder 2, %s26
      // Predicated region
      $region97: #{tpu_custom_call.1} parent=5 // pred_check
        %p2315 = pneg %p2314
      $region98: #{tpu_custom_call.1} parent=5 // pred_check_branch
        %2317 = sbr.rel (%p2315) target = $region100
      $region99: #{tpu_custom_call.1} parent=5 // pred_region
        %s2318 = ssub.s32 %s26, 2
        // Predicated region
        $region101: #{tpu_custom_call.1} parent=99 // pred_check
          %p2319 = pneg %p431
        $region102: #{tpu_custom_call.1} parent=99 // pred_check_branch
          %2321 = sbr.rel (%p2319) target = $region104
        $region103: #{tpu_custom_call.1} parent=99 // pred_region
          %s2322 = sand.u32 %s416, 1
          %s2323 = scalar_lea.sflag [#allocation5], %s2322
          %s2324 = sand.u32 %s416, 1
          %s2325 = smul.addr %s2324, 8
          %s2326 = scalar_lea.vmem [#allocation4], %s2325
          %2327 = dma.done %s2323, 128
        $region104: #{tpu_custom_call.1} parent=99 // pred_fallthru
          _
      $region100: #{tpu_custom_call.1} parent=5 // pred_fallthru
        _
    $region6: #{tpu_custom_call.1} parent=1 // loop_footer
      %s30 = sadd.s32 1, %s26
    $region7: #{tpu_custom_call.1} parent=1 // loop_footer_branch
      %25 = sbr.rel target = $region3
    $region8: #{tpu_custom_call.1} parent=1 // loop_exit
      _
    %2328 = vsyncpa [#allocation5], 1
    %s2329 = scalar_lea.sflag [#allocation5], 1
    %2330 = vsyncpa %s2329, 1

</llo_original>
